<compile_context>
chip_gen: v7x
topology: tpu7x:2x2x1
jax: 0.10.0
libtpu: 0.0.40
codegen_flags: <defaults>
</compile_context>

<pallas_src>
import math

import jax
import jax.numpy as jnp
from jax.experimental import pallas as pl
from jax.experimental.pallas import tpu as pltpu


def _round_up(x, m):
    return -(-x // m) * m


# ----------------------------------------------------------------------------
# Kernel
# ----------------------------------------------------------------------------
def _build_kernel(widths):
    """widths = (h1, r, h2, h3_padded, out_padded); static bias offsets baked in."""
    h1, r, h2, h3p, outp = widths
    o1 = 0
    o_r = o1 + h1
    o2 = o_r + r
    o3 = o2 + h2
    o4 = o3 + h3p

    def kernel(x_ref, w1_ref, wr_ref, w2_ref, w3_ref, w4_ref, b_ref, o_ref):
        # fc1 + relu
        x = x_ref[...].astype(jnp.bfloat16)
        h = jnp.dot(x, w1_ref[...], preferred_element_type=jnp.float32)
        h = jnp.maximum(h + b_ref[:, o1:o1 + h1], 0.0)

        # reservoir (fixed random weights) + tanh
        h = jnp.dot(h.astype(jnp.bfloat16), wr_ref[...],
                    preferred_element_type=jnp.float32)
        h = jnp.tanh(h + b_ref[:, o_r:o_r + r])

        # fc2 + relu
        h = jnp.dot(h.astype(jnp.bfloat16), w2_ref[...],
                    preferred_element_type=jnp.float32)
        h = jnp.maximum(h + b_ref[:, o2:o2 + h2], 0.0)

        # fc3 + relu (output zero-padded 84 -> 128 lanes; padding stays zero)
        h = jnp.dot(h.astype(jnp.bfloat16), w3_ref[...],
                    preferred_element_type=jnp.float32)
        h = jnp.maximum(h + b_ref[:, o3:o3 + h3p], 0.0)

        # fc4 (no activation; output zero-padded to 128 lanes)
        h = jnp.dot(h.astype(jnp.bfloat16), w4_ref[...],
                    preferred_element_type=jnp.float32)
        o_ref[...] = h + b_ref[:, o4:o4 + outp]

    return kernel


# ----------------------------------------------------------------------------
# Parameter preparation (bf16 cast, lane padding, bias concat)
# ----------------------------------------------------------------------------
def _prepare_kernel_params(params):
    (w1, b1, wr, br, w2, b2, w3, b3, w4, b4) = params
    h1 = w1.shape[1]
    r = wr.shape[1]
    h2 = w2.shape[1]
    h3 = w3.shape[1]          # 84
    out = w4.shape[1]         # e.g. 5
    h3p = _round_up(max(h3, 128), 128)
    outp = _round_up(max(out, 128), 128)

    w3p = jnp.zeros((w3.shape[0], h3p), jnp.float32).at[:, :h3].set(w3)
    b3p = jnp.zeros((1, h3p), jnp.float32).at[:, :h3].set(b3)
    w4p = jnp.zeros((h3p, outp), jnp.float32).at[:h3, :out].set(w4)
    b4p = jnp.zeros((1, outp), jnp.float32).at[:, :out].set(b4)

    weights_bf16 = tuple(
        w.astype(jnp.bfloat16) for w in (w1, wr, w2, w3p, w4p)
    )
    b_all = jnp.concatenate([b1, br, b2, b3p, b4p], axis=1).astype(jnp.float32)
    widths = (h1, r, h2, h3p, outp)
    return weights_bf16, b_all, widths, out


# ----------------------------------------------------------------------------
# Wrapper
# ----------------------------------------------------------------------------
def hybrid_fcn_reservoir(x_nchw, params):
    """Fused forward. x_nchw: [B, C, H, W] float32 -> [B, outsize] float32."""
    B = x_nchw.shape[0]
    x_flat = x_nchw.reshape(B, -1).astype(jnp.float32)   # x.view(x.size(0), -1)
    f_in = x_flat.shape[1]

    (w1, wr, w2, w3p, w4p), b_all, widths, outsize = _prepare_kernel_params(params)
    h1, r, h2, h3p, outp = widths

    # Batch tile: MXU-aligned for large batches, sublane-aligned minimum otherwise.
    if B >= 512:
        tile_b = 256
    elif B >= 128:
        tile_b = 128
    else:
        tile_b = _round_up(B, 8)
    b_pad = _round_up(B, tile_b)
    if b_pad != B:
        x_flat = jnp.zeros((b_pad, f_in), jnp.float32).at[:B].set(x_flat)

    n_weight_elems = w1.size + wr.size + w2.size + w3p.size + w4p.size
    cost = pl.CostEstimate(
        flops=2 * b_pad * (f_in * h1 + h1 * r + r * h2 + h2 * h3p + h3p * outp),
        transcendentals=b_pad * r,
        bytes_accessed=(x_flat.size * 4 + b_pad * outp * 4
                        + n_weight_elems * 2 + b_all.size * 4),
    )

    kernel = _build_kernel(widths)
    out = pl.pallas_call(
        kernel,
        out_shape=jax.ShapeDtypeStruct((b_pad, outp), jnp.float32),
        grid_spec=pltpu.PrefetchScalarGridSpec(
            num_scalar_prefetch=0,
            grid=(b_pad // tile_b,),
            in_specs=[
                # batch-tiled activations
                pl.BlockSpec((tile_b, f_in), lambda i: (i, 0)),
                # weights: whole-array blocks, constant index map -> DMA'd once,
                # held resident in VMEM across all batch tiles
                pl.BlockSpec(w1.shape, lambda i: (0, 0)),
                pl.BlockSpec(wr.shape, lambda i: (0, 0)),
                pl.BlockSpec(w2.shape, lambda i: (0, 0)),
                pl.BlockSpec(w3p.shape, lambda i: (0, 0)),
                pl.BlockSpec(w4p.shape, lambda i: (0, 0)),
                # all biases fused into one row
                pl.BlockSpec(b_all.shape, lambda i: (0, 0)),
            ],
            out_specs=pl.BlockSpec((tile_b, outp), lambda i: (i, 0)),
        ),
        compiler_params=pltpu.CompilerParams(
            dimension_semantics=("parallel",),
        ),
        cost_estimate=cost,
    )(x_flat, w1, wr, w2, w3p, w4p, b_all)

    return out[:B, :outsize]


# ----------------------------------------------------------------------------
# Synthetic parameter init (mimics nn.Linear / xavier init, fp32 "master" copy)
# ----------------------------------------------------------------------------
def _linear_params(key, fan_in, fan_out, xavier=False, zero_bias=False):
    kw, kb = jax.random.split(key)
    if xavier:
        bound = math.sqrt(6.0 / (fan_in + fan_out))
    else:
        bound = 1.0 / math.sqrt(fan_in)
    w = jax.random.uniform(kw, (fan_in, fan_out), jnp.float32, -bound, bound)
    if zero_bias:
        b = jnp.zeros((1, fan_out), jnp.float32)
    else:
        b_bound = 1.0 / math.sqrt(fan_in)
        b = jax.random.uniform(kb, (1, fan_out), jnp.float32, -b_bound, b_bound)
    return w, b


def make_params(insize, outsize, reservoir_size, key):
    k1, kr, k2, k3, k4 = jax.random.split(key, 5)
    w1, b1 = _linear_params(k1, insize, 512)
    # reservoir: xavier_uniform weights, zero bias, frozen (forward-only here)
    wr, br = _linear_params(kr, 512, reservoir_size, xavier=True, zero_bias=True)
    w2, b2 = _linear_params(k2, reservoir_size, 256)
    w3, b3 = _linear_params(k3, 256, 84)
    w4, b4 = _linear_params(k4, 84, outsize)
    return (w1, b1, wr, br, w2, b2, w3, b3, w4, b4)


def reference_forward(x_nchw, params):
    """Pure-JAX fp32 reference of the PyTorch forward."""
    (w1, b1, wr, br, w2, b2, w3, b3, w4, b4) = params
    x = x_nchw.reshape(x_nchw.shape[0], -1)
    x = jnp.maximum(x @ w1 + b1, 0.0)
    x = jnp.tanh(x @ wr + br)
    x = jnp.maximum(x @ w2 + b2, 0.0)
    x = jnp.maximum(x @ w3 + b3, 0.0)
    x = x @ w4 + b4
    return x


if __name__ == "__main__":
    # obs x: [B=2, C=4, H=16, W=16] -> insize = 4*16*16 = 1024
    # outsize = 5 (sample_action picks from 5 actions), reservoir_size = 512
    B, C, H, W = 2, 4, 16, 16
    insize = C * H * W
    outsize = 5
    reservoir_size = 512

    key = jax.random.PRNGKey(0)
    kx, kp = jax.random.split(key)
    x = jax.random.normal(kx, (B, C, H, W), jnp.float32)
    params = make_params(insize, outsize, reservoir_size, kp)

    out = hybrid_fcn_reservoir(x, params)
    out = jax.block_until_ready(out)

    ref = reference_forward(x, params)
    assert out.shape == (B, outsize)
    # Kernel uses bf16 weights/pre-dot activations with f32 accumulation, so
    # compare against the fp32 reference with a bf16-appropriate tolerance.
    assert jnp.allclose(out, ref, atol=5e-2, rtol=5e-2), "mismatch vs reference"

    # TODO(synk): sample_action's host-side epsilon-greedy (random.random / argmax)
    # is control flow outside the forward pass and is not part of the kernel.

    print("KERNEL_OK")
</pallas_src>

<mosaic_0001>
module attributes {stable_mosaic.version = 11 : i64} {
  func.func @kernel(%arg0: i32, %arg1: memref<8x1024xf32, #tpu.memory_space<vmem>>, %arg2: memref<1024x512xbf16, #tpu.memory_space<vmem>>, %arg3: memref<512x512xbf16, #tpu.memory_space<vmem>>, %arg4: memref<512x256xbf16, #tpu.memory_space<vmem>>, %arg5: memref<256x128xbf16, #tpu.memory_space<vmem>>, %arg6: memref<128x128xbf16, #tpu.memory_space<vmem>>, %arg7: memref<1x1536xf32, #tpu.memory_space<vmem>>, %arg8: memref<8x128xf32, #tpu.memory_space<vmem>>) attributes {dimension_semantics = [#tpu.dimension_semantics<parallel>], iteration_bounds = array<i64: 1>, scalar_prefetch = 0 : i64, scratch_operands = 0 : i64, tpu.core_type = #tpu.core_type<tc>, window_params = [{transform_indices = @transform_0, window_bounds = array<i64: 8, 1024>}, {pipeline_mode = #tpu.pipeline_mode<synchronous>, transform_indices = @transform_1, window_bounds = array<i64: 1024, 512>}, {pipeline_mode = #tpu.pipeline_mode<synchronous>, transform_indices = @transform_2, window_bounds = array<i64: 512, 512>}, {pipeline_mode = #tpu.pipeline_mode<synchronous>, transform_indices = @transform_3, window_bounds = array<i64: 512, 256>}, {pipeline_mode = #tpu.pipeline_mode<synchronous>, transform_indices = @transform_4, window_bounds = array<i64: 256, 128>}, {pipeline_mode = #tpu.pipeline_mode<synchronous>, transform_indices = @transform_5, window_bounds = array<i64: 128, 128>}, {pipeline_mode = #tpu.pipeline_mode<synchronous>, transform_indices = @transform_6, window_bounds = array<i64: 1, 1536>}, {transform_indices = @transform_7, window_bounds = array<i64: 8, 128>}]} {
    %c0 = arith.constant 0 : index
    %c0_0 = arith.constant 0 : index
    %0 = vector.load %arg1[%c0, %c0_0] : memref<8x1024xf32, #tpu.memory_space<vmem>>, vector<8x1024xf32>
    %1 = arith.truncf %0 : vector<8x1024xf32> to vector<8x1024xbf16>
    %c0_1 = arith.constant 0 : index
    %c0_2 = arith.constant 0 : index
    %2 = vector.load %arg2[%c0_1, %c0_2] : memref<1024x512xbf16, #tpu.memory_space<vmem>>, vector<1024x512xbf16>
    %cst = arith.constant dense<0.000000e+00> : vector<8x512xf32>
    %3 = tpu.matmul %1, %2, %cst {dimension_numbers = #tpu.dot_dimension_numbers<[1], [0], [0], [1], [0, 0, 1, 1], [], []>} : vector<8x1024xbf16>, vector<1024x512xbf16>, vector<8x512xf32> -> vector<8x512xf32>
    %c0_3 = arith.constant 0 : index
    %c0_4 = arith.constant 0 : index
    %4 = vector.load %arg7[%c0_3, %c0_4] : memref<1x1536xf32, #tpu.memory_space<vmem>>, vector<1x512xf32>
    %5 = vector.broadcast %4 : vector<1x512xf32> to vector<8x512xf32>
    %6 = arith.addf %3, %5 : vector<8x512xf32>
    %cst_5 = arith.constant 0.000000e+00 : f32
    %7 = vector.broadcast %cst_5 : f32 to vector<8x512xf32>
    %8 = arith.maximumf %6, %7 : vector<8x512xf32>
    %9 = arith.truncf %8 : vector<8x512xf32> to vector<8x512xbf16>
    %c0_6 = arith.constant 0 : index
    %c0_7 = arith.constant 0 : index
    %10 = vector.load %arg3[%c0_6, %c0_7] : memref<512x512xbf16, #tpu.memory_space<vmem>>, vector<512x512xbf16>
    %cst_8 = arith.constant dense<0.000000e+00> : vector<8x512xf32>
    %11 = tpu.matmul %9, %10, %cst_8 {dimension_numbers = #tpu.dot_dimension_numbers<[1], [0], [0], [1], [0, 0, 1, 1], [], []>} : vector<8x512xbf16>, vector<512x512xbf16>, vector<8x512xf32> -> vector<8x512xf32>
    %c0_9 = arith.constant 0 : index
    %c512 = arith.constant 512 : index
    %12 = vector.load %arg7[%c0_9, %c512] : memref<1x1536xf32, #tpu.memory_space<vmem>>, vector<1x512xf32>
    %13 = vector.broadcast %12 : vector<1x512xf32> to vector<8x512xf32>
    %14 = arith.addf %11, %13 : vector<8x512xf32>
    %15 = math.tanh %14 : vector<8x512xf32>
    %16 = arith.truncf %15 : vector<8x512xf32> to vector<8x512xbf16>
    %c0_10 = arith.constant 0 : index
    %c0_11 = arith.constant 0 : index
    %17 = vector.load %arg4[%c0_10, %c0_11] : memref<512x256xbf16, #tpu.memory_space<vmem>>, vector<512x256xbf16>
    %cst_12 = arith.constant dense<0.000000e+00> : vector<8x256xf32>
    %18 = tpu.matmul %16, %17, %cst_12 {dimension_numbers = #tpu.dot_dimension_numbers<[1], [0], [0], [1], [0, 0, 1, 1], [], []>} : vector<8x512xbf16>, vector<512x256xbf16>, vector<8x256xf32> -> vector<8x256xf32>
    %c0_13 = arith.constant 0 : index
    %c1024 = arith.constant 1024 : index
    %19 = vector.load %arg7[%c0_13, %c1024] : memref<1x1536xf32, #tpu.memory_space<vmem>>, vector<1x256xf32>
    %20 = vector.broadcast %19 : vector<1x256xf32> to vector<8x256xf32>
    %21 = arith.addf %18, %20 : vector<8x256xf32>
    %cst_14 = arith.constant 0.000000e+00 : f32
    %22 = vector.broadcast %cst_14 : f32 to vector<8x256xf32>
    %23 = arith.maximumf %21, %22 : vector<8x256xf32>
    %24 = arith.truncf %23 : vector<8x256xf32> to vector<8x256xbf16>
    %c0_15 = arith.constant 0 : index
    %c0_16 = arith.constant 0 : index
    %25 = vector.load %arg5[%c0_15, %c0_16] : memref<256x128xbf16, #tpu.memory_space<vmem>>, vector<256x128xbf16>
    %cst_17 = arith.constant dense<0.000000e+00> : vector<8x128xf32>
    %26 = tpu.matmul %24, %25, %cst_17 {dimension_numbers = #tpu.dot_dimension_numbers<[1], [0], [0], [1], [0, 0, 1, 1], [], []>} : vector<8x256xbf16>, vector<256x128xbf16>, vector<8x128xf32> -> vector<8x128xf32>
    %c0_18 = arith.constant 0 : index
    %c1280 = arith.constant 1280 : index
    %27 = vector.load %arg7[%c0_18, %c1280] : memref<1x1536xf32, #tpu.memory_space<vmem>>, vector<1x128xf32>
    %28 = vector.broadcast %27 : vector<1x128xf32> to vector<8x128xf32>
    %29 = arith.addf %26, %28 : vector<8x128xf32>
    %cst_19 = arith.constant 0.000000e+00 : f32
    %30 = vector.broadcast %cst_19 : f32 to vector<8x128xf32>
    %31 = arith.maximumf %29, %30 : vector<8x128xf32>
    %32 = arith.truncf %31 : vector<8x128xf32> to vector<8x128xbf16>
    %c0_20 = arith.constant 0 : index
    %c0_21 = arith.constant 0 : index
    %33 = vector.load %arg6[%c0_20, %c0_21] : memref<128x128xbf16, #tpu.memory_space<vmem>>, vector<128x128xbf16>
    %cst_22 = arith.constant dense<0.000000e+00> : vector<8x128xf32>
    %34 = tpu.matmul %32, %33, %cst_22 {dimension_numbers = #tpu.dot_dimension_numbers<[1], [0], [0], [1], [0, 0, 1, 1], [], []>} : vector<8x128xbf16>, vector<128x128xbf16>, vector<8x128xf32> -> vector<8x128xf32>
    %c0_23 = arith.constant 0 : index
    %c1408 = arith.constant 1408 : index
    %35 = vector.load %arg7[%c0_23, %c1408] : memref<1x1536xf32, #tpu.memory_space<vmem>>, vector<1x128xf32>
    %36 = vector.broadcast %35 : vector<1x128xf32> to vector<8x128xf32>
    %37 = arith.addf %34, %36 : vector<8x128xf32>
    %c0_24 = arith.constant 0 : index
    %c0_25 = arith.constant 0 : index
    %38 = vector.load %arg8[%c0_24, %c0_25] : memref<8x128xf32, #tpu.memory_space<vmem>>, vector<8x128xf32>
    tpu.vector_store %arg8[%c0_24, %c0_25], %37 {strides = array<i32>} : memref<8x128xf32, #tpu.memory_space<vmem>>, vector<8x128xf32>,
    return
  }
  func.func @transform_0(%arg0: i32) -> (i32, i32) {
    %c0_i32 = arith.constant 0 : i32
    %c0_i32_0 = arith.constant 0 : i32
    return %arg0, %c0_i32 : i32, i32
  }
  func.func @transform_1(%arg0: i32) -> (i32, i32) {
    %c0_i32 = arith.constant 0 : i32
    %c0_i32_0 = arith.constant 0 : i32
    %c0_i32_1 = arith.constant 0 : i32
    return %c0_i32, %c0_i32_0 : i32, i32
  }
  func.func @transform_2(%arg0: i32) -> (i32, i32) {
    %c0_i32 = arith.constant 0 : i32
    %c0_i32_0 = arith.constant 0 : i32
    %c0_i32_1 = arith.constant 0 : i32
    return %c0_i32, %c0_i32_0 : i32, i32
  }
  func.func @transform_3(%arg0: i32) -> (i32, i32) {
    %c0_i32 = arith.constant 0 : i32
    %c0_i32_0 = arith.constant 0 : i32
    %c0_i32_1 = arith.constant 0 : i32
    return %c0_i32, %c0_i32_0 : i32, i32
  }
  func.func @transform_4(%arg0: i32) -> (i32, i32) {
    %c0_i32 = arith.constant 0 : i32
    %c0_i32_0 = arith.constant 0 : i32
    %c0_i32_1 = arith.constant 0 : i32
    return %c0_i32, %c0_i32_0 : i32, i32
  }
  func.func @transform_5(%arg0: i32) -> (i32, i32) {
    %c0_i32 = arith.constant 0 : i32
    %c0_i32_0 = arith.constant 0 : i32
    %c0_i32_1 = arith.constant 0 : i32
    return %c0_i32, %c0_i32_0 : i32, i32
  }
  func.func @transform_6(%arg0: i32) -> (i32, i32) {
    %c0_i32 = arith.constant 0 : i32
    %c0_i32_0 = arith.constant 0 : i32
    %c0_i32_1 = arith.constant 0 : i32
    return %c0_i32, %c0_i32_0 : i32, i32
  }
  func.func @transform_7(%arg0: i32) -> (i32, i32) {
    %c0_i32 = arith.constant 0 : i32
    %c0_i32_0 = arith.constant 0 : i32
    return %arg0, %c0_i32 : i32, i32
  }
}

</mosaic_0001>

<llo_original>
// kernel: tpu_custom_call.1
$region0: #{tpu_custom_call.1}
  #allocation0 [shape = 'u32[]', space=smem, size = 0x4, offset = 0x4, fixed_abs, tag = 'smem constant byte address 0x4 - core index']
  #allocation1 [shape = 'u32[144,128]{1,0:T(1,128)}', space=vmem, size = 0x12000, scoped, tag = 'internal scratch']
  %s0 = inlined_call_operand.hbm [shape: f32[8,1024], index: 0, kind: input, shape index: {}]
  %s1 = inlined_call_operand.hbm [shape: bf16[1024,512], index: 1, kind: input, shape index: {}]
  %s2 = inlined_call_operand.hbm [shape: bf16[512,512], index: 2, kind: input, shape index: {}]
  %s3 = inlined_call_operand.hbm [shape: bf16[512,256], index: 3, kind: input, shape index: {}]
  %s4 = inlined_call_operand.hbm [shape: bf16[256,128], index: 4, kind: input, shape index: {}]
  %s5 = inlined_call_operand.hbm [shape: bf16[128,128], index: 5, kind: input, shape index: {}]
  %s6 = inlined_call_operand.vmem [shape: f32[1,1536], index: 6, kind: input, shape index: {}]
  %s7 = inlined_call_operand.hbm [shape: f32[8,128], index: 7, kind: output, shape index: {}]
  %s8 = sld [smem:[#allocation0]]
  $region62: #{tpu_custom_call.1} parent=0
    _
  %s10 = ssub.s32 1, %s8
  %s11 = scalar_select 0, %s10, %s8
  $region1: #{tpu_custom_call.1} parent=0
    #allocation2 [shape = 'u8[32768]{0}', space=vmem, size = 0x8000, scoped, tag = 'input window, operand 0, single buffered']
    #allocation3 [shape = 's32[1]{0}', space=sflag, size = 0x4, scoped, tag = 'scoped memory for tpu_custom_call.1']
    #allocation4 [shape = 's32[1]{0}', space=sflag, size = 0x4, scoped, tag = 'scoped memory for tpu_custom_call.1']
    #allocation5 [shape = 'u8[1048576]{0}', space=vmem, size = 0x100000, scoped, tag = 'input window, operand 1, single buffered']
    #allocation6 [shape = 's32[1]{0}', space=sflag, size = 0x4, scoped, tag = 'scoped memory for tpu_custom_call.1']
    #allocation7 [shape = 'u8[524288]{0}', space=vmem, size = 0x80000, scoped, tag = 'input window, operand 2, single buffered']
    #allocation8 [shape = 'u8[262144]{0}', space=vmem, size = 0x40000, scoped, tag = 'input window, operand 3, single buffered']
    #allocation9 [shape = 's32[1]{0}', space=sflag, size = 0x4, scoped, tag = 'scoped memory for tpu_custom_call.1']
    #allocation10 [shape = 'u8[65536]{0}', space=vmem, size = 0x10000, scoped, tag = 'input window, operand 4, single buffered']
    #allocation11 [shape = 'u8[32768]{0}', space=vmem, size = 0x8000, scoped, tag = 'input window, operand 5, single buffered']
    #allocation12 [shape = 's32[1]{0}', space=sflag, size = 0x4, scoped, tag = 'scoped memory for tpu_custom_call.1']
    #allocation13 [shape = 'u8[4096]{0}', space=vmem, size = 0x1000, scoped, tag = 'output window, operand 0, single buffered']
    %12 = vsyncpa [#allocation3], 0
    %13 = vsyncpa [#allocation6], 0
    %14 = vsyncpa [#allocation9], 0
    %15 = vsyncpa [#allocation12], 0
    %16 = vsyncpa [#allocation4], 0
    // Predicated region
    $region2: #{tpu_custom_call.1} parent=1 // pred_check
      _
    $region3: #{tpu_custom_call.1} parent=1 // pred_check_branch
      %18 = sbr.rel (0) target = $region5
    $region4: #{tpu_custom_call.1} parent=1 // pred_region
      %s20 = ssub.s32 1024, 1024
      %21 = vsyncadd [#allocation3], %s20
      %s23 = sshll.u32 [#allocation2], 4
      %s24 = int_to_ptr.vmem [resolvable:$true] %s23
      %26 = dma.hbm_to_vmem [thread:$0]  %s0, 1024, %s24, [#allocation3]
    $region5: #{tpu_custom_call.1} parent=1 // pred_fallthru
      _
    // Predicated region
    $region6: #{tpu_custom_call.1} parent=1 // pred_check
      _
    $region7: #{tpu_custom_call.1} parent=1 // pred_check_branch
      %28 = sbr.rel (0) target = $region9
    $region8: #{tpu_custom_call.1} parent=1 // pred_region
      %s30 = ssub.s32 32768, 32768
      %31 = vsyncadd [#allocation6], %s30
      %s32 = sshll.u32 [#allocation5], 4
      %s33 = int_to_ptr.vmem [resolvable:$true] %s32
      %38 = dma.hbm_to_vmem [thread:$0]  %s1, 32768, %s33, [#allocation6], 256, 256, 16
    $region9: #{tpu_custom_call.1} parent=1 // pred_fallthru
      _
    // Predicated region
    $region10: #{tpu_custom_call.1} parent=1 // pred_check
      _
    $region11: #{tpu_custom_call.1} parent=1 // pred_check_branch
      %40 = sbr.rel (0) target = $region13
    $region12: #{tpu_custom_call.1} parent=1 // pred_region
      %s42 = ssub.s32 16384, 16384
      %43 = vsyncadd [#allocation6], %s42
      %s44 = sshll.u32 [#allocation7], 4
      %s45 = int_to_ptr.vmem [resolvable:$true] %s44
      %50 = dma.hbm_to_vmem [thread:$0]  %s2, 16384, %s45, [#allocation6], 256, 256, 16
    $region13: #{tpu_custom_call.1} parent=1 // pred_fallthru
      _
    // Predicated region
    $region14: #{tpu_custom_call.1} parent=1 // pred_check
      _
    $region15: #{tpu_custom_call.1} parent=1 // pred_check_branch
      %52 = sbr.rel (0) target = $region17
    $region16: #{tpu_custom_call.1} parent=1 // pred_region
      %s54 = ssub.s32 8192, 8192
      %55 = vsyncadd [#allocation9], %s54
      %s56 = sshll.u32 [#allocation8], 4
      %s57 = int_to_ptr.vmem [resolvable:$true] %s56
      %62 = dma.hbm_to_vmem [thread:$0]  %s3, 8192, %s57, [#allocation9], 128, 128, 8
    $region17: #{tpu_custom_call.1} parent=1 // pred_fallthru
      _
    // Predicated region
    $region18: #{tpu_custom_call.1} parent=1 // pred_check
      _
    $region19: #{tpu_custom_call.1} parent=1 // pred_check_branch
      %64 = sbr.rel (0) target = $region21
    $region20: #{tpu_custom_call.1} parent=1 // pred_region
      %s66 = ssub.s32 2048, 2048
      %67 = vsyncadd [#allocation9], %s66
      %s68 = sshll.u32 [#allocation10], 4
      %s69 = int_to_ptr.vmem [resolvable:$true] %s68
      %74 = dma.hbm_to_vmem [thread:$0]  %s4, 2048, %s69, [#allocation9], 64, 64, 4
    $region21: #{tpu_custom_call.1} parent=1 // pred_fallthru
      _
    // Predicated region
    $region22: #{tpu_custom_call.1} parent=1 // pred_check
      _
    $region23: #{tpu_custom_call.1} parent=1 // pred_check_branch
      %76 = sbr.rel (0) target = $region25
    $region24: #{tpu_custom_call.1} parent=1 // pred_region
      %s78 = ssub.s32 1024, 1024
      %79 = vsyncadd [#allocation12], %s78
      %s80 = sshll.u32 [#allocation11], 4
      %s81 = int_to_ptr.vmem [resolvable:$true] %s80
      %86 = dma.hbm_to_vmem [thread:$0]  %s5, 1024, %s81, [#allocation12], 64, 64, 4
    $region25: #{tpu_custom_call.1} parent=1 // pred_fallthru
      _
    // Predicated region
    $region26: #{tpu_custom_call.1} parent=1 // pred_check
      _
    $region27: #{tpu_custom_call.1} parent=1 // pred_check_branch
      %88 = sbr.rel (0) target = $region29
    $region28: #{tpu_custom_call.1} parent=1 // pred_region
      _
    $region29: #{tpu_custom_call.1} parent=1 // pred_fallthru
      _
    // Predicated region
    $region30: #{tpu_custom_call.1} parent=1 // pred_check
      _
    $region31: #{tpu_custom_call.1} parent=1 // pred_check_branch
      %90 = sbr.rel (0) target = $region33
    $region32: #{tpu_custom_call.1} parent=1 // pred_region
      %91 = dma.done [#allocation3], 1024
    $region33: #{tpu_custom_call.1} parent=1 // pred_fallthru
      _
    // Predicated region
    $region34: #{tpu_custom_call.1} parent=1 // pred_check
      _
    $region35: #{tpu_custom_call.1} parent=1 // pred_check_branch
      %93 = sbr.rel (0) target = $region37
    $region36: #{tpu_custom_call.1} parent=1 // pred_region
      %94 = dma.done [#allocation6], 32768
    $region37: #{tpu_custom_call.1} parent=1 // pred_fallthru
      _
    // Predicated region
    $region38: #{tpu_custom_call.1} parent=1 // pred_check
      _
    $region39: #{tpu_custom_call.1} parent=1 // pred_check_branch
      %96 = sbr.rel (0) target = $region41
    $region40: #{tpu_custom_call.1} parent=1 // pred_region
      %97 = dma.done [#allocation6], 16384
    $region41: #{tpu_custom_call.1} parent=1 // pred_fallthru
      _
    // Predicated region
    $region42: #{tpu_custom_call.1} parent=1 // pred_check
      _
    $region43: #{tpu_custom_call.1} parent=1 // pred_check_branch
      %99 = sbr.rel (0) target = $region45
    $region44: #{tpu_custom_call.1} parent=1 // pred_region
      %100 = dma.done [#allocation9], 8192
    $region45: #{tpu_custom_call.1} parent=1 // pred_fallthru
      _
    // Predicated region
    $region46: #{tpu_custom_call.1} parent=1 // pred_check
      _
    $region47: #{tpu_custom_call.1} parent=1 // pred_check_branch
      %102 = sbr.rel (0) target = $region49
    $region48: #{tpu_custom_call.1} parent=1 // pred_region
      %103 = dma.done [#allocation9], 2048
    $region49: #{tpu_custom_call.1} parent=1 // pred_fallthru
      _
    // Predicated region
    $region50: #{tpu_custom_call.1} parent=1 // pred_check
      _
    $region51: #{tpu_custom_call.1} parent=1 // pred_check_branch
      %105 = sbr.rel (0) target = $region53
    $region52: #{tpu_custom_call.1} parent=1 // pred_region
      %106 = dma.done [#allocation12], 1024
    $region53: #{tpu_custom_call.1} parent=1 // pred_fallthru
      _
    %v108 = vld [vmem:[#allocation2] sm:$0xff]
    %v109 = vld [vmem:[#allocation2 + $0x8] sm:$0xff]
    %v110 = vld [vmem:[#allocation2 + $0x10] sm:$0xff]
    %v111 = vld [vmem:[#allocation2 + $0x18] sm:$0xff]
    %v112 = vld [vmem:[#allocation2 + $0x20] sm:$0xff]
    %v113 = vld [vmem:[#allocation2 + $0x28] sm:$0xff]
    %v114 = vld [vmem:[#allocation2 + $0x30] sm:$0xff]
    %v115 = vld [vmem:[#allocation2 + $0x38] sm:$0xff]
    %v116 = vpack.c.bf16 %v108, %v108
    %v117 = vpack.c.bf16 %v109, %v109
    %v118 = vpack.c.bf16 %v110, %v110
    %v119 = vpack.c.bf16 %v111, %v111
    %v120 = vpack.c.bf16 %v112, %v112
    %v121 = vpack.c.bf16 %v113, %v113
    %v122 = vpack.c.bf16 %v114, %v114
    %v123 = vpack.c.bf16 %v115, %v115
    %v124 = vld [vmem:[#allocation5] sm:$0xff]
    %v125 = vld [vmem:[#allocation5 + $0x8] sm:$0xff]
    %v126 = vld [vmem:[#allocation5 + $0x10] sm:$0xff]
    %v127 = vld [vmem:[#allocation5 + $0x18] sm:$0xff]
    %v128 = vld [vmem:[#allocation5 + $0x20] sm:$0xff]
    %v129 = vld [vmem:[#allocation5 + $0x28] sm:$0xff]
    %v130 = vld [vmem:[#allocation5 + $0x30] sm:$0xff]
    %v131 = vld [vmem:[#allocation5 + $0x38] sm:$0xff]
    %v132 = vld [vmem:[#allocation5 + $0x40] sm:$0xff]
    %v133 = vld [vmem:[#allocation5 + $0x48] sm:$0xff]
    %v134 = vld [vmem:[#allocation5 + $0x50] sm:$0xff]
    %v135 = vld [vmem:[#allocation5 + $0x58] sm:$0xff]
    %v136 = vld [vmem:[#allocation5 + $0x60] sm:$0xff]
    %v137 = vld [vmem:[#allocation5 + $0x68] sm:$0xff]
    %v138 = vld [vmem:[#allocation5 + $0x70] sm:$0xff]
    %v139 = vld [vmem:[#allocation5 + $0x78] sm:$0xff]
    %v140 = vld [vmem:[#allocation5 + $0x80] sm:$0xff]
    %v141 = vld [vmem:[#allocation5 + $0x88] sm:$0xff]
    %v142 = vld [vmem:[#allocation5 + $0x90] sm:$0xff]
    %v143 = vld [vmem:[#allocation5 + $0x98] sm:$0xff]
    %v144 = vld [vmem:[#allocation5 + $0xa0] sm:$0xff]
    %v145 = vld [vmem:[#allocation5 + $0xa8] sm:$0xff]
    %v146 = vld [vmem:[#allocation5 + $0xb0] sm:$0xff]
    %v147 = vld [vmem:[#allocation5 + $0xb8] sm:$0xff]
    %v148 = vld [vmem:[#allocation5 + $0xc0] sm:$0xff]
    %v149 = vld [vmem:[#allocation5 + $0xc8] sm:$0xff]
    %v150 = vld [vmem:[#allocation5 + $0xd0] sm:$0xff]
    %v151 = vld [vmem:[#allocation5 + $0xd8] sm:$0xff]
    %v152 = vld [vmem:[#allocation5 + $0xe0] sm:$0xff]
    %v153 = vld [vmem:[#allocation5 + $0xe8] sm:$0xff]
    %v154 = vld [vmem:[#allocation5 + $0xf0] sm:$0xff]
    %v155 = vld [vmem:[#allocation5 + $0xf8] sm:$0xff]
    %v156 = vld [vmem:[#allocation5 + $0x100] sm:$0xff]
    %v157 = vld [vmem:[#allocation5 + $0x108] sm:$0xff]
    %v158 = vld [vmem:[#allocation5 + $0x110] sm:$0xff]
    %v159 = vld [vmem:[#allocation5 + $0x118] sm:$0xff]
    %v160 = vld [vmem:[#allocation5 + $0x120] sm:$0xff]
    %v161 = vld [vmem:[#allocation5 + $0x128] sm:$0xff]
    %v162 = vld [vmem:[#allocation5 + $0x130] sm:$0xff]
    %v163 = vld [vmem:[#allocation5 + $0x138] sm:$0xff]
    %v164 = vld [vmem:[#allocation5 + $0x140] sm:$0xff]
    %v165 = vld [vmem:[#allocation5 + $0x148] sm:$0xff]
    %v166 = vld [vmem:[#allocation5 + $0x150] sm:$0xff]
    %v167 = vld [vmem:[#allocation5 + $0x158] sm:$0xff]
    %v168 = vld [vmem:[#allocation5 + $0x160] sm:$0xff]
    %v169 = vld [vmem:[#allocation5 + $0x168] sm:$0xff]
    %v170 = vld [vmem:[#allocation5 + $0x170] sm:$0xff]
    %v171 = vld [vmem:[#allocation5 + $0x178] sm:$0xff]
    %v172 = vld [vmem:[#allocation5 + $0x180] sm:$0xff]
    %v173 = vld [vmem:[#allocation5 + $0x188] sm:$0xff]
    %v174 = vld [vmem:[#allocation5 + $0x190] sm:$0xff]
    %v175 = vld [vmem:[#allocation5 + $0x198] sm:$0xff]
    %v176 = vld [vmem:[#allocation5 + $0x1a0] sm:$0xff]
    %v177 = vld [vmem:[#allocation5 + $0x1a8] sm:$0xff]
    %v178 = vld [vmem:[#allocation5 + $0x1b0] sm:$0xff]
    %v179 = vld [vmem:[#allocation5 + $0x1b8] sm:$0xff]
    %v180 = vld [vmem:[#allocation5 + $0x1c0] sm:$0xff]
    %v181 = vld [vmem:[#allocation5 + $0x1c8] sm:$0xff]
    %v182 = vld [vmem:[#allocation5 + $0x1d0] sm:$0xff]
    %v183 = vld [vmem:[#allocation5 + $0x1d8] sm:$0xff]
    %v184 = vld [vmem:[#allocation5 + $0x1e0] sm:$0xff]
    %v185 = vld [vmem:[#allocation5 + $0x1e8] sm:$0xff]
    %v186 = vld [vmem:[#allocation5 + $0x1f0] sm:$0xff]
    %v187 = vld [vmem:[#allocation5 + $0x1f8] sm:$0xff]
    %v188 = vld [vmem:[#allocation5 + $0x200] sm:$0xff]
    %v189 = vld [vmem:[#allocation5 + $0x208] sm:$0xff]
    %v190 = vld [vmem:[#allocation5 + $0x210] sm:$0xff]
    %v191 = vld [vmem:[#allocation5 + $0x218] sm:$0xff]
    %v192 = vld [vmem:[#allocation5 + $0x220] sm:$0xff]
    %v193 = vld [vmem:[#allocation5 + $0x228] sm:$0xff]
    %v194 = vld [vmem:[#allocation5 + $0x230] sm:$0xff]
    %v195 = vld [vmem:[#allocation5 + $0x238] sm:$0xff]
    %v196 = vld [vmem:[#allocation5 + $0x240] sm:$0xff]
    %v197 = vld [vmem:[#allocation5 + $0x248] sm:$0xff]
    %v198 = vld [vmem:[#allocation5 + $0x250] sm:$0xff]
    %v199 = vld [vmem:[#allocation5 + $0x258] sm:$0xff]
    %v200 = vld [vmem:[#allocation5 + $0x260] sm:$0xff]
    %v201 = vld [vmem:[#allocation5 + $0x268] sm:$0xff]
    %v202 = vld [vmem:[#allocation5 + $0x270] sm:$0xff]
    %v203 = vld [vmem:[#allocation5 + $0x278] sm:$0xff]
    %v204 = vld [vmem:[#allocation5 + $0x280] sm:$0xff]
    %v205 = vld [vmem:[#allocation5 + $0x288] sm:$0xff]
    %v206 = vld [vmem:[#allocation5 + $0x290] sm:$0xff]
    %v207 = vld [vmem:[#allocation5 + $0x298] sm:$0xff]
    %v208 = vld [vmem:[#allocation5 + $0x2a0] sm:$0xff]
    %v209 = vld [vmem:[#allocation5 + $0x2a8] sm:$0xff]
    %v210 = vld [vmem:[#allocation5 + $0x2b0] sm:$0xff]
    %v211 = vld [vmem:[#allocation5 + $0x2b8] sm:$0xff]
    %v212 = vld [vmem:[#allocation5 + $0x2c0] sm:$0xff]
    %v213 = vld [vmem:[#allocation5 + $0x2c8] sm:$0xff]
    %v214 = vld [vmem:[#allocation5 + $0x2d0] sm:$0xff]
    %v215 = vld [vmem:[#allocation5 + $0x2d8] sm:$0xff]
    %v216 = vld [vmem:[#allocation5 + $0x2e0] sm:$0xff]
    %v217 = vld [vmem:[#allocation5 + $0x2e8] sm:$0xff]
    %v218 = vld [vmem:[#allocation5 + $0x2f0] sm:$0xff]
    %v219 = vld [vmem:[#allocation5 + $0x2f8] sm:$0xff]
    %v220 = vld [vmem:[#allocation5 + $0x300] sm:$0xff]
    %v221 = vld [vmem:[#allocation5 + $0x308] sm:$0xff]
    %v222 = vld [vmem:[#allocation5 + $0x310] sm:$0xff]
    %v223 = vld [vmem:[#allocation5 + $0x318] sm:$0xff]
    %v224 = vld [vmem:[#allocation5 + $0x320] sm:$0xff]
    %v225 = vld [vmem:[#allocation5 + $0x328] sm:$0xff]
    %v226 = vld [vmem:[#allocation5 + $0x330] sm:$0xff]
    %v227 = vld [vmem:[#allocation5 + $0x338] sm:$0xff]
    %v228 = vld [vmem:[#allocation5 + $0x340] sm:$0xff]
    %v229 = vld [vmem:[#allocation5 + $0x348] sm:$0xff]
    %v230 = vld [vmem:[#allocation5 + $0x350] sm:$0xff]
    %v231 = vld [vmem:[#allocation5 + $0x358] sm:$0xff]
    %v232 = vld [vmem:[#allocation5 + $0x360] sm:$0xff]
    %v233 = vld [vmem:[#allocation5 + $0x368] sm:$0xff]
    %v234 = vld [vmem:[#allocation5 + $0x370] sm:$0xff]
    %v235 = vld [vmem:[#allocation5 + $0x378] sm:$0xff]
    %v236 = vld [vmem:[#allocation5 + $0x380] sm:$0xff]
    %v237 = vld [vmem:[#allocation5 + $0x388] sm:$0xff]
    %v238 = vld [vmem:[#allocation5 + $0x390] sm:$0xff]
    %v239 = vld [vmem:[#allocation5 + $0x398] sm:$0xff]
    %v240 = vld [vmem:[#allocation5 + $0x3a0] sm:$0xff]
    %v241 = vld [vmem:[#allocation5 + $0x3a8] sm:$0xff]
    %v242 = vld [vmem:[#allocation5 + $0x3b0] sm:$0xff]
    %v243 = vld [vmem:[#allocation5 + $0x3b8] sm:$0xff]
    %v244 = vld [vmem:[#allocation5 + $0x3c0] sm:$0xff]
    %v245 = vld [vmem:[#allocation5 + $0x3c8] sm:$0xff]
    %v246 = vld [vmem:[#allocation5 + $0x3d0] sm:$0xff]
    %v247 = vld [vmem:[#allocation5 + $0x3d8] sm:$0xff]
    %v248 = vld [vmem:[#allocation5 + $0x3e0] sm:$0xff]
    %v249 = vld [vmem:[#allocation5 + $0x3e8] sm:$0xff]
    %v250 = vld [vmem:[#allocation5 + $0x3f0] sm:$0xff]
    %v251 = vld [vmem:[#allocation5 + $0x3f8] sm:$0xff]
    %v252 = vld [vmem:[#allocation5 + $0x400] sm:$0xff]
    %v253 = vld [vmem:[#allocation5 + $0x408] sm:$0xff]
    %v254 = vld [vmem:[#allocation5 + $0x410] sm:$0xff]
    %v255 = vld [vmem:[#allocation5 + $0x418] sm:$0xff]
    %v256 = vld [vmem:[#allocation5 + $0x420] sm:$0xff]
    %v257 = vld [vmem:[#allocation5 + $0x428] sm:$0xff]
    %v258 = vld [vmem:[#allocation5 + $0x430] sm:$0xff]
    %v259 = vld [vmem:[#allocation5 + $0x438] sm:$0xff]
    %v260 = vld [vmem:[#allocation5 + $0x440] sm:$0xff]
    %v261 = vld [vmem:[#allocation5 + $0x448] sm:$0xff]
    %v262 = vld [vmem:[#allocation5 + $0x450] sm:$0xff]
    %v263 = vld [vmem:[#allocation5 + $0x458] sm:$0xff]
    %v264 = vld [vmem:[#allocation5 + $0x460] sm:$0xff]
    %v265 = vld [vmem:[#allocation5 + $0x468] sm:$0xff]
    %v266 = vld [vmem:[#allocation5 + $0x470] sm:$0xff]
    %v267 = vld [vmem:[#allocation5 + $0x478] sm:$0xff]
    %v268 = vld [vmem:[#allocation5 + $0x480] sm:$0xff]
    %v269 = vld [vmem:[#allocation5 + $0x488] sm:$0xff]
    %v270 = vld [vmem:[#allocation5 + $0x490] sm:$0xff]
    %v271 = vld [vmem:[#allocation5 + $0x498] sm:$0xff]
    %v272 = vld [vmem:[#allocation5 + $0x4a0] sm:$0xff]
    %v273 = vld [vmem:[#allocation5 + $0x4a8] sm:$0xff]
    %v274 = vld [vmem:[#allocation5 + $0x4b0] sm:$0xff]
    %v275 = vld [vmem:[#allocation5 + $0x4b8] sm:$0xff]
    %v276 = vld [vmem:[#allocation5 + $0x4c0] sm:$0xff]
    %v277 = vld [vmem:[#allocation5 + $0x4c8] sm:$0xff]
    %v278 = vld [vmem:[#allocation5 + $0x4d0] sm:$0xff]
    %v279 = vld [vmem:[#allocation5 + $0x4d8] sm:$0xff]
    %v280 = vld [vmem:[#allocation5 + $0x4e0] sm:$0xff]
    %v281 = vld [vmem:[#allocation5 + $0x4e8] sm:$0xff]
    %v282 = vld [vmem:[#allocation5 + $0x4f0] sm:$0xff]
    %v283 = vld [vmem:[#allocation5 + $0x4f8] sm:$0xff]
    %v284 = vld [vmem:[#allocation5 + $0x500] sm:$0xff]
    %v285 = vld [vmem:[#allocation5 + $0x508] sm:$0xff]
    %v286 = vld [vmem:[#allocation5 + $0x510] sm:$0xff]
    %v287 = vld [vmem:[#allocation5 + $0x518] sm:$0xff]
    %v288 = vld [vmem:[#allocation5 + $0x520] sm:$0xff]
    %v289 = vld [vmem:[#allocation5 + $0x528] sm:$0xff]
    %v290 = vld [vmem:[#allocation5 + $0x530] sm:$0xff]
    %v291 = vld [vmem:[#allocation5 + $0x538] sm:$0xff]
    %v292 = vld [vmem:[#allocation5 + $0x540] sm:$0xff]
    %v293 = vld [vmem:[#allocation5 + $0x548] sm:$0xff]
    %v294 = vld [vmem:[#allocation5 + $0x550] sm:$0xff]
    %v295 = vld [vmem:[#allocation5 + $0x558] sm:$0xff]
    %v296 = vld [vmem:[#allocation5 + $0x560] sm:$0xff]
    %v297 = vld [vmem:[#allocation5 + $0x568] sm:$0xff]
    %v298 = vld [vmem:[#allocation5 + $0x570] sm:$0xff]
    %v299 = vld [vmem:[#allocation5 + $0x578] sm:$0xff]
    %v300 = vld [vmem:[#allocation5 + $0x580] sm:$0xff]
    %v301 = vld [vmem:[#allocation5 + $0x588] sm:$0xff]
    %v302 = vld [vmem:[#allocation5 + $0x590] sm:$0xff]
    %v303 = vld [vmem:[#allocation5 + $0x598] sm:$0xff]
    %v304 = vld [vmem:[#allocation5 + $0x5a0] sm:$0xff]
    %v305 = vld [vmem:[#allocation5 + $0x5a8] sm:$0xff]
    %v306 = vld [vmem:[#allocation5 + $0x5b0] sm:$0xff]
    %v307 = vld [vmem:[#allocation5 + $0x5b8] sm:$0xff]
    %v308 = vld [vmem:[#allocation5 + $0x5c0] sm:$0xff]
    %v309 = vld [vmem:[#allocation5 + $0x5c8] sm:$0xff]
    %v310 = vld [vmem:[#allocation5 + $0x5d0] sm:$0xff]
    %v311 = vld [vmem:[#allocation5 + $0x5d8] sm:$0xff]
    %v312 = vld [vmem:[#allocation5 + $0x5e0] sm:$0xff]
    %v313 = vld [vmem:[#allocation5 + $0x5e8] sm:$0xff]
    %v314 = vld [vmem:[#allocation5 + $0x5f0] sm:$0xff]
    %v315 = vld [vmem:[#allocation5 + $0x5f8] sm:$0xff]
    %v316 = vld [vmem:[#allocation5 + $0x600] sm:$0xff]
    %v317 = vld [vmem:[#allocation5 + $0x608] sm:$0xff]
    %v318 = vld [vmem:[#allocation5 + $0x610] sm:$0xff]
    %v319 = vld [vmem:[#allocation5 + $0x618] sm:$0xff]
    %v320 = vld [vmem:[#allocation5 + $0x620] sm:$0xff]
    %v321 = vld [vmem:[#allocation5 + $0x628] sm:$0xff]
    %v322 = vld [vmem:[#allocation5 + $0x630] sm:$0xff]
    %v323 = vld [vmem:[#allocation5 + $0x638] sm:$0xff]
    %v324 = vld [vmem:[#allocation5 + $0x640] sm:$0xff]
    %v325 = vld [vmem:[#allocation5 + $0x648] sm:$0xff]
    %v326 = vld [vmem:[#allocation5 + $0x650] sm:$0xff]
    %v327 = vld [vmem:[#allocation5 + $0x658] sm:$0xff]
    %v328 = vld [vmem:[#allocation5 + $0x660] sm:$0xff]
    %v329 = vld [vmem:[#allocation5 + $0x668] sm:$0xff]
    %v330 = vld [vmem:[#allocation5 + $0x670] sm:$0xff]
    %v331 = vld [vmem:[#allocation5 + $0x678] sm:$0xff]
    %v332 = vld [vmem:[#allocation5 + $0x680] sm:$0xff]
    %v333 = vld [vmem:[#allocation5 + $0x688] sm:$0xff]
    %v334 = vld [vmem:[#allocation5 + $0x690] sm:$0xff]
    %v335 = vld [vmem:[#allocation5 + $0x698] sm:$0xff]
    %v336 = vld [vmem:[#allocation5 + $0x6a0] sm:$0xff]
    %v337 = vld [vmem:[#allocation5 + $0x6a8] sm:$0xff]
    %v338 = vld [vmem:[#allocation5 + $0x6b0] sm:$0xff]
    %v339 = vld [vmem:[#allocation5 + $0x6b8] sm:$0xff]
    %v340 = vld [vmem:[#allocation5 + $0x6c0] sm:$0xff]
    %v341 = vld [vmem:[#allocation5 + $0x6c8] sm:$0xff]
    %v342 = vld [vmem:[#allocation5 + $0x6d0] sm:$0xff]
    %v343 = vld [vmem:[#allocation5 + $0x6d8] sm:$0xff]
    %v344 = vld [vmem:[#allocation5 + $0x6e0] sm:$0xff]
    %v345 = vld [vmem:[#allocation5 + $0x6e8] sm:$0xff]
    %v346 = vld [vmem:[#allocation5 + $0x6f0] sm:$0xff]
    %v347 = vld [vmem:[#allocation5 + $0x6f8] sm:$0xff]
    %v348 = vld [vmem:[#allocation5 + $0x700] sm:$0xff]
    %v349 = vld [vmem:[#allocation5 + $0x708] sm:$0xff]
    %v350 = vld [vmem:[#allocation5 + $0x710] sm:$0xff]
    %v351 = vld [vmem:[#allocation5 + $0x718] sm:$0xff]
    %v352 = vld [vmem:[#allocation5 + $0x720] sm:$0xff]
    %v353 = vld [vmem:[#allocation5 + $0x728] sm:$0xff]
    %v354 = vld [vmem:[#allocation5 + $0x730] sm:$0xff]
    %v355 = vld [vmem:[#allocation5 + $0x738] sm:$0xff]
    %v356 = vld [vmem:[#allocation5 + $0x740] sm:$0xff]
    %v357 = vld [vmem:[#allocation5 + $0x748] sm:$0xff]
    %v358 = vld [vmem:[#allocation5 + $0x750] sm:$0xff]
    %v359 = vld [vmem:[#allocation5 + $0x758] sm:$0xff]
    %v360 = vld [vmem:[#allocation5 + $0x760] sm:$0xff]
    %v361 = vld [vmem:[#allocation5 + $0x768] sm:$0xff]
    %v362 = vld [vmem:[#allocation5 + $0x770] sm:$0xff]
    %v363 = vld [vmem:[#allocation5 + $0x778] sm:$0xff]
    %v364 = vld [vmem:[#allocation5 + $0x780] sm:$0xff]
    %v365 = vld [vmem:[#allocation5 + $0x788] sm:$0xff]
    %v366 = vld [vmem:[#allocation5 + $0x790] sm:$0xff]
    %v367 = vld [vmem:[#allocation5 + $0x798] sm:$0xff]
    %v368 = vld [vmem:[#allocation5 + $0x7a0] sm:$0xff]
    %v369 = vld [vmem:[#allocation5 + $0x7a8] sm:$0xff]
    %v370 = vld [vmem:[#allocation5 + $0x7b0] sm:$0xff]
    %v371 = vld [vmem:[#allocation5 + $0x7b8] sm:$0xff]
    %v372 = vld [vmem:[#allocation5 + $0x7c0] sm:$0xff]
    %v373 = vld [vmem:[#allocation5 + $0x7c8] sm:$0xff]
    %v374 = vld [vmem:[#allocation5 + $0x7d0] sm:$0xff]
    %v375 = vld [vmem:[#allocation5 + $0x7d8] sm:$0xff]
    %v376 = vld [vmem:[#allocation5 + $0x7e0] sm:$0xff]
    %v377 = vld [vmem:[#allocation5 + $0x7e8] sm:$0xff]
    %v378 = vld [vmem:[#allocation5 + $0x7f0] sm:$0xff]
    %v379 = vld [vmem:[#allocation5 + $0x7f8] sm:$0xff]
    %v380 = vld [vmem:[%s6] sm:$0xf]
    %v382 = vlaneseq
    %v383 = vshrl.u32 %v382, 7
    %v384 = vsub.s32 0, %v383
    %v385 = vrot.slane %v380, %v384
    %v386 = vlaneseq
    %v387 = vshrl.u32 %v386, 7
    %v388 = vsub.s32 1, %v387
    %v389 = vrot.slane %v380, %v388
    %v390 = vlaneseq
    %v391 = vshrl.u32 %v390, 7
    %v392 = vsub.s32 2, %v391
    %v393 = vrot.slane %v380, %v392
    %v394 = vlaneseq
    %v395 = vshrl.u32 %v394, 7
    %v396 = vsub.s32 3, %v395
    %v397 = vrot.slane %v380, %v396
    %v658 = vunpack.c.l.b16 %v124
    %v659 = vunpack.c.h.b16 %v124
    %v660 = vunpack.c.l.b16 %v125
    %v661 = vunpack.c.h.b16 %v125
    %v662 = vunpack.c.l.b16 %v126
    %v663 = vunpack.c.h.b16 %v126
    %v664 = vunpack.c.l.b16 %v127
    %v665 = vunpack.c.h.b16 %v127
    %v666 = vunpack.c.l.b16 %v128
    %v667 = vunpack.c.h.b16 %v128
    %v668 = vunpack.c.l.b16 %v129
    %v669 = vunpack.c.h.b16 %v129
    %v670 = vunpack.c.l.b16 %v130
    %v671 = vunpack.c.h.b16 %v130
    %v672 = vunpack.c.l.b16 %v131
    %v673 = vunpack.c.h.b16 %v131
    %v674 = vunpack.c.l.b16 %v132
    %v675 = vunpack.c.h.b16 %v132
    %v676 = vunpack.c.l.b16 %v133
    %v677 = vunpack.c.h.b16 %v133
    %v678 = vunpack.c.l.b16 %v134
    %v679 = vunpack.c.h.b16 %v134
    %v680 = vunpack.c.l.b16 %v135
    %v681 = vunpack.c.h.b16 %v135
    %v682 = vunpack.c.l.b16 %v136
    %v683 = vunpack.c.h.b16 %v136
    %v684 = vunpack.c.l.b16 %v137
    %v685 = vunpack.c.h.b16 %v137
    %v686 = vunpack.c.l.b16 %v138
    %v687 = vunpack.c.h.b16 %v138
    %v688 = vunpack.c.l.b16 %v139
    %v689 = vunpack.c.h.b16 %v139
    %v690 = vunpack.c.l.b16 %v140
    %v691 = vunpack.c.h.b16 %v140
    %v692 = vunpack.c.l.b16 %v141
    %v693 = vunpack.c.h.b16 %v141
    %v694 = vunpack.c.l.b16 %v142
    %v695 = vunpack.c.h.b16 %v142
    %v696 = vunpack.c.l.b16 %v143
    %v697 = vunpack.c.h.b16 %v143
    %v698 = vunpack.c.l.b16 %v144
    %v699 = vunpack.c.h.b16 %v144
    %v700 = vunpack.c.l.b16 %v145
    %v701 = vunpack.c.h.b16 %v145
    %v702 = vunpack.c.l.b16 %v146
    %v703 = vunpack.c.h.b16 %v146
    %v704 = vunpack.c.l.b16 %v147
    %v705 = vunpack.c.h.b16 %v147
    %v706 = vunpack.c.l.b16 %v148
    %v707 = vunpack.c.h.b16 %v148
    %v708 = vunpack.c.l.b16 %v149
    %v709 = vunpack.c.h.b16 %v149
    %v710 = vunpack.c.l.b16 %v150
    %v711 = vunpack.c.h.b16 %v150
    %v712 = vunpack.c.l.b16 %v151
    %v713 = vunpack.c.h.b16 %v151
    %v714 = vunpack.c.l.b16 %v152
    %v715 = vunpack.c.h.b16 %v152
    %v716 = vunpack.c.l.b16 %v153
    %v717 = vunpack.c.h.b16 %v153
    %v718 = vunpack.c.l.b16 %v154
    %v719 = vunpack.c.h.b16 %v154
    %v720 = vunpack.c.l.b16 %v155
    %v721 = vunpack.c.h.b16 %v155
    %v722 = vunpack.c.l.b16 %v156
    %v723 = vunpack.c.h.b16 %v156
    %v724 = vunpack.c.l.b16 %v157
    %v725 = vunpack.c.h.b16 %v157
    %v726 = vunpack.c.l.b16 %v158
    %v727 = vunpack.c.h.b16 %v158
    %v728 = vunpack.c.l.b16 %v159
    %v729 = vunpack.c.h.b16 %v159
    %v730 = vunpack.c.l.b16 %v160
    %v731 = vunpack.c.h.b16 %v160
    %v732 = vunpack.c.l.b16 %v161
    %v733 = vunpack.c.h.b16 %v161
    %v734 = vunpack.c.l.b16 %v162
    %v735 = vunpack.c.h.b16 %v162
    %v736 = vunpack.c.l.b16 %v163
    %v737 = vunpack.c.h.b16 %v163
    %v738 = vunpack.c.l.b16 %v164
    %v739 = vunpack.c.h.b16 %v164
    %v740 = vunpack.c.l.b16 %v165
    %v741 = vunpack.c.h.b16 %v165
    %v742 = vunpack.c.l.b16 %v166
    %v743 = vunpack.c.h.b16 %v166
    %v744 = vunpack.c.l.b16 %v167
    %v745 = vunpack.c.h.b16 %v167
    %v746 = vunpack.c.l.b16 %v168
    %v747 = vunpack.c.h.b16 %v168
    %v748 = vunpack.c.l.b16 %v169
    %v749 = vunpack.c.h.b16 %v169
    %v750 = vunpack.c.l.b16 %v170
    %v751 = vunpack.c.h.b16 %v170
    %v752 = vunpack.c.l.b16 %v171
    %v753 = vunpack.c.h.b16 %v171
    %v754 = vunpack.c.l.b16 %v172
    %v755 = vunpack.c.h.b16 %v172
    %v756 = vunpack.c.l.b16 %v173
    %v757 = vunpack.c.h.b16 %v173
    %v758 = vunpack.c.l.b16 %v174
    %v759 = vunpack.c.h.b16 %v174
    %v760 = vunpack.c.l.b16 %v175
    %v761 = vunpack.c.h.b16 %v175
    %v762 = vunpack.c.l.b16 %v176
    %v763 = vunpack.c.h.b16 %v176
    %v764 = vunpack.c.l.b16 %v177
    %v765 = vunpack.c.h.b16 %v177
    %v766 = vunpack.c.l.b16 %v178
    %v767 = vunpack.c.h.b16 %v178
    %v768 = vunpack.c.l.b16 %v179
    %v769 = vunpack.c.h.b16 %v179
    %v770 = vunpack.c.l.b16 %v180
    %v771 = vunpack.c.h.b16 %v180
    %v772 = vunpack.c.l.b16 %v181
    %v773 = vunpack.c.h.b16 %v181
    %v774 = vunpack.c.l.b16 %v182
    %v775 = vunpack.c.h.b16 %v182
    %v776 = vunpack.c.l.b16 %v183
    %v777 = vunpack.c.h.b16 %v183
    %v778 = vunpack.c.l.b16 %v184
    %v779 = vunpack.c.h.b16 %v184
    %v780 = vunpack.c.l.b16 %v185
    %v781 = vunpack.c.h.b16 %v185
    %v782 = vunpack.c.l.b16 %v186
    %v783 = vunpack.c.h.b16 %v186
    %v784 = vunpack.c.l.b16 %v187
    %v785 = vunpack.c.h.b16 %v187
    %v786 = vunpack.c.l.b16 %v188
    %v787 = vunpack.c.h.b16 %v188
    %v788 = vunpack.c.l.b16 %v189
    %v789 = vunpack.c.h.b16 %v189
    %v790 = vunpack.c.l.b16 %v190
    %v791 = vunpack.c.h.b16 %v190
    %v792 = vunpack.c.l.b16 %v191
    %v793 = vunpack.c.h.b16 %v191
    %v794 = vunpack.c.l.b16 %v192
    %v795 = vunpack.c.h.b16 %v192
    %v796 = vunpack.c.l.b16 %v193
    %v797 = vunpack.c.h.b16 %v193
    %v798 = vunpack.c.l.b16 %v194
    %v799 = vunpack.c.h.b16 %v194
    %v800 = vunpack.c.l.b16 %v195
    %v801 = vunpack.c.h.b16 %v195
    %v802 = vunpack.c.l.b16 %v196
    %v803 = vunpack.c.h.b16 %v196
    %v804 = vunpack.c.l.b16 %v197
    %v805 = vunpack.c.h.b16 %v197
    %v806 = vunpack.c.l.b16 %v198
    %v807 = vunpack.c.h.b16 %v198
    %v808 = vunpack.c.l.b16 %v199
    %v809 = vunpack.c.h.b16 %v199
    %v810 = vunpack.c.l.b16 %v200
    %v811 = vunpack.c.h.b16 %v200
    %v812 = vunpack.c.l.b16 %v201
    %v813 = vunpack.c.h.b16 %v201
    %v814 = vunpack.c.l.b16 %v202
    %v815 = vunpack.c.h.b16 %v202
    %v816 = vunpack.c.l.b16 %v203
    %v817 = vunpack.c.h.b16 %v203
    %v818 = vunpack.c.l.b16 %v204
    %v819 = vunpack.c.h.b16 %v204
    %v820 = vunpack.c.l.b16 %v205
    %v821 = vunpack.c.h.b16 %v205
    %v822 = vunpack.c.l.b16 %v206
    %v823 = vunpack.c.h.b16 %v206
    %v824 = vunpack.c.l.b16 %v207
    %v825 = vunpack.c.h.b16 %v207
    %v826 = vunpack.c.l.b16 %v208
    %v827 = vunpack.c.h.b16 %v208
    %v828 = vunpack.c.l.b16 %v209
    %v829 = vunpack.c.h.b16 %v209
    %v830 = vunpack.c.l.b16 %v210
    %v831 = vunpack.c.h.b16 %v210
    %v832 = vunpack.c.l.b16 %v211
    %v833 = vunpack.c.h.b16 %v211
    %v834 = vunpack.c.l.b16 %v212
    %v835 = vunpack.c.h.b16 %v212
    %v836 = vunpack.c.l.b16 %v213
    %v837 = vunpack.c.h.b16 %v213
    %v838 = vunpack.c.l.b16 %v214
    %v839 = vunpack.c.h.b16 %v214
    %v840 = vunpack.c.l.b16 %v215
    %v841 = vunpack.c.h.b16 %v215
    %v842 = vunpack.c.l.b16 %v216
    %v843 = vunpack.c.h.b16 %v216
    %v844 = vunpack.c.l.b16 %v217
    %v845 = vunpack.c.h.b16 %v217
    %v846 = vunpack.c.l.b16 %v218
    %v847 = vunpack.c.h.b16 %v218
    %v848 = vunpack.c.l.b16 %v219
    %v849 = vunpack.c.h.b16 %v219
    %v850 = vunpack.c.l.b16 %v220
    %v851 = vunpack.c.h.b16 %v220
    %v852 = vunpack.c.l.b16 %v221
    %v853 = vunpack.c.h.b16 %v221
    %v854 = vunpack.c.l.b16 %v222
    %v855 = vunpack.c.h.b16 %v222
    %v856 = vunpack.c.l.b16 %v223
    %v857 = vunpack.c.h.b16 %v223
    %v858 = vunpack.c.l.b16 %v224
    %v859 = vunpack.c.h.b16 %v224
    %v860 = vunpack.c.l.b16 %v225
    %v861 = vunpack.c.h.b16 %v225
    %v862 = vunpack.c.l.b16 %v226
    %v863 = vunpack.c.h.b16 %v226
    %v864 = vunpack.c.l.b16 %v227
    %v865 = vunpack.c.h.b16 %v227
    %v866 = vunpack.c.l.b16 %v228
    %v867 = vunpack.c.h.b16 %v228
    %v868 = vunpack.c.l.b16 %v229
    %v869 = vunpack.c.h.b16 %v229
    %v870 = vunpack.c.l.b16 %v230
    %v871 = vunpack.c.h.b16 %v230
    %v872 = vunpack.c.l.b16 %v231
    %v873 = vunpack.c.h.b16 %v231
    %v874 = vunpack.c.l.b16 %v232
    %v875 = vunpack.c.h.b16 %v232
    %v876 = vunpack.c.l.b16 %v233
    %v877 = vunpack.c.h.b16 %v233
    %v878 = vunpack.c.l.b16 %v234
    %v879 = vunpack.c.h.b16 %v234
    %v880 = vunpack.c.l.b16 %v235
    %v881 = vunpack.c.h.b16 %v235
    %v882 = vunpack.c.l.b16 %v236
    %v883 = vunpack.c.h.b16 %v236
    %v884 = vunpack.c.l.b16 %v237
    %v885 = vunpack.c.h.b16 %v237
    %v886 = vunpack.c.l.b16 %v238
    %v887 = vunpack.c.h.b16 %v238
    %v888 = vunpack.c.l.b16 %v239
    %v889 = vunpack.c.h.b16 %v239
    %v890 = vunpack.c.l.b16 %v240
    %v891 = vunpack.c.h.b16 %v240
    %v892 = vunpack.c.l.b16 %v241
    %v893 = vunpack.c.h.b16 %v241
    %v894 = vunpack.c.l.b16 %v242
    %v895 = vunpack.c.h.b16 %v242
    %v896 = vunpack.c.l.b16 %v243
    %v897 = vunpack.c.h.b16 %v243
    %v898 = vunpack.c.l.b16 %v244
    %v899 = vunpack.c.h.b16 %v244
    %v900 = vunpack.c.l.b16 %v245
    %v901 = vunpack.c.h.b16 %v245
    %v902 = vunpack.c.l.b16 %v246
    %v903 = vunpack.c.h.b16 %v246
    %v904 = vunpack.c.l.b16 %v247
    %v905 = vunpack.c.h.b16 %v247
    %v906 = vunpack.c.l.b16 %v248
    %v907 = vunpack.c.h.b16 %v248
    %v908 = vunpack.c.l.b16 %v249
    %v909 = vunpack.c.h.b16 %v249
    %v910 = vunpack.c.l.b16 %v250
    %v911 = vunpack.c.h.b16 %v250
    %v912 = vunpack.c.l.b16 %v251
    %v913 = vunpack.c.h.b16 %v251
    %v914 = vunpack.c.l.b16 %v252
    %v915 = vunpack.c.h.b16 %v252
    %v916 = vunpack.c.l.b16 %v253
    %v917 = vunpack.c.h.b16 %v253
    %v918 = vunpack.c.l.b16 %v254
    %v919 = vunpack.c.h.b16 %v254
    %v920 = vunpack.c.l.b16 %v255
    %v921 = vunpack.c.h.b16 %v255
    %v922 = vunpack.c.l.b16 %v256
    %v923 = vunpack.c.h.b16 %v256
    %v924 = vunpack.c.l.b16 %v257
    %v925 = vunpack.c.h.b16 %v257
    %v926 = vunpack.c.l.b16 %v258
    %v927 = vunpack.c.h.b16 %v258
    %v928 = vunpack.c.l.b16 %v259
    %v929 = vunpack.c.h.b16 %v259
    %v930 = vunpack.c.l.b16 %v260
    %v931 = vunpack.c.h.b16 %v260
    %v932 = vunpack.c.l.b16 %v261
    %v933 = vunpack.c.h.b16 %v261
    %v934 = vunpack.c.l.b16 %v262
    %v935 = vunpack.c.h.b16 %v262
    %v936 = vunpack.c.l.b16 %v263
    %v937 = vunpack.c.h.b16 %v263
    %v938 = vunpack.c.l.b16 %v264
    %v939 = vunpack.c.h.b16 %v264
    %v940 = vunpack.c.l.b16 %v265
    %v941 = vunpack.c.h.b16 %v265
    %v942 = vunpack.c.l.b16 %v266
    %v943 = vunpack.c.h.b16 %v266
    %v944 = vunpack.c.l.b16 %v267
    %v945 = vunpack.c.h.b16 %v267
    %v946 = vunpack.c.l.b16 %v268
    %v947 = vunpack.c.h.b16 %v268
    %v948 = vunpack.c.l.b16 %v269
    %v949 = vunpack.c.h.b16 %v269
    %v950 = vunpack.c.l.b16 %v270
    %v951 = vunpack.c.h.b16 %v270
    %v952 = vunpack.c.l.b16 %v271
    %v953 = vunpack.c.h.b16 %v271
    %v954 = vunpack.c.l.b16 %v272
    %v955 = vunpack.c.h.b16 %v272
    %v956 = vunpack.c.l.b16 %v273
    %v957 = vunpack.c.h.b16 %v273
    %v958 = vunpack.c.l.b16 %v274
    %v959 = vunpack.c.h.b16 %v274
    %v960 = vunpack.c.l.b16 %v275
    %v961 = vunpack.c.h.b16 %v275
    %v962 = vunpack.c.l.b16 %v276
    %v963 = vunpack.c.h.b16 %v276
    %v964 = vunpack.c.l.b16 %v277
    %v965 = vunpack.c.h.b16 %v277
    %v966 = vunpack.c.l.b16 %v278
    %v967 = vunpack.c.h.b16 %v278
    %v968 = vunpack.c.l.b16 %v279
    %v969 = vunpack.c.h.b16 %v279
    %v970 = vunpack.c.l.b16 %v280
    %v971 = vunpack.c.h.b16 %v280
    %v972 = vunpack.c.l.b16 %v281
    %v973 = vunpack.c.h.b16 %v281
    %v974 = vunpack.c.l.b16 %v282
    %v975 = vunpack.c.h.b16 %v282
    %v976 = vunpack.c.l.b16 %v283
    %v977 = vunpack.c.h.b16 %v283
    %v978 = vunpack.c.l.b16 %v284
    %v979 = vunpack.c.h.b16 %v284
    %v980 = vunpack.c.l.b16 %v285
    %v981 = vunpack.c.h.b16 %v285
    %v982 = vunpack.c.l.b16 %v286
    %v983 = vunpack.c.h.b16 %v286
    %v984 = vunpack.c.l.b16 %v287
    %v985 = vunpack.c.h.b16 %v287
    %v986 = vunpack.c.l.b16 %v288
    %v987 = vunpack.c.h.b16 %v288
    %v988 = vunpack.c.l.b16 %v289
    %v989 = vunpack.c.h.b16 %v289
    %v990 = vunpack.c.l.b16 %v290
    %v991 = vunpack.c.h.b16 %v290
    %v992 = vunpack.c.l.b16 %v291
    %v993 = vunpack.c.h.b16 %v291
    %v994 = vunpack.c.l.b16 %v292
    %v995 = vunpack.c.h.b16 %v292
    %v996 = vunpack.c.l.b16 %v293
    %v997 = vunpack.c.h.b16 %v293
    %v998 = vunpack.c.l.b16 %v294
    %v999 = vunpack.c.h.b16 %v294
    %v1000 = vunpack.c.l.b16 %v295
    %v1001 = vunpack.c.h.b16 %v295
    %v1002 = vunpack.c.l.b16 %v296
    %v1003 = vunpack.c.h.b16 %v296
    %v1004 = vunpack.c.l.b16 %v297
    %v1005 = vunpack.c.h.b16 %v297
    %v1006 = vunpack.c.l.b16 %v298
    %v1007 = vunpack.c.h.b16 %v298
    %v1008 = vunpack.c.l.b16 %v299
    %v1009 = vunpack.c.h.b16 %v299
    %v1010 = vunpack.c.l.b16 %v300
    %v1011 = vunpack.c.h.b16 %v300
    %v1012 = vunpack.c.l.b16 %v301
    %v1013 = vunpack.c.h.b16 %v301
    %v1014 = vunpack.c.l.b16 %v302
    %v1015 = vunpack.c.h.b16 %v302
    %v1016 = vunpack.c.l.b16 %v303
    %v1017 = vunpack.c.h.b16 %v303
    %v1018 = vunpack.c.l.b16 %v304
    %v1019 = vunpack.c.h.b16 %v304
    %v1020 = vunpack.c.l.b16 %v305
    %v1021 = vunpack.c.h.b16 %v305
    %v1022 = vunpack.c.l.b16 %v306
    %v1023 = vunpack.c.h.b16 %v306
    %v1024 = vunpack.c.l.b16 %v307
    %v1025 = vunpack.c.h.b16 %v307
    %v1026 = vunpack.c.l.b16 %v308
    %v1027 = vunpack.c.h.b16 %v308
    %v1028 = vunpack.c.l.b16 %v309
    %v1029 = vunpack.c.h.b16 %v309
    %v1030 = vunpack.c.l.b16 %v310
    %v1031 = vunpack.c.h.b16 %v310
    %v1032 = vunpack.c.l.b16 %v311
    %v1033 = vunpack.c.h.b16 %v311
    %v1034 = vunpack.c.l.b16 %v312
    %v1035 = vunpack.c.h.b16 %v312
    %v1036 = vunpack.c.l.b16 %v313
    %v1037 = vunpack.c.h.b16 %v313
    %v1038 = vunpack.c.l.b16 %v314
    %v1039 = vunpack.c.h.b16 %v314
    %v1040 = vunpack.c.l.b16 %v315
    %v1041 = vunpack.c.h.b16 %v315
    %v1042 = vunpack.c.l.b16 %v316
    %v1043 = vunpack.c.h.b16 %v316
    %v1044 = vunpack.c.l.b16 %v317
    %v1045 = vunpack.c.h.b16 %v317
    %v1046 = vunpack.c.l.b16 %v318
    %v1047 = vunpack.c.h.b16 %v318
    %v1048 = vunpack.c.l.b16 %v319
    %v1049 = vunpack.c.h.b16 %v319
    %v1050 = vunpack.c.l.b16 %v320
    %v1051 = vunpack.c.h.b16 %v320
    %v1052 = vunpack.c.l.b16 %v321
    %v1053 = vunpack.c.h.b16 %v321
    %v1054 = vunpack.c.l.b16 %v322
    %v1055 = vunpack.c.h.b16 %v322
    %v1056 = vunpack.c.l.b16 %v323
    %v1057 = vunpack.c.h.b16 %v323
    %v1058 = vunpack.c.l.b16 %v324
    %v1059 = vunpack.c.h.b16 %v324
    %v1060 = vunpack.c.l.b16 %v325
    %v1061 = vunpack.c.h.b16 %v325
    %v1062 = vunpack.c.l.b16 %v326
    %v1063 = vunpack.c.h.b16 %v326
    %v1064 = vunpack.c.l.b16 %v327
    %v1065 = vunpack.c.h.b16 %v327
    %v1066 = vunpack.c.l.b16 %v328
    %v1067 = vunpack.c.h.b16 %v328
    %v1068 = vunpack.c.l.b16 %v329
    %v1069 = vunpack.c.h.b16 %v329
    %v1070 = vunpack.c.l.b16 %v330
    %v1071 = vunpack.c.h.b16 %v330
    %v1072 = vunpack.c.l.b16 %v331
    %v1073 = vunpack.c.h.b16 %v331
    %v1074 = vunpack.c.l.b16 %v332
    %v1075 = vunpack.c.h.b16 %v332
    %v1076 = vunpack.c.l.b16 %v333
    %v1077 = vunpack.c.h.b16 %v333
    %v1078 = vunpack.c.l.b16 %v334
    %v1079 = vunpack.c.h.b16 %v334
    %v1080 = vunpack.c.l.b16 %v335
    %v1081 = vunpack.c.h.b16 %v335
    %v1082 = vunpack.c.l.b16 %v336
    %v1083 = vunpack.c.h.b16 %v336
    %v1084 = vunpack.c.l.b16 %v337
    %v1085 = vunpack.c.h.b16 %v337
    %v1086 = vunpack.c.l.b16 %v338
    %v1087 = vunpack.c.h.b16 %v338
    %v1088 = vunpack.c.l.b16 %v339
    %v1089 = vunpack.c.h.b16 %v339
    %v1090 = vunpack.c.l.b16 %v340
    %v1091 = vunpack.c.h.b16 %v340
    %v1092 = vunpack.c.l.b16 %v341
    %v1093 = vunpack.c.h.b16 %v341
    %v1094 = vunpack.c.l.b16 %v342
    %v1095 = vunpack.c.h.b16 %v342
    %v1096 = vunpack.c.l.b16 %v343
    %v1097 = vunpack.c.h.b16 %v343
    %v1098 = vunpack.c.l.b16 %v344
    %v1099 = vunpack.c.h.b16 %v344
    %v1100 = vunpack.c.l.b16 %v345
    %v1101 = vunpack.c.h.b16 %v345
    %v1102 = vunpack.c.l.b16 %v346
    %v1103 = vunpack.c.h.b16 %v346
    %v1104 = vunpack.c.l.b16 %v347
    %v1105 = vunpack.c.h.b16 %v347
    %v1106 = vunpack.c.l.b16 %v348
    %v1107 = vunpack.c.h.b16 %v348
    %v1108 = vunpack.c.l.b16 %v349
    %v1109 = vunpack.c.h.b16 %v349
    %v1110 = vunpack.c.l.b16 %v350
    %v1111 = vunpack.c.h.b16 %v350
    %v1112 = vunpack.c.l.b16 %v351
    %v1113 = vunpack.c.h.b16 %v351
    %v1114 = vunpack.c.l.b16 %v352
    %v1115 = vunpack.c.h.b16 %v352
    %v1116 = vunpack.c.l.b16 %v353
    %v1117 = vunpack.c.h.b16 %v353
    %v1118 = vunpack.c.l.b16 %v354
    %v1119 = vunpack.c.h.b16 %v354
    %v1120 = vunpack.c.l.b16 %v355
    %v1121 = vunpack.c.h.b16 %v355
    %v1122 = vunpack.c.l.b16 %v356
    %v1123 = vunpack.c.h.b16 %v356
    %v1124 = vunpack.c.l.b16 %v357
    %v1125 = vunpack.c.h.b16 %v357
    %v1126 = vunpack.c.l.b16 %v358
    %v1127 = vunpack.c.h.b16 %v358
    %v1128 = vunpack.c.l.b16 %v359
    %v1129 = vunpack.c.h.b16 %v359
    %v1130 = vunpack.c.l.b16 %v360
    %v1131 = vunpack.c.h.b16 %v360
    %v1132 = vunpack.c.l.b16 %v361
    %v1133 = vunpack.c.h.b16 %v361
    %v1134 = vunpack.c.l.b16 %v362
    %v1135 = vunpack.c.h.b16 %v362
    %v1136 = vunpack.c.l.b16 %v363
    %v1137 = vunpack.c.h.b16 %v363
    %v1138 = vunpack.c.l.b16 %v364
    %v1139 = vunpack.c.h.b16 %v364
    %v1140 = vunpack.c.l.b16 %v365
    %v1141 = vunpack.c.h.b16 %v365
    %v1142 = vunpack.c.l.b16 %v366
    %v1143 = vunpack.c.h.b16 %v366
    %v1144 = vunpack.c.l.b16 %v367
    %v1145 = vunpack.c.h.b16 %v367
    %v1146 = vunpack.c.l.b16 %v368
    %v1147 = vunpack.c.h.b16 %v368
    %v1148 = vunpack.c.l.b16 %v369
    %v1149 = vunpack.c.h.b16 %v369
    %v1150 = vunpack.c.l.b16 %v370
    %v1151 = vunpack.c.h.b16 %v370
    %v1152 = vunpack.c.l.b16 %v371
    %v1153 = vunpack.c.h.b16 %v371
    %v1154 = vunpack.c.l.b16 %v372
    %v1155 = vunpack.c.h.b16 %v372
    %v1156 = vunpack.c.l.b16 %v373
    %v1157 = vunpack.c.h.b16 %v373
    %v1158 = vunpack.c.l.b16 %v374
    %v1159 = vunpack.c.h.b16 %v374
    %v1160 = vunpack.c.l.b16 %v375
    %v1161 = vunpack.c.h.b16 %v375
    %v1162 = vunpack.c.l.b16 %v376
    %v1163 = vunpack.c.h.b16 %v376
    %v1164 = vunpack.c.l.b16 %v377
    %v1165 = vunpack.c.h.b16 %v377
    %v1166 = vunpack.c.l.b16 %v378
    %v1167 = vunpack.c.h.b16 %v378
    %v1168 = vunpack.c.l.b16 %v379
    %v1169 = vunpack.c.h.b16 %v379
    %v1170 = vpack.c.b16 %v662, %v658
    %v1171 = vpack.c.b16 %v663, %v659
    %v1172 = vpack.c.b16 %v664, %v660
    %v1173 = vpack.c.b16 %v665, %v661
    %v1174 = vpack.c.b16 %v670, %v666
    %v1175 = vpack.c.b16 %v671, %v667
    %v1176 = vpack.c.b16 %v672, %v668
    %v1177 = vpack.c.b16 %v673, %v669
    %v1178 = vpack.c.b16 %v678, %v674
    %v1179 = vpack.c.b16 %v679, %v675
    %v1180 = vpack.c.b16 %v680, %v676
    %v1181 = vpack.c.b16 %v681, %v677
    %v1182 = vpack.c.b16 %v686, %v682
    %v1183 = vpack.c.b16 %v687, %v683
    %v1184 = vpack.c.b16 %v688, %v684
    %v1185 = vpack.c.b16 %v689, %v685
    %v1186 = vpack.c.b16 %v694, %v690
    %v1187 = vpack.c.b16 %v695, %v691
    %v1188 = vpack.c.b16 %v696, %v692
    %v1189 = vpack.c.b16 %v697, %v693
    %v1190 = vpack.c.b16 %v702, %v698
    %v1191 = vpack.c.b16 %v703, %v699
    %v1192 = vpack.c.b16 %v704, %v700
    %v1193 = vpack.c.b16 %v705, %v701
    %v1194 = vpack.c.b16 %v710, %v706
    %v1195 = vpack.c.b16 %v711, %v707
    %v1196 = vpack.c.b16 %v712, %v708
    %v1197 = vpack.c.b16 %v713, %v709
    %v1198 = vpack.c.b16 %v718, %v714
    %v1199 = vpack.c.b16 %v719, %v715
    %v1200 = vpack.c.b16 %v720, %v716
    %v1201 = vpack.c.b16 %v721, %v717
    %v1202 = vpack.c.b16 %v726, %v722
    %v1203 = vpack.c.b16 %v727, %v723
    %v1204 = vpack.c.b16 %v728, %v724
    %v1205 = vpack.c.b16 %v729, %v725
    %v1206 = vpack.c.b16 %v734, %v730
    %v1207 = vpack.c.b16 %v735, %v731
    %v1208 = vpack.c.b16 %v736, %v732
    %v1209 = vpack.c.b16 %v737, %v733
    %v1210 = vpack.c.b16 %v742, %v738
    %v1211 = vpack.c.b16 %v743, %v739
    %v1212 = vpack.c.b16 %v744, %v740
    %v1213 = vpack.c.b16 %v745, %v741
    %v1214 = vpack.c.b16 %v750, %v746
    %v1215 = vpack.c.b16 %v751, %v747
    %v1216 = vpack.c.b16 %v752, %v748
    %v1217 = vpack.c.b16 %v753, %v749
    %v1218 = vpack.c.b16 %v758, %v754
    %v1219 = vpack.c.b16 %v759, %v755
    %v1220 = vpack.c.b16 %v760, %v756
    %v1221 = vpack.c.b16 %v761, %v757
    %v1222 = vpack.c.b16 %v766, %v762
    %v1223 = vpack.c.b16 %v767, %v763
    %v1224 = vpack.c.b16 %v768, %v764
    %v1225 = vpack.c.b16 %v769, %v765
    %v1226 = vpack.c.b16 %v774, %v770
    %v1227 = vpack.c.b16 %v775, %v771
    %v1228 = vpack.c.b16 %v776, %v772
    %v1229 = vpack.c.b16 %v777, %v773
    %v1230 = vpack.c.b16 %v782, %v778
    %v1231 = vpack.c.b16 %v783, %v779
    %v1232 = vpack.c.b16 %v784, %v780
    %v1233 = vpack.c.b16 %v785, %v781
    %v1234 = vpack.c.b16 %v790, %v786
    %v1235 = vpack.c.b16 %v791, %v787
    %v1236 = vpack.c.b16 %v792, %v788
    %v1237 = vpack.c.b16 %v793, %v789
    %v1238 = vpack.c.b16 %v798, %v794
    %v1239 = vpack.c.b16 %v799, %v795
    %v1240 = vpack.c.b16 %v800, %v796
    %v1241 = vpack.c.b16 %v801, %v797
    %v1242 = vpack.c.b16 %v806, %v802
    %v1243 = vpack.c.b16 %v807, %v803
    %v1244 = vpack.c.b16 %v808, %v804
    %v1245 = vpack.c.b16 %v809, %v805
    %v1246 = vpack.c.b16 %v814, %v810
    %v1247 = vpack.c.b16 %v815, %v811
    %v1248 = vpack.c.b16 %v816, %v812
    %v1249 = vpack.c.b16 %v817, %v813
    %v1250 = vpack.c.b16 %v822, %v818
    %v1251 = vpack.c.b16 %v823, %v819
    %v1252 = vpack.c.b16 %v824, %v820
    %v1253 = vpack.c.b16 %v825, %v821
    %v1254 = vpack.c.b16 %v830, %v826
    %v1255 = vpack.c.b16 %v831, %v827
    %v1256 = vpack.c.b16 %v832, %v828
    %v1257 = vpack.c.b16 %v833, %v829
    %v1258 = vpack.c.b16 %v838, %v834
    %v1259 = vpack.c.b16 %v839, %v835
    %v1260 = vpack.c.b16 %v840, %v836
    %v1261 = vpack.c.b16 %v841, %v837
    %v1262 = vpack.c.b16 %v846, %v842
    %v1263 = vpack.c.b16 %v847, %v843
    %v1264 = vpack.c.b16 %v848, %v844
    %v1265 = vpack.c.b16 %v849, %v845
    %v1266 = vpack.c.b16 %v854, %v850
    %v1267 = vpack.c.b16 %v855, %v851
    %v1268 = vpack.c.b16 %v856, %v852
    %v1269 = vpack.c.b16 %v857, %v853
    %v1270 = vpack.c.b16 %v862, %v858
    %v1271 = vpack.c.b16 %v863, %v859
    %v1272 = vpack.c.b16 %v864, %v860
    %v1273 = vpack.c.b16 %v865, %v861
    %v1274 = vpack.c.b16 %v870, %v866
    %v1275 = vpack.c.b16 %v871, %v867
    %v1276 = vpack.c.b16 %v872, %v868
    %v1277 = vpack.c.b16 %v873, %v869
    %v1278 = vpack.c.b16 %v878, %v874
    %v1279 = vpack.c.b16 %v879, %v875
    %v1280 = vpack.c.b16 %v880, %v876
    %v1281 = vpack.c.b16 %v881, %v877
    %v1282 = vpack.c.b16 %v886, %v882
    %v1283 = vpack.c.b16 %v887, %v883
    %v1284 = vpack.c.b16 %v888, %v884
    %v1285 = vpack.c.b16 %v889, %v885
    %v1286 = vpack.c.b16 %v894, %v890
    %v1287 = vpack.c.b16 %v895, %v891
    %v1288 = vpack.c.b16 %v896, %v892
    %v1289 = vpack.c.b16 %v897, %v893
    %v1290 = vpack.c.b16 %v902, %v898
    %v1291 = vpack.c.b16 %v903, %v899
    %v1292 = vpack.c.b16 %v904, %v900
    %v1293 = vpack.c.b16 %v905, %v901
    %v1294 = vpack.c.b16 %v910, %v906
    %v1295 = vpack.c.b16 %v911, %v907
    %v1296 = vpack.c.b16 %v912, %v908
    %v1297 = vpack.c.b16 %v913, %v909
    %v1298 = vpack.c.b16 %v918, %v914
    %v1299 = vpack.c.b16 %v919, %v915
    %v1300 = vpack.c.b16 %v920, %v916
    %v1301 = vpack.c.b16 %v921, %v917
    %v1302 = vpack.c.b16 %v926, %v922
    %v1303 = vpack.c.b16 %v927, %v923
    %v1304 = vpack.c.b16 %v928, %v924
    %v1305 = vpack.c.b16 %v929, %v925
    %v1306 = vpack.c.b16 %v934, %v930
    %v1307 = vpack.c.b16 %v935, %v931
    %v1308 = vpack.c.b16 %v936, %v932
    %v1309 = vpack.c.b16 %v937, %v933
    %v1310 = vpack.c.b16 %v942, %v938
    %v1311 = vpack.c.b16 %v943, %v939
    %v1312 = vpack.c.b16 %v944, %v940
    %v1313 = vpack.c.b16 %v945, %v941
    %v1314 = vpack.c.b16 %v950, %v946
    %v1315 = vpack.c.b16 %v951, %v947
    %v1316 = vpack.c.b16 %v952, %v948
    %v1317 = vpack.c.b16 %v953, %v949
    %v1318 = vpack.c.b16 %v958, %v954
    %v1319 = vpack.c.b16 %v959, %v955
    %v1320 = vpack.c.b16 %v960, %v956
    %v1321 = vpack.c.b16 %v961, %v957
    %v1322 = vpack.c.b16 %v966, %v962
    %v1323 = vpack.c.b16 %v967, %v963
    %v1324 = vpack.c.b16 %v968, %v964
    %v1325 = vpack.c.b16 %v969, %v965
    %v1326 = vpack.c.b16 %v974, %v970
    %v1327 = vpack.c.b16 %v975, %v971
    %v1328 = vpack.c.b16 %v976, %v972
    %v1329 = vpack.c.b16 %v977, %v973
    %v1330 = vpack.c.b16 %v982, %v978
    %v1331 = vpack.c.b16 %v983, %v979
    %v1332 = vpack.c.b16 %v984, %v980
    %v1333 = vpack.c.b16 %v985, %v981
    %v1334 = vpack.c.b16 %v990, %v986
    %v1335 = vpack.c.b16 %v991, %v987
    %v1336 = vpack.c.b16 %v992, %v988
    %v1337 = vpack.c.b16 %v993, %v989
    %v1338 = vpack.c.b16 %v998, %v994
    %v1339 = vpack.c.b16 %v999, %v995
    %v1340 = vpack.c.b16 %v1000, %v996
    %v1341 = vpack.c.b16 %v1001, %v997
    %v1342 = vpack.c.b16 %v1006, %v1002
    %v1343 = vpack.c.b16 %v1007, %v1003
    %v1344 = vpack.c.b16 %v1008, %v1004
    %v1345 = vpack.c.b16 %v1009, %v1005
    %v1346 = vpack.c.b16 %v1014, %v1010
    %v1347 = vpack.c.b16 %v1015, %v1011
    %v1348 = vpack.c.b16 %v1016, %v1012
    %v1349 = vpack.c.b16 %v1017, %v1013
    %v1350 = vpack.c.b16 %v1022, %v1018
    %v1351 = vpack.c.b16 %v1023, %v1019
    %v1352 = vpack.c.b16 %v1024, %v1020
    %v1353 = vpack.c.b16 %v1025, %v1021
    %v1354 = vpack.c.b16 %v1030, %v1026
    %v1355 = vpack.c.b16 %v1031, %v1027
    %v1356 = vpack.c.b16 %v1032, %v1028
    %v1357 = vpack.c.b16 %v1033, %v1029
    %v1358 = vpack.c.b16 %v1038, %v1034
    %v1359 = vpack.c.b16 %v1039, %v1035
    %v1360 = vpack.c.b16 %v1040, %v1036
    %v1361 = vpack.c.b16 %v1041, %v1037
    %v1362 = vpack.c.b16 %v1046, %v1042
    %v1363 = vpack.c.b16 %v1047, %v1043
    %v1364 = vpack.c.b16 %v1048, %v1044
    %v1365 = vpack.c.b16 %v1049, %v1045
    %v1366 = vpack.c.b16 %v1054, %v1050
    %v1367 = vpack.c.b16 %v1055, %v1051
    %v1368 = vpack.c.b16 %v1056, %v1052
    %v1369 = vpack.c.b16 %v1057, %v1053
    %v1370 = vpack.c.b16 %v1062, %v1058
    %v1371 = vpack.c.b16 %v1063, %v1059
    %v1372 = vpack.c.b16 %v1064, %v1060
    %v1373 = vpack.c.b16 %v1065, %v1061
    %v1374 = vpack.c.b16 %v1070, %v1066
    %v1375 = vpack.c.b16 %v1071, %v1067
    %v1376 = vpack.c.b16 %v1072, %v1068
    %v1377 = vpack.c.b16 %v1073, %v1069
    %v1378 = vpack.c.b16 %v1078, %v1074
    %v1379 = vpack.c.b16 %v1079, %v1075
    %v1380 = vpack.c.b16 %v1080, %v1076
    %v1381 = vpack.c.b16 %v1081, %v1077
    %v1382 = vpack.c.b16 %v1086, %v1082
    %v1383 = vpack.c.b16 %v1087, %v1083
    %v1384 = vpack.c.b16 %v1088, %v1084
    %v1385 = vpack.c.b16 %v1089, %v1085
    %v1386 = vpack.c.b16 %v1094, %v1090
    %v1387 = vpack.c.b16 %v1095, %v1091
    %v1388 = vpack.c.b16 %v1096, %v1092
    %v1389 = vpack.c.b16 %v1097, %v1093
    %v1390 = vpack.c.b16 %v1102, %v1098
    %v1391 = vpack.c.b16 %v1103, %v1099
    %v1392 = vpack.c.b16 %v1104, %v1100
    %v1393 = vpack.c.b16 %v1105, %v1101
    %v1394 = vpack.c.b16 %v1110, %v1106
    %v1395 = vpack.c.b16 %v1111, %v1107
    %v1396 = vpack.c.b16 %v1112, %v1108
    %v1397 = vpack.c.b16 %v1113, %v1109
    %v1398 = vpack.c.b16 %v1118, %v1114
    %v1399 = vpack.c.b16 %v1119, %v1115
    %v1400 = vpack.c.b16 %v1120, %v1116
    %v1401 = vpack.c.b16 %v1121, %v1117
    %v1402 = vpack.c.b16 %v1126, %v1122
    %v1403 = vpack.c.b16 %v1127, %v1123
    %v1404 = vpack.c.b16 %v1128, %v1124
    %v1405 = vpack.c.b16 %v1129, %v1125
    %v1406 = vpack.c.b16 %v1134, %v1130
    %v1407 = vpack.c.b16 %v1135, %v1131
    %v1408 = vpack.c.b16 %v1136, %v1132
    %v1409 = vpack.c.b16 %v1137, %v1133
    %v1410 = vpack.c.b16 %v1142, %v1138
    %v1411 = vpack.c.b16 %v1143, %v1139
    %v1412 = vpack.c.b16 %v1144, %v1140
    %v1413 = vpack.c.b16 %v1145, %v1141
    %v1414 = vpack.c.b16 %v1150, %v1146
    %v1415 = vpack.c.b16 %v1151, %v1147
    %v1416 = vpack.c.b16 %v1152, %v1148
    %v1417 = vpack.c.b16 %v1153, %v1149
    %v1418 = vpack.c.b16 %v1158, %v1154
    %v1419 = vpack.c.b16 %v1159, %v1155
    %v1420 = vpack.c.b16 %v1160, %v1156
    %v1421 = vpack.c.b16 %v1161, %v1157
    %v1422 = vpack.c.b16 %v1166, %v1162
    %v1423 = vpack.c.b16 %v1167, %v1163
    %v1424 = vpack.c.b16 %v1168, %v1164
    %v1425 = vpack.c.b16 %v1169, %v1165
    %1682 = vmatprep.subr.bf16.mxu0 %v1171
    %1683 = vmatpush1.bf16.msra.mxu0 %v1170
    %1684 = vmatprep.subr.bf16.mxu0 %v1175
    %1685 = vmatpush1.bf16.msra.mxu0 %v1174
    %1686 = vmatprep.subr.bf16.mxu0 %v1179
    %1687 = vmatpush1.bf16.msra.mxu0 %v1178
    %1688 = vmatprep.subr.bf16.mxu0 %v1183
    %1689 = vmatpush1.bf16.msra.mxu0 %v1182
    %1690 = vmatprep.subr.bf16.mxu0 %v1187
    %1691 = vmatpush1.bf16.msra.mxu0 %v1186
    %1692 = vmatprep.subr.bf16.mxu0 %v1191
    %1693 = vmatpush1.bf16.msra.mxu0 %v1190
    %1694 = vmatprep.subr.bf16.mxu0 %v1195
    %1695 = vmatpush1.bf16.msra.mxu0 %v1194
    %1696 = vmatprep.subr.bf16.mxu0 %v1199
    %1697 = vmatpush1.bf16.msra.mxu0 %v1198
    %1698 = vmatprep.subr.bf16.mxu0 %v1203
    %1699 = vmatpush1.bf16.msra.mxu0 %v1202
    %1700 = vmatprep.subr.bf16.mxu0 %v1207
    %1701 = vmatpush1.bf16.msra.mxu0 %v1206
    %1702 = vmatprep.subr.bf16.mxu0 %v1211
    %1703 = vmatpush1.bf16.msra.mxu0 %v1210
    %1704 = vmatprep.subr.bf16.mxu0 %v1215
    %1705 = vmatpush1.bf16.msra.mxu0 %v1214
    %1706 = vmatprep.subr.bf16.mxu0 %v1219
    %1707 = vmatpush1.bf16.msra.mxu0 %v1218
    %1708 = vmatprep.subr.bf16.mxu0 %v1223
    %1709 = vmatpush1.bf16.msra.mxu0 %v1222
    %1710 = vmatprep.subr.bf16.mxu0 %v1227
    %1711 = vmatpush1.bf16.msra.mxu0 %v1226
    %1712 = vmatprep.subr.bf16.mxu0 %v1231
    %1713 = vmatpush1.bf16.msra.mxu0 %v1230
    %1714 = vmatprep.mubr.bf16.mxu0 %v117
    %1715 = vmatmul.mubr.bf16.gmra.mrb[0].mxu0 %v116
    %v1716 = vpop.f32.mrb[0].mxu0
    %v1717 = vadd.f32 %v385, %v1716
    %v1718 = vpop.f32.mrb[0].mxu0
    %v1719 = vadd.f32 %v389, %v1718
    %v1720 = vpop.f32.mrb[0].mxu0
    %v1721 = vpop.f32.mrb[0].mxu0
    %1722 = vdwg.mxu0
    %1723 = vmatprep.subr.bf16.mxu0 %v1235
    %1724 = vmatpush1.bf16.msra.mxu0 %v1234
    %1725 = vmatprep.subr.bf16.mxu0 %v1239
    %1726 = vmatpush1.bf16.msra.mxu0 %v1238
    %1727 = vmatprep.subr.bf16.mxu0 %v1243
    %1728 = vmatpush1.bf16.msra.mxu0 %v1242
    %1729 = vmatprep.subr.bf16.mxu0 %v1247
    %1730 = vmatpush1.bf16.msra.mxu0 %v1246
    %1731 = vmatprep.subr.bf16.mxu0 %v1251
    %1732 = vmatpush1.bf16.msra.mxu0 %v1250
    %1733 = vmatprep.subr.bf16.mxu0 %v1255
    %1734 = vmatpush1.bf16.msra.mxu0 %v1254
    %1735 = vmatprep.subr.bf16.mxu0 %v1259
    %1736 = vmatpush1.bf16.msra.mxu0 %v1258
    %1737 = vmatprep.subr.bf16.mxu0 %v1263
    %1738 = vmatpush1.bf16.msra.mxu0 %v1262
    %1739 = vmatprep.subr.bf16.mxu0 %v1267
    %1740 = vmatpush1.bf16.msra.mxu0 %v1266
    %1741 = vmatprep.subr.bf16.mxu0 %v1271
    %1742 = vmatpush1.bf16.msra.mxu0 %v1270
    %1743 = vmatprep.subr.bf16.mxu0 %v1275
    %1744 = vmatpush1.bf16.msra.mxu0 %v1274
    %1745 = vmatprep.subr.bf16.mxu0 %v1279
    %1746 = vmatpush1.bf16.msra.mxu0 %v1278
    %1747 = vmatprep.subr.bf16.mxu0 %v1283
    %1748 = vmatpush1.bf16.msra.mxu0 %v1282
    %1749 = vmatprep.subr.bf16.mxu0 %v1287
    %1750 = vmatpush1.bf16.msra.mxu0 %v1286
    %1751 = vmatprep.subr.bf16.mxu0 %v1291
    %1752 = vmatpush1.bf16.msra.mxu0 %v1290
    %1753 = vmatprep.subr.bf16.mxu0 %v1295
    %1754 = vmatpush1.bf16.msra.mxu0 %v1294
    %1755 = vmatprep.mubr.bf16.mxu0 %v119
    %1756 = vmatmul.mubr.bf16.gmra.mrb[0].mxu0 %v118
    %v1757 = vpop.f32.mrb[0].mxu0
    %v1758 = vadd.f32 %v1717, %v1757
    %v1759 = vpop.f32.mrb[0].mxu0
    %v1760 = vadd.f32 %v1719, %v1759
    %v1761 = vpop.f32.mrb[0].mxu0
    %v1762 = vpop.f32.mrb[0].mxu0
    %1763 = vdwg.mxu0
    %1764 = vmatprep.subr.bf16.mxu0 %v1299
    %1765 = vmatpush1.bf16.msra.mxu0 %v1298
    %1766 = vmatprep.subr.bf16.mxu0 %v1303
    %1767 = vmatpush1.bf16.msra.mxu0 %v1302
    %1768 = vmatprep.subr.bf16.mxu0 %v1307
    %1769 = vmatpush1.bf16.msra.mxu0 %v1306
    %1770 = vmatprep.subr.bf16.mxu0 %v1311
    %1771 = vmatpush1.bf16.msra.mxu0 %v1310
    %1772 = vmatprep.subr.bf16.mxu0 %v1315
    %1773 = vmatpush1.bf16.msra.mxu0 %v1314
    %1774 = vmatprep.subr.bf16.mxu0 %v1319
    %1775 = vmatpush1.bf16.msra.mxu0 %v1318
    %1776 = vmatprep.subr.bf16.mxu0 %v1323
    %1777 = vmatpush1.bf16.msra.mxu0 %v1322
    %1778 = vmatprep.subr.bf16.mxu0 %v1327
    %1779 = vmatpush1.bf16.msra.mxu0 %v1326
    %1780 = vmatprep.subr.bf16.mxu0 %v1331
    %1781 = vmatpush1.bf16.msra.mxu0 %v1330
    %1782 = vmatprep.subr.bf16.mxu0 %v1335
    %1783 = vmatpush1.bf16.msra.mxu0 %v1334
    %1784 = vmatprep.subr.bf16.mxu0 %v1339
    %1785 = vmatpush1.bf16.msra.mxu0 %v1338
    %1786 = vmatprep.subr.bf16.mxu0 %v1343
    %1787 = vmatpush1.bf16.msra.mxu0 %v1342
    %1788 = vmatprep.subr.bf16.mxu0 %v1347
    %1789 = vmatpush1.bf16.msra.mxu0 %v1346
    %1790 = vmatprep.subr.bf16.mxu0 %v1351
    %1791 = vmatpush1.bf16.msra.mxu0 %v1350
    %1792 = vmatprep.subr.bf16.mxu0 %v1355
    %1793 = vmatpush1.bf16.msra.mxu0 %v1354
    %1794 = vmatprep.subr.bf16.mxu0 %v1359
    %1795 = vmatpush1.bf16.msra.mxu0 %v1358
    %1796 = vmatprep.mubr.bf16.mxu0 %v121
    %1797 = vmatmul.mubr.bf16.gmra.mrb[0].mxu0 %v120
    %v1798 = vpop.f32.mrb[0].mxu0
    %v1799 = vadd.f32 %v1758, %v1798
    %v1800 = vpop.f32.mrb[0].mxu0
    %v1801 = vadd.f32 %v1760, %v1800
    %v1802 = vpop.f32.mrb[0].mxu0
    %v1803 = vpop.f32.mrb[0].mxu0
    %1804 = vdwg.mxu0
    %1805 = vmatprep.subr.bf16.mxu0 %v1363
    %1806 = vmatpush1.bf16.msra.mxu0 %v1362
    %1807 = vmatprep.subr.bf16.mxu0 %v1367
    %1808 = vmatpush1.bf16.msra.mxu0 %v1366
    %1809 = vmatprep.subr.bf16.mxu0 %v1371
    %1810 = vmatpush1.bf16.msra.mxu0 %v1370
    %1811 = vmatprep.subr.bf16.mxu0 %v1375
    %1812 = vmatpush1.bf16.msra.mxu0 %v1374
    %1813 = vmatprep.subr.bf16.mxu0 %v1379
    %1814 = vmatpush1.bf16.msra.mxu0 %v1378
    %1815 = vmatprep.subr.bf16.mxu0 %v1383
    %1816 = vmatpush1.bf16.msra.mxu0 %v1382
    %1817 = vmatprep.subr.bf16.mxu0 %v1387
    %1818 = vmatpush1.bf16.msra.mxu0 %v1386
    %1819 = vmatprep.subr.bf16.mxu0 %v1391
    %1820 = vmatpush1.bf16.msra.mxu0 %v1390
    %1821 = vmatprep.subr.bf16.mxu0 %v1395
    %1822 = vmatpush1.bf16.msra.mxu0 %v1394
    %1823 = vmatprep.subr.bf16.mxu0 %v1399
    %1824 = vmatpush1.bf16.msra.mxu0 %v1398
    %1825 = vmatprep.subr.bf16.mxu0 %v1403
    %1826 = vmatpush1.bf16.msra.mxu0 %v1402
    %1827 = vmatprep.subr.bf16.mxu0 %v1407
    %1828 = vmatpush1.bf16.msra.mxu0 %v1406
    %1829 = vmatprep.subr.bf16.mxu0 %v1411
    %1830 = vmatpush1.bf16.msra.mxu0 %v1410
    %1831 = vmatprep.subr.bf16.mxu0 %v1415
    %1832 = vmatpush1.bf16.msra.mxu0 %v1414
    %1833 = vmatprep.subr.bf16.mxu0 %v1419
    %1834 = vmatpush1.bf16.msra.mxu0 %v1418
    %1835 = vmatprep.subr.bf16.mxu0 %v1423
    %1836 = vmatpush1.bf16.msra.mxu0 %v1422
    %1837 = vmatprep.mubr.bf16.mxu0 %v123
    %1838 = vmatmul.mubr.bf16.gmra.mrb[0].mxu0 %v122
    %v1839 = vpop.f32.mrb[0].mxu0
    %v1840 = vadd.f32 %v1799, %v1839
    %v1841 = vpop.f32.mrb[0].mxu0
    %v1842 = vadd.f32 %v1801, %v1841
    %v1843 = vpop.f32.mrb[0].mxu0
    %v1844 = vpop.f32.mrb[0].mxu0
    %1845 = vdwg.mxu0
    %1846 = vmatprep.subr.bf16.mxu0 %v1173
    %1847 = vmatpush1.bf16.msra.mxu0 %v1172
    %1848 = vmatprep.subr.bf16.mxu0 %v1177
    %1849 = vmatpush1.bf16.msra.mxu0 %v1176
    %1850 = vmatprep.subr.bf16.mxu0 %v1181
    %1851 = vmatpush1.bf16.msra.mxu0 %v1180
    %1852 = vmatprep.subr.bf16.mxu0 %v1185
    %1853 = vmatpush1.bf16.msra.mxu0 %v1184
    %1854 = vmatprep.subr.bf16.mxu0 %v1189
    %1855 = vmatpush1.bf16.msra.mxu0 %v1188
    %1856 = vmatprep.subr.bf16.mxu0 %v1193
    %1857 = vmatpush1.bf16.msra.mxu0 %v1192
    %1858 = vmatprep.subr.bf16.mxu0 %v1197
    %1859 = vmatpush1.bf16.msra.mxu0 %v1196
    %1860 = vmatprep.subr.bf16.mxu0 %v1201
    %1861 = vmatpush1.bf16.msra.mxu0 %v1200
    %1862 = vmatprep.subr.bf16.mxu0 %v1205
    %1863 = vmatpush1.bf16.msra.mxu0 %v1204
    %1864 = vmatprep.subr.bf16.mxu0 %v1209
    %1865 = vmatpush1.bf16.msra.mxu0 %v1208
    %1866 = vmatprep.subr.bf16.mxu0 %v1213
    %1867 = vmatpush1.bf16.msra.mxu0 %v1212
    %1868 = vmatprep.subr.bf16.mxu0 %v1217
    %1869 = vmatpush1.bf16.msra.mxu0 %v1216
    %1870 = vmatprep.subr.bf16.mxu0 %v1221
    %1871 = vmatpush1.bf16.msra.mxu0 %v1220
    %1872 = vmatprep.subr.bf16.mxu0 %v1225
    %1873 = vmatpush1.bf16.msra.mxu0 %v1224
    %1874 = vmatprep.subr.bf16.mxu0 %v1229
    %1875 = vmatpush1.bf16.msra.mxu0 %v1228
    %1876 = vmatprep.subr.bf16.mxu0 %v1233
    %1877 = vmatpush1.bf16.msra.mxu0 %v1232
    %1878 = vmatprep.mubr.bf16.mxu0 %v117
    %1879 = vmatmul.mubr.bf16.gmra.mrb[0].mxu0 %v116
    %v1880 = vpop.f32.mrb[0].mxu0
    %v1881 = vadd.f32 %v393, %v1880
    %v1882 = vpop.f32.mrb[0].mxu0
    %v1883 = vadd.f32 %v397, %v1882
    %v1884 = vpop.f32.mrb[0].mxu0
    %v1885 = vpop.f32.mrb[0].mxu0
    %1886 = vdwg.mxu0
    %1887 = vmatprep.subr.bf16.mxu0 %v1237
    %1888 = vmatpush1.bf16.msra.mxu0 %v1236
    %1889 = vmatprep.subr.bf16.mxu0 %v1241
    %1890 = vmatpush1.bf16.msra.mxu0 %v1240
    %1891 = vmatprep.subr.bf16.mxu0 %v1245
    %1892 = vmatpush1.bf16.msra.mxu0 %v1244
    %1893 = vmatprep.subr.bf16.mxu0 %v1249
    %1894 = vmatpush1.bf16.msra.mxu0 %v1248
    %1895 = vmatprep.subr.bf16.mxu0 %v1253
    %1896 = vmatpush1.bf16.msra.mxu0 %v1252
    %1897 = vmatprep.subr.bf16.mxu0 %v1257
    %1898 = vmatpush1.bf16.msra.mxu0 %v1256
    %1899 = vmatprep.subr.bf16.mxu0 %v1261
    %1900 = vmatpush1.bf16.msra.mxu0 %v1260
    %1901 = vmatprep.subr.bf16.mxu0 %v1265
    %1902 = vmatpush1.bf16.msra.mxu0 %v1264
    %1903 = vmatprep.subr.bf16.mxu0 %v1269
    %1904 = vmatpush1.bf16.msra.mxu0 %v1268
    %1905 = vmatprep.subr.bf16.mxu0 %v1273
    %1906 = vmatpush1.bf16.msra.mxu0 %v1272
    %1907 = vmatprep.subr.bf16.mxu0 %v1277
    %1908 = vmatpush1.bf16.msra.mxu0 %v1276
    %1909 = vmatprep.subr.bf16.mxu0 %v1281
    %1910 = vmatpush1.bf16.msra.mxu0 %v1280
    %1911 = vmatprep.subr.bf16.mxu0 %v1285
    %1912 = vmatpush1.bf16.msra.mxu0 %v1284
    %1913 = vmatprep.subr.bf16.mxu0 %v1289
    %1914 = vmatpush1.bf16.msra.mxu0 %v1288
    %1915 = vmatprep.subr.bf16.mxu0 %v1293
    %1916 = vmatpush1.bf16.msra.mxu0 %v1292
    %1917 = vmatprep.subr.bf16.mxu0 %v1297
    %1918 = vmatpush1.bf16.msra.mxu0 %v1296
    %1919 = vmatprep.mubr.bf16.mxu0 %v119
    %1920 = vmatmul.mubr.bf16.gmra.mrb[0].mxu0 %v118
    %v1921 = vpop.f32.mrb[0].mxu0
    %v1922 = vadd.f32 %v1881, %v1921
    %v1923 = vpop.f32.mrb[0].mxu0
    %v1924 = vadd.f32 %v1883, %v1923
    %v1925 = vpop.f32.mrb[0].mxu0
    %v1926 = vpop.f32.mrb[0].mxu0
    %1927 = vdwg.mxu0
    %1928 = vmatprep.subr.bf16.mxu0 %v1301
    %1929 = vmatpush1.bf16.msra.mxu0 %v1300
    %1930 = vmatprep.subr.bf16.mxu0 %v1305
    %1931 = vmatpush1.bf16.msra.mxu0 %v1304
    %1932 = vmatprep.subr.bf16.mxu0 %v1309
    %1933 = vmatpush1.bf16.msra.mxu0 %v1308
    %1934 = vmatprep.subr.bf16.mxu0 %v1313
    %1935 = vmatpush1.bf16.msra.mxu0 %v1312
    %1936 = vmatprep.subr.bf16.mxu0 %v1317
    %1937 = vmatpush1.bf16.msra.mxu0 %v1316
    %1938 = vmatprep.subr.bf16.mxu0 %v1321
    %1939 = vmatpush1.bf16.msra.mxu0 %v1320
    %1940 = vmatprep.subr.bf16.mxu0 %v1325
    %1941 = vmatpush1.bf16.msra.mxu0 %v1324
    %1942 = vmatprep.subr.bf16.mxu0 %v1329
    %1943 = vmatpush1.bf16.msra.mxu0 %v1328
    %1944 = vmatprep.subr.bf16.mxu0 %v1333
    %1945 = vmatpush1.bf16.msra.mxu0 %v1332
    %1946 = vmatprep.subr.bf16.mxu0 %v1337
    %1947 = vmatpush1.bf16.msra.mxu0 %v1336
    %1948 = vmatprep.subr.bf16.mxu0 %v1341
    %1949 = vmatpush1.bf16.msra.mxu0 %v1340
    %1950 = vmatprep.subr.bf16.mxu0 %v1345
    %1951 = vmatpush1.bf16.msra.mxu0 %v1344
    %1952 = vmatprep.subr.bf16.mxu0 %v1349
    %1953 = vmatpush1.bf16.msra.mxu0 %v1348
    %1954 = vmatprep.subr.bf16.mxu0 %v1353
    %1955 = vmatpush1.bf16.msra.mxu0 %v1352
    %1956 = vmatprep.subr.bf16.mxu0 %v1357
    %1957 = vmatpush1.bf16.msra.mxu0 %v1356
    %1958 = vmatprep.subr.bf16.mxu0 %v1361
    %1959 = vmatpush1.bf16.msra.mxu0 %v1360
    %1960 = vmatprep.mubr.bf16.mxu0 %v121
    %1961 = vmatmul.mubr.bf16.gmra.mrb[0].mxu0 %v120
    %v1962 = vpop.f32.mrb[0].mxu0
    %v1963 = vadd.f32 %v1922, %v1962
    %v1964 = vpop.f32.mrb[0].mxu0
    %v1965 = vadd.f32 %v1924, %v1964
    %v1966 = vpop.f32.mrb[0].mxu0
    %v1967 = vpop.f32.mrb[0].mxu0
    %1968 = vdwg.mxu0
    %1969 = vmatprep.subr.bf16.mxu0 %v1365
    %1970 = vmatpush1.bf16.msra.mxu0 %v1364
    %1971 = vmatprep.subr.bf16.mxu0 %v1369
    %1972 = vmatpush1.bf16.msra.mxu0 %v1368
    %1973 = vmatprep.subr.bf16.mxu0 %v1373
    %1974 = vmatpush1.bf16.msra.mxu0 %v1372
    %1975 = vmatprep.subr.bf16.mxu0 %v1377
    %1976 = vmatpush1.bf16.msra.mxu0 %v1376
    %1977 = vmatprep.subr.bf16.mxu0 %v1381
    %1978 = vmatpush1.bf16.msra.mxu0 %v1380
    %1979 = vmatprep.subr.bf16.mxu0 %v1385
    %1980 = vmatpush1.bf16.msra.mxu0 %v1384
    %1981 = vmatprep.subr.bf16.mxu0 %v1389
    %1982 = vmatpush1.bf16.msra.mxu0 %v1388
    %1983 = vmatprep.subr.bf16.mxu0 %v1393
    %1984 = vmatpush1.bf16.msra.mxu0 %v1392
    %1985 = vmatprep.subr.bf16.mxu0 %v1397
    %1986 = vmatpush1.bf16.msra.mxu0 %v1396
    %1987 = vmatprep.subr.bf16.mxu0 %v1401
    %1988 = vmatpush1.bf16.msra.mxu0 %v1400
    %1989 = vmatprep.subr.bf16.mxu0 %v1405
    %1990 = vmatpush1.bf16.msra.mxu0 %v1404
    %1991 = vmatprep.subr.bf16.mxu0 %v1409
    %1992 = vmatpush1.bf16.msra.mxu0 %v1408
    %1993 = vmatprep.subr.bf16.mxu0 %v1413
    %1994 = vmatpush1.bf16.msra.mxu0 %v1412
    %1995 = vmatprep.subr.bf16.mxu0 %v1417
    %1996 = vmatpush1.bf16.msra.mxu0 %v1416
    %1997 = vmatprep.subr.bf16.mxu0 %v1421
    %1998 = vmatpush1.bf16.msra.mxu0 %v1420
    %1999 = vmatprep.subr.bf16.mxu0 %v1425
    %2000 = vmatpush1.bf16.msra.mxu0 %v1424
    %2001 = vmatprep.mubr.bf16.mxu0 %v123
    %2002 = vmatmul.mubr.bf16.gmra.mrb[0].mxu0 %v122
    %v2003 = vpop.f32.mrb[0].mxu0
    %v2004 = vadd.f32 %v1963, %v2003
    %v2005 = vpop.f32.mrb[0].mxu0
    %v2006 = vadd.f32 %v1965, %v2005
    %v2007 = vpop.f32.mrb[0].mxu0
    %v2008 = vpop.f32.mrb[0].mxu0
    %2009 = vdwg.mxu0
    %v2010 = vmax.f32 %v1840, 0.0
    %v2011 = vmax.f32 %v1842, 0.0
    %v2012 = vmax.f32 %v2004, 0.0
    %v2013 = vmax.f32 %v2006, 0.0
    %v2014 = vpack.c.bf16 %v2010, %v2010
    %v2015 = vpack.c.bf16 %v2011, %v2011
    %v2016 = vpack.c.bf16 %v2012, %v2012
    %v2017 = vpack.c.bf16 %v2013, %v2013
    %v2018 = vld [vmem:[#allocation7] sm:$0xff]
    %v2019 = vld [vmem:[#allocation7 + $0x8] sm:$0xff]
    %v2020 = vld [vmem:[#allocation7 + $0x10] sm:$0xff]
    %v2021 = vld [vmem:[#allocation7 + $0x18] sm:$0xff]
    %v2022 = vld [vmem:[#allocation7 + $0x20] sm:$0xff]
    %v2023 = vld [vmem:[#allocation7 + $0x28] sm:$0xff]
    %v2024 = vld [vmem:[#allocation7 + $0x30] sm:$0xff]
    %v2025 = vld [vmem:[#allocation7 + $0x38] sm:$0xff]
    %v2026 = vld [vmem:[#allocation7 + $0x40] sm:$0xff]
    %v2027 = vld [vmem:[#allocation7 + $0x48] sm:$0xff]
    %v2028 = vld [vmem:[#allocation7 + $0x50] sm:$0xff]
    %v2029 = vld [vmem:[#allocation7 + $0x58] sm:$0xff]
    %v2030 = vld [vmem:[#allocation7 + $0x60] sm:$0xff]
    %v2031 = vld [vmem:[#allocation7 + $0x68] sm:$0xff]
    %v2032 = vld [vmem:[#allocation7 + $0x70] sm:$0xff]
    %v2033 = vld [vmem:[#allocation7 + $0x78] sm:$0xff]
    %v2034 = vld [vmem:[#allocation7 + $0x80] sm:$0xff]
    %v2035 = vld [vmem:[#allocation7 + $0x88] sm:$0xff]
    %v2036 = vld [vmem:[#allocation7 + $0x90] sm:$0xff]
    %v2037 = vld [vmem:[#allocation7 + $0x98] sm:$0xff]
    %v2038 = vld [vmem:[#allocation7 + $0xa0] sm:$0xff]
    %v2039 = vld [vmem:[#allocation7 + $0xa8] sm:$0xff]
    %v2040 = vld [vmem:[#allocation7 + $0xb0] sm:$0xff]
    %v2041 = vld [vmem:[#allocation7 + $0xb8] sm:$0xff]
    %v2042 = vld [vmem:[#allocation7 + $0xc0] sm:$0xff]
    %v2043 = vld [vmem:[#allocation7 + $0xc8] sm:$0xff]
    %v2044 = vld [vmem:[#allocation7 + $0xd0] sm:$0xff]
    %v2045 = vld [vmem:[#allocation7 + $0xd8] sm:$0xff]
    %v2046 = vld [vmem:[#allocation7 + $0xe0] sm:$0xff]
    %v2047 = vld [vmem:[#allocation7 + $0xe8] sm:$0xff]
    %v2048 = vld [vmem:[#allocation7 + $0xf0] sm:$0xff]
    %v2049 = vld [vmem:[#allocation7 + $0xf8] sm:$0xff]
    %v2050 = vld [vmem:[#allocation7 + $0x100] sm:$0xff]
    %v2051 = vld [vmem:[#allocation7 + $0x108] sm:$0xff]
    %v2052 = vld [vmem:[#allocation7 + $0x110] sm:$0xff]
    %v2053 = vld [vmem:[#allocation7 + $0x118] sm:$0xff]
    %v2054 = vld [vmem:[#allocation7 + $0x120] sm:$0xff]
    %v2055 = vld [vmem:[#allocation7 + $0x128] sm:$0xff]
    %v2056 = vld [vmem:[#allocation7 + $0x130] sm:$0xff]
    %v2057 = vld [vmem:[#allocation7 + $0x138] sm:$0xff]
    %v2058 = vld [vmem:[#allocation7 + $0x140] sm:$0xff]
    %v2059 = vld [vmem:[#allocation7 + $0x148] sm:$0xff]
    %v2060 = vld [vmem:[#allocation7 + $0x150] sm:$0xff]
    %v2061 = vld [vmem:[#allocation7 + $0x158] sm:$0xff]
    %v2062 = vld [vmem:[#allocation7 + $0x160] sm:$0xff]
    %v2063 = vld [vmem:[#allocation7 + $0x168] sm:$0xff]
    %v2064 = vld [vmem:[#allocation7 + $0x170] sm:$0xff]
    %v2065 = vld [vmem:[#allocation7 + $0x178] sm:$0xff]
    %v2066 = vld [vmem:[#allocation7 + $0x180] sm:$0xff]
    %v2067 = vld [vmem:[#allocation7 + $0x188] sm:$0xff]
    %v2068 = vld [vmem:[#allocation7 + $0x190] sm:$0xff]
    %v2069 = vld [vmem:[#allocation7 + $0x198] sm:$0xff]
    %v2070 = vld [vmem:[#allocation7 + $0x1a0] sm:$0xff]
    %v2071 = vld [vmem:[#allocation7 + $0x1a8] sm:$0xff]
    %v2072 = vld [vmem:[#allocation7 + $0x1b0] sm:$0xff]
    %v2073 = vld [vmem:[#allocation7 + $0x1b8] sm:$0xff]
    %v2074 = vld [vmem:[#allocation7 + $0x1c0] sm:$0xff]
    %v2075 = vld [vmem:[#allocation7 + $0x1c8] sm:$0xff]
    %v2076 = vld [vmem:[#allocation7 + $0x1d0] sm:$0xff]
    %v2077 = vld [vmem:[#allocation7 + $0x1d8] sm:$0xff]
    %v2078 = vld [vmem:[#allocation7 + $0x1e0] sm:$0xff]
    %v2079 = vld [vmem:[#allocation7 + $0x1e8] sm:$0xff]
    %v2080 = vld [vmem:[#allocation7 + $0x1f0] sm:$0xff]
    %v2081 = vld [vmem:[#allocation7 + $0x1f8] sm:$0xff]
    %v2082 = vld [vmem:[#allocation7 + $0x200] sm:$0xff]
    %v2083 = vld [vmem:[#allocation7 + $0x208] sm:$0xff]
    %v2084 = vld [vmem:[#allocation7 + $0x210] sm:$0xff]
    %v2085 = vld [vmem:[#allocation7 + $0x218] sm:$0xff]
    %v2086 = vld [vmem:[#allocation7 + $0x220] sm:$0xff]
    %v2087 = vld [vmem:[#allocation7 + $0x228] sm:$0xff]
    %v2088 = vld [vmem:[#allocation7 + $0x230] sm:$0xff]
    %v2089 = vld [vmem:[#allocation7 + $0x238] sm:$0xff]
    %v2090 = vld [vmem:[#allocation7 + $0x240] sm:$0xff]
    %v2091 = vld [vmem:[#allocation7 + $0x248] sm:$0xff]
    %v2092 = vld [vmem:[#allocation7 + $0x250] sm:$0xff]
    %v2093 = vld [vmem:[#allocation7 + $0x258] sm:$0xff]
    %v2094 = vld [vmem:[#allocation7 + $0x260] sm:$0xff]
    %v2095 = vld [vmem:[#allocation7 + $0x268] sm:$0xff]
    %v2096 = vld [vmem:[#allocation7 + $0x270] sm:$0xff]
    %v2097 = vld [vmem:[#allocation7 + $0x278] sm:$0xff]
    %v2098 = vld [vmem:[#allocation7 + $0x280] sm:$0xff]
    %v2099 = vld [vmem:[#allocation7 + $0x288] sm:$0xff]
    %v2100 = vld [vmem:[#allocation7 + $0x290] sm:$0xff]
    %v2101 = vld [vmem:[#allocation7 + $0x298] sm:$0xff]
    %v2102 = vld [vmem:[#allocation7 + $0x2a0] sm:$0xff]
    %v2103 = vld [vmem:[#allocation7 + $0x2a8] sm:$0xff]
    %v2104 = vld [vmem:[#allocation7 + $0x2b0] sm:$0xff]
    %v2105 = vld [vmem:[#allocation7 + $0x2b8] sm:$0xff]
    %v2106 = vld [vmem:[#allocation7 + $0x2c0] sm:$0xff]
    %v2107 = vld [vmem:[#allocation7 + $0x2c8] sm:$0xff]
    %v2108 = vld [vmem:[#allocation7 + $0x2d0] sm:$0xff]
    %v2109 = vld [vmem:[#allocation7 + $0x2d8] sm:$0xff]
    %v2110 = vld [vmem:[#allocation7 + $0x2e0] sm:$0xff]
    %v2111 = vld [vmem:[#allocation7 + $0x2e8] sm:$0xff]
    %v2112 = vld [vmem:[#allocation7 + $0x2f0] sm:$0xff]
    %v2113 = vld [vmem:[#allocation7 + $0x2f8] sm:$0xff]
    %v2114 = vld [vmem:[#allocation7 + $0x300] sm:$0xff]
    %v2115 = vld [vmem:[#allocation7 + $0x308] sm:$0xff]
    %v2116 = vld [vmem:[#allocation7 + $0x310] sm:$0xff]
    %v2117 = vld [vmem:[#allocation7 + $0x318] sm:$0xff]
    %v2118 = vld [vmem:[#allocation7 + $0x320] sm:$0xff]
    %v2119 = vld [vmem:[#allocation7 + $0x328] sm:$0xff]
    %v2120 = vld [vmem:[#allocation7 + $0x330] sm:$0xff]
    %v2121 = vld [vmem:[#allocation7 + $0x338] sm:$0xff]
    %v2122 = vld [vmem:[#allocation7 + $0x340] sm:$0xff]
    %v2123 = vld [vmem:[#allocation7 + $0x348] sm:$0xff]
    %v2124 = vld [vmem:[#allocation7 + $0x350] sm:$0xff]
    %v2125 = vld [vmem:[#allocation7 + $0x358] sm:$0xff]
    %v2126 = vld [vmem:[#allocation7 + $0x360] sm:$0xff]
    %v2127 = vld [vmem:[#allocation7 + $0x368] sm:$0xff]
    %v2128 = vld [vmem:[#allocation7 + $0x370] sm:$0xff]
    %v2129 = vld [vmem:[#allocation7 + $0x378] sm:$0xff]
    %v2130 = vld [vmem:[#allocation7 + $0x380] sm:$0xff]
    %v2131 = vld [vmem:[#allocation7 + $0x388] sm:$0xff]
    %v2132 = vld [vmem:[#allocation7 + $0x390] sm:$0xff]
    %v2133 = vld [vmem:[#allocation7 + $0x398] sm:$0xff]
    %v2134 = vld [vmem:[#allocation7 + $0x3a0] sm:$0xff]
    %v2135 = vld [vmem:[#allocation7 + $0x3a8] sm:$0xff]
    %v2136 = vld [vmem:[#allocation7 + $0x3b0] sm:$0xff]
    %v2137 = vld [vmem:[#allocation7 + $0x3b8] sm:$0xff]
    %v2138 = vld [vmem:[#allocation7 + $0x3c0] sm:$0xff]
    %v2139 = vld [vmem:[#allocation7 + $0x3c8] sm:$0xff]
    %v2140 = vld [vmem:[#allocation7 + $0x3d0] sm:$0xff]
    %v2141 = vld [vmem:[#allocation7 + $0x3d8] sm:$0xff]
    %v2142 = vld [vmem:[#allocation7 + $0x3e0] sm:$0xff]
    %v2143 = vld [vmem:[#allocation7 + $0x3e8] sm:$0xff]
    %v2144 = vld [vmem:[#allocation7 + $0x3f0] sm:$0xff]
    %v2145 = vld [vmem:[#allocation7 + $0x3f8] sm:$0xff]
    %v2146 = vld [vmem:[%s6 + $0x4] sm:$0xf]
    %v2148 = vlaneseq
    %v2149 = vshrl.u32 %v2148, 7
    %v2150 = vsub.s32 0, %v2149
    %v2151 = vrot.slane %v2146, %v2150
    %v2152 = vlaneseq
    %v2153 = vshrl.u32 %v2152, 7
    %v2154 = vsub.s32 1, %v2153
    %v2155 = vrot.slane %v2146, %v2154
    %v2156 = vlaneseq
    %v2157 = vshrl.u32 %v2156, 7
    %v2158 = vsub.s32 2, %v2157
    %v2159 = vrot.slane %v2146, %v2158
    %v2160 = vlaneseq
    %v2161 = vshrl.u32 %v2160, 7
    %v2162 = vsub.s32 3, %v2161
    %v2163 = vrot.slane %v2146, %v2162
    %v2296 = vunpack.c.l.b16 %v2018
    %v2297 = vunpack.c.h.b16 %v2018
    %v2298 = vunpack.c.l.b16 %v2019
    %v2299 = vunpack.c.h.b16 %v2019
    %v2300 = vunpack.c.l.b16 %v2020
    %v2301 = vunpack.c.h.b16 %v2020
    %v2302 = vunpack.c.l.b16 %v2021
    %v2303 = vunpack.c.h.b16 %v2021
    %v2304 = vunpack.c.l.b16 %v2022
    %v2305 = vunpack.c.h.b16 %v2022
    %v2306 = vunpack.c.l.b16 %v2023
    %v2307 = vunpack.c.h.b16 %v2023
    %v2308 = vunpack.c.l.b16 %v2024
    %v2309 = vunpack.c.h.b16 %v2024
    %v2310 = vunpack.c.l.b16 %v2025
    %v2311 = vunpack.c.h.b16 %v2025
    %v2312 = vunpack.c.l.b16 %v2026
    %v2313 = vunpack.c.h.b16 %v2026
    %v2314 = vunpack.c.l.b16 %v2027
    %v2315 = vunpack.c.h.b16 %v2027
    %v2316 = vunpack.c.l.b16 %v2028
    %v2317 = vunpack.c.h.b16 %v2028
    %v2318 = vunpack.c.l.b16 %v2029
    %v2319 = vunpack.c.h.b16 %v2029
    %v2320 = vunpack.c.l.b16 %v2030
    %v2321 = vunpack.c.h.b16 %v2030
    %v2322 = vunpack.c.l.b16 %v2031
    %v2323 = vunpack.c.h.b16 %v2031
    %v2324 = vunpack.c.l.b16 %v2032
    %v2325 = vunpack.c.h.b16 %v2032
    %v2326 = vunpack.c.l.b16 %v2033
    %v2327 = vunpack.c.h.b16 %v2033
    %v2328 = vunpack.c.l.b16 %v2034
    %v2329 = vunpack.c.h.b16 %v2034
    %v2330 = vunpack.c.l.b16 %v2035
    %v2331 = vunpack.c.h.b16 %v2035
    %v2332 = vunpack.c.l.b16 %v2036
    %v2333 = vunpack.c.h.b16 %v2036
    %v2334 = vunpack.c.l.b16 %v2037
    %v2335 = vunpack.c.h.b16 %v2037
    %v2336 = vunpack.c.l.b16 %v2038
    %v2337 = vunpack.c.h.b16 %v2038
    %v2338 = vunpack.c.l.b16 %v2039
    %v2339 = vunpack.c.h.b16 %v2039
    %v2340 = vunpack.c.l.b16 %v2040
    %v2341 = vunpack.c.h.b16 %v2040
    %v2342 = vunpack.c.l.b16 %v2041
    %v2343 = vunpack.c.h.b16 %v2041
    %v2344 = vunpack.c.l.b16 %v2042
    %v2345 = vunpack.c.h.b16 %v2042
    %v2346 = vunpack.c.l.b16 %v2043
    %v2347 = vunpack.c.h.b16 %v2043
    %v2348 = vunpack.c.l.b16 %v2044
    %v2349 = vunpack.c.h.b16 %v2044
    %v2350 = vunpack.c.l.b16 %v2045
    %v2351 = vunpack.c.h.b16 %v2045
    %v2352 = vunpack.c.l.b16 %v2046
    %v2353 = vunpack.c.h.b16 %v2046
    %v2354 = vunpack.c.l.b16 %v2047
    %v2355 = vunpack.c.h.b16 %v2047
    %v2356 = vunpack.c.l.b16 %v2048
    %v2357 = vunpack.c.h.b16 %v2048
    %v2358 = vunpack.c.l.b16 %v2049
    %v2359 = vunpack.c.h.b16 %v2049
    %v2360 = vunpack.c.l.b16 %v2050
    %v2361 = vunpack.c.h.b16 %v2050
    %v2362 = vunpack.c.l.b16 %v2051
    %v2363 = vunpack.c.h.b16 %v2051
    %v2364 = vunpack.c.l.b16 %v2052
    %v2365 = vunpack.c.h.b16 %v2052
    %v2366 = vunpack.c.l.b16 %v2053
    %v2367 = vunpack.c.h.b16 %v2053
    %v2368 = vunpack.c.l.b16 %v2054
    %v2369 = vunpack.c.h.b16 %v2054
    %v2370 = vunpack.c.l.b16 %v2055
    %v2371 = vunpack.c.h.b16 %v2055
    %v2372 = vunpack.c.l.b16 %v2056
    %v2373 = vunpack.c.h.b16 %v2056
    %v2374 = vunpack.c.l.b16 %v2057
    %v2375 = vunpack.c.h.b16 %v2057
    %v2376 = vunpack.c.l.b16 %v2058
    %v2377 = vunpack.c.h.b16 %v2058
    %v2378 = vunpack.c.l.b16 %v2059
    %v2379 = vunpack.c.h.b16 %v2059
    %v2380 = vunpack.c.l.b16 %v2060
    %v2381 = vunpack.c.h.b16 %v2060
    %v2382 = vunpack.c.l.b16 %v2061
    %v2383 = vunpack.c.h.b16 %v2061
    %v2384 = vunpack.c.l.b16 %v2062
    %v2385 = vunpack.c.h.b16 %v2062
    %v2386 = vunpack.c.l.b16 %v2063
    %v2387 = vunpack.c.h.b16 %v2063
    %v2388 = vunpack.c.l.b16 %v2064
    %v2389 = vunpack.c.h.b16 %v2064
    %v2390 = vunpack.c.l.b16 %v2065
    %v2391 = vunpack.c.h.b16 %v2065
    %v2392 = vunpack.c.l.b16 %v2066
    %v2393 = vunpack.c.h.b16 %v2066
    %v2394 = vunpack.c.l.b16 %v2067
    %v2395 = vunpack.c.h.b16 %v2067
    %v2396 = vunpack.c.l.b16 %v2068
    %v2397 = vunpack.c.h.b16 %v2068
    %v2398 = vunpack.c.l.b16 %v2069
    %v2399 = vunpack.c.h.b16 %v2069
    %v2400 = vunpack.c.l.b16 %v2070
    %v2401 = vunpack.c.h.b16 %v2070
    %v2402 = vunpack.c.l.b16 %v2071
    %v2403 = vunpack.c.h.b16 %v2071
    %v2404 = vunpack.c.l.b16 %v2072
    %v2405 = vunpack.c.h.b16 %v2072
    %v2406 = vunpack.c.l.b16 %v2073
    %v2407 = vunpack.c.h.b16 %v2073
    %v2408 = vunpack.c.l.b16 %v2074
    %v2409 = vunpack.c.h.b16 %v2074
    %v2410 = vunpack.c.l.b16 %v2075
    %v2411 = vunpack.c.h.b16 %v2075
    %v2412 = vunpack.c.l.b16 %v2076
    %v2413 = vunpack.c.h.b16 %v2076
    %v2414 = vunpack.c.l.b16 %v2077
    %v2415 = vunpack.c.h.b16 %v2077
    %v2416 = vunpack.c.l.b16 %v2078
    %v2417 = vunpack.c.h.b16 %v2078
    %v2418 = vunpack.c.l.b16 %v2079
    %v2419 = vunpack.c.h.b16 %v2079
    %v2420 = vunpack.c.l.b16 %v2080
    %v2421 = vunpack.c.h.b16 %v2080
    %v2422 = vunpack.c.l.b16 %v2081
    %v2423 = vunpack.c.h.b16 %v2081
    %v2424 = vunpack.c.l.b16 %v2082
    %v2425 = vunpack.c.h.b16 %v2082
    %v2426 = vunpack.c.l.b16 %v2083
    %v2427 = vunpack.c.h.b16 %v2083
    %v2428 = vunpack.c.l.b16 %v2084
    %v2429 = vunpack.c.h.b16 %v2084
    %v2430 = vunpack.c.l.b16 %v2085
    %v2431 = vunpack.c.h.b16 %v2085
    %v2432 = vunpack.c.l.b16 %v2086
    %v2433 = vunpack.c.h.b16 %v2086
    %v2434 = vunpack.c.l.b16 %v2087
    %v2435 = vunpack.c.h.b16 %v2087
    %v2436 = vunpack.c.l.b16 %v2088
    %v2437 = vunpack.c.h.b16 %v2088
    %v2438 = vunpack.c.l.b16 %v2089
    %v2439 = vunpack.c.h.b16 %v2089
    %v2440 = vunpack.c.l.b16 %v2090
    %v2441 = vunpack.c.h.b16 %v2090
    %v2442 = vunpack.c.l.b16 %v2091
    %v2443 = vunpack.c.h.b16 %v2091
    %v2444 = vunpack.c.l.b16 %v2092
    %v2445 = vunpack.c.h.b16 %v2092
    %v2446 = vunpack.c.l.b16 %v2093
    %v2447 = vunpack.c.h.b16 %v2093
    %v2448 = vunpack.c.l.b16 %v2094
    %v2449 = vunpack.c.h.b16 %v2094
    %v2450 = vunpack.c.l.b16 %v2095
    %v2451 = vunpack.c.h.b16 %v2095
    %v2452 = vunpack.c.l.b16 %v2096
    %v2453 = vunpack.c.h.b16 %v2096
    %v2454 = vunpack.c.l.b16 %v2097
    %v2455 = vunpack.c.h.b16 %v2097
    %v2456 = vunpack.c.l.b16 %v2098
    %v2457 = vunpack.c.h.b16 %v2098
    %v2458 = vunpack.c.l.b16 %v2099
    %v2459 = vunpack.c.h.b16 %v2099
    %v2460 = vunpack.c.l.b16 %v2100
    %v2461 = vunpack.c.h.b16 %v2100
    %v2462 = vunpack.c.l.b16 %v2101
    %v2463 = vunpack.c.h.b16 %v2101
    %v2464 = vunpack.c.l.b16 %v2102
    %v2465 = vunpack.c.h.b16 %v2102
    %v2466 = vunpack.c.l.b16 %v2103
    %v2467 = vunpack.c.h.b16 %v2103
    %v2468 = vunpack.c.l.b16 %v2104
    %v2469 = vunpack.c.h.b16 %v2104
    %v2470 = vunpack.c.l.b16 %v2105
    %v2471 = vunpack.c.h.b16 %v2105
    %v2472 = vunpack.c.l.b16 %v2106
    %v2473 = vunpack.c.h.b16 %v2106
    %v2474 = vunpack.c.l.b16 %v2107
    %v2475 = vunpack.c.h.b16 %v2107
    %v2476 = vunpack.c.l.b16 %v2108
    %v2477 = vunpack.c.h.b16 %v2108
    %v2478 = vunpack.c.l.b16 %v2109
    %v2479 = vunpack.c.h.b16 %v2109
    %v2480 = vunpack.c.l.b16 %v2110
    %v2481 = vunpack.c.h.b16 %v2110
    %v2482 = vunpack.c.l.b16 %v2111
    %v2483 = vunpack.c.h.b16 %v2111
    %v2484 = vunpack.c.l.b16 %v2112
    %v2485 = vunpack.c.h.b16 %v2112
    %v2486 = vunpack.c.l.b16 %v2113
    %v2487 = vunpack.c.h.b16 %v2113
    %v2488 = vunpack.c.l.b16 %v2114
    %v2489 = vunpack.c.h.b16 %v2114
    %v2490 = vunpack.c.l.b16 %v2115
    %v2491 = vunpack.c.h.b16 %v2115
    %v2492 = vunpack.c.l.b16 %v2116
    %v2493 = vunpack.c.h.b16 %v2116
    %v2494 = vunpack.c.l.b16 %v2117
    %v2495 = vunpack.c.h.b16 %v2117
    %v2496 = vunpack.c.l.b16 %v2118
    %v2497 = vunpack.c.h.b16 %v2118
    %v2498 = vunpack.c.l.b16 %v2119
    %v2499 = vunpack.c.h.b16 %v2119
    %v2500 = vunpack.c.l.b16 %v2120
    %v2501 = vunpack.c.h.b16 %v2120
    %v2502 = vunpack.c.l.b16 %v2121
    %v2503 = vunpack.c.h.b16 %v2121
    %v2504 = vunpack.c.l.b16 %v2122
    %v2505 = vunpack.c.h.b16 %v2122
    %v2506 = vunpack.c.l.b16 %v2123
    %v2507 = vunpack.c.h.b16 %v2123
    %v2508 = vunpack.c.l.b16 %v2124
    %v2509 = vunpack.c.h.b16 %v2124
    %v2510 = vunpack.c.l.b16 %v2125
    %v2511 = vunpack.c.h.b16 %v2125
    %v2512 = vunpack.c.l.b16 %v2126
    %v2513 = vunpack.c.h.b16 %v2126
    %v2514 = vunpack.c.l.b16 %v2127
    %v2515 = vunpack.c.h.b16 %v2127
    %v2516 = vunpack.c.l.b16 %v2128
    %v2517 = vunpack.c.h.b16 %v2128
    %v2518 = vunpack.c.l.b16 %v2129
    %v2519 = vunpack.c.h.b16 %v2129
    %v2520 = vunpack.c.l.b16 %v2130
    %v2521 = vunpack.c.h.b16 %v2130
    %v2522 = vunpack.c.l.b16 %v2131
    %v2523 = vunpack.c.h.b16 %v2131
    %v2524 = vunpack.c.l.b16 %v2132
    %v2525 = vunpack.c.h.b16 %v2132
    %v2526 = vunpack.c.l.b16 %v2133
    %v2527 = vunpack.c.h.b16 %v2133
    %v2528 = vunpack.c.l.b16 %v2134
    %v2529 = vunpack.c.h.b16 %v2134
    %v2530 = vunpack.c.l.b16 %v2135
    %v2531 = vunpack.c.h.b16 %v2135
    %v2532 = vunpack.c.l.b16 %v2136
    %v2533 = vunpack.c.h.b16 %v2136
    %v2534 = vunpack.c.l.b16 %v2137
    %v2535 = vunpack.c.h.b16 %v2137
    %v2536 = vunpack.c.l.b16 %v2138
    %v2537 = vunpack.c.h.b16 %v2138
    %v2538 = vunpack.c.l.b16 %v2139
    %v2539 = vunpack.c.h.b16 %v2139
    %v2540 = vunpack.c.l.b16 %v2140
    %v2541 = vunpack.c.h.b16 %v2140
    %v2542 = vunpack.c.l.b16 %v2141
    %v2543 = vunpack.c.h.b16 %v2141
    %v2544 = vunpack.c.l.b16 %v2142
    %v2545 = vunpack.c.h.b16 %v2142
    %v2546 = vunpack.c.l.b16 %v2143
    %v2547 = vunpack.c.h.b16 %v2143
    %v2548 = vunpack.c.l.b16 %v2144
    %v2549 = vunpack.c.h.b16 %v2144
    %v2550 = vunpack.c.l.b16 %v2145
    %v2551 = vunpack.c.h.b16 %v2145
    %v2552 = vpack.c.b16 %v2300, %v2296
    %v2553 = vpack.c.b16 %v2301, %v2297
    %v2554 = vpack.c.b16 %v2302, %v2298
    %v2555 = vpack.c.b16 %v2303, %v2299
    %v2556 = vpack.c.b16 %v2308, %v2304
    %v2557 = vpack.c.b16 %v2309, %v2305
    %v2558 = vpack.c.b16 %v2310, %v2306
    %v2559 = vpack.c.b16 %v2311, %v2307
    %v2560 = vpack.c.b16 %v2316, %v2312
    %v2561 = vpack.c.b16 %v2317, %v2313
    %v2562 = vpack.c.b16 %v2318, %v2314
    %v2563 = vpack.c.b16 %v2319, %v2315
    %v2564 = vpack.c.b16 %v2324, %v2320
    %v2565 = vpack.c.b16 %v2325, %v2321
    %v2566 = vpack.c.b16 %v2326, %v2322
    %v2567 = vpack.c.b16 %v2327, %v2323
    %v2568 = vpack.c.b16 %v2332, %v2328
    %v2569 = vpack.c.b16 %v2333, %v2329
    %v2570 = vpack.c.b16 %v2334, %v2330
    %v2571 = vpack.c.b16 %v2335, %v2331
    %v2572 = vpack.c.b16 %v2340, %v2336
    %v2573 = vpack.c.b16 %v2341, %v2337
    %v2574 = vpack.c.b16 %v2342, %v2338
    %v2575 = vpack.c.b16 %v2343, %v2339
    %v2576 = vpack.c.b16 %v2348, %v2344
    %v2577 = vpack.c.b16 %v2349, %v2345
    %v2578 = vpack.c.b16 %v2350, %v2346
    %v2579 = vpack.c.b16 %v2351, %v2347
    %v2580 = vpack.c.b16 %v2356, %v2352
    %v2581 = vpack.c.b16 %v2357, %v2353
    %v2582 = vpack.c.b16 %v2358, %v2354
    %v2583 = vpack.c.b16 %v2359, %v2355
    %v2584 = vpack.c.b16 %v2364, %v2360
    %v2585 = vpack.c.b16 %v2365, %v2361
    %v2586 = vpack.c.b16 %v2366, %v2362
    %v2587 = vpack.c.b16 %v2367, %v2363
    %v2588 = vpack.c.b16 %v2372, %v2368
    %v2589 = vpack.c.b16 %v2373, %v2369
    %v2590 = vpack.c.b16 %v2374, %v2370
    %v2591 = vpack.c.b16 %v2375, %v2371
    %v2592 = vpack.c.b16 %v2380, %v2376
    %v2593 = vpack.c.b16 %v2381, %v2377
    %v2594 = vpack.c.b16 %v2382, %v2378
    %v2595 = vpack.c.b16 %v2383, %v2379
    %v2596 = vpack.c.b16 %v2388, %v2384
    %v2597 = vpack.c.b16 %v2389, %v2385
    %v2598 = vpack.c.b16 %v2390, %v2386
    %v2599 = vpack.c.b16 %v2391, %v2387
    %v2600 = vpack.c.b16 %v2396, %v2392
    %v2601 = vpack.c.b16 %v2397, %v2393
    %v2602 = vpack.c.b16 %v2398, %v2394
    %v2603 = vpack.c.b16 %v2399, %v2395
    %v2604 = vpack.c.b16 %v2404, %v2400
    %v2605 = vpack.c.b16 %v2405, %v2401
    %v2606 = vpack.c.b16 %v2406, %v2402
    %v2607 = vpack.c.b16 %v2407, %v2403
    %v2608 = vpack.c.b16 %v2412, %v2408
    %v2609 = vpack.c.b16 %v2413, %v2409
    %v2610 = vpack.c.b16 %v2414, %v2410
    %v2611 = vpack.c.b16 %v2415, %v2411
    %v2612 = vpack.c.b16 %v2420, %v2416
    %v2613 = vpack.c.b16 %v2421, %v2417
    %v2614 = vpack.c.b16 %v2422, %v2418
    %v2615 = vpack.c.b16 %v2423, %v2419
    %v2616 = vpack.c.b16 %v2428, %v2424
    %v2617 = vpack.c.b16 %v2429, %v2425
    %v2618 = vpack.c.b16 %v2430, %v2426
    %v2619 = vpack.c.b16 %v2431, %v2427
    %v2620 = vpack.c.b16 %v2436, %v2432
    %v2621 = vpack.c.b16 %v2437, %v2433
    %v2622 = vpack.c.b16 %v2438, %v2434
    %v2623 = vpack.c.b16 %v2439, %v2435
    %v2624 = vpack.c.b16 %v2444, %v2440
    %v2625 = vpack.c.b16 %v2445, %v2441
    %v2626 = vpack.c.b16 %v2446, %v2442
    %v2627 = vpack.c.b16 %v2447, %v2443
    %v2628 = vpack.c.b16 %v2452, %v2448
    %v2629 = vpack.c.b16 %v2453, %v2449
    %v2630 = vpack.c.b16 %v2454, %v2450
    %v2631 = vpack.c.b16 %v2455, %v2451
    %v2632 = vpack.c.b16 %v2460, %v2456
    %v2633 = vpack.c.b16 %v2461, %v2457
    %v2634 = vpack.c.b16 %v2462, %v2458
    %v2635 = vpack.c.b16 %v2463, %v2459
    %v2636 = vpack.c.b16 %v2468, %v2464
    %v2637 = vpack.c.b16 %v2469, %v2465
    %v2638 = vpack.c.b16 %v2470, %v2466
    %v2639 = vpack.c.b16 %v2471, %v2467
    %v2640 = vpack.c.b16 %v2476, %v2472
    %v2641 = vpack.c.b16 %v2477, %v2473
    %v2642 = vpack.c.b16 %v2478, %v2474
    %v2643 = vpack.c.b16 %v2479, %v2475
    %v2644 = vpack.c.b16 %v2484, %v2480
    %v2645 = vpack.c.b16 %v2485, %v2481
    %v2646 = vpack.c.b16 %v2486, %v2482
    %v2647 = vpack.c.b16 %v2487, %v2483
    %v2648 = vpack.c.b16 %v2492, %v2488
    %v2649 = vpack.c.b16 %v2493, %v2489
    %v2650 = vpack.c.b16 %v2494, %v2490
    %v2651 = vpack.c.b16 %v2495, %v2491
    %v2652 = vpack.c.b16 %v2500, %v2496
    %v2653 = vpack.c.b16 %v2501, %v2497
    %v2654 = vpack.c.b16 %v2502, %v2498
    %v2655 = vpack.c.b16 %v2503, %v2499
    %v2656 = vpack.c.b16 %v2508, %v2504
    %v2657 = vpack.c.b16 %v2509, %v2505
    %v2658 = vpack.c.b16 %v2510, %v2506
    %v2659 = vpack.c.b16 %v2511, %v2507
    %v2660 = vpack.c.b16 %v2516, %v2512
    %v2661 = vpack.c.b16 %v2517, %v2513
    %v2662 = vpack.c.b16 %v2518, %v2514
    %v2663 = vpack.c.b16 %v2519, %v2515
    %v2664 = vpack.c.b16 %v2524, %v2520
    %v2665 = vpack.c.b16 %v2525, %v2521
    %v2666 = vpack.c.b16 %v2526, %v2522
    %v2667 = vpack.c.b16 %v2527, %v2523
    %v2668 = vpack.c.b16 %v2532, %v2528
    %v2669 = vpack.c.b16 %v2533, %v2529
    %v2670 = vpack.c.b16 %v2534, %v2530
    %v2671 = vpack.c.b16 %v2535, %v2531
    %v2672 = vpack.c.b16 %v2540, %v2536
    %v2673 = vpack.c.b16 %v2541, %v2537
    %v2674 = vpack.c.b16 %v2542, %v2538
    %v2675 = vpack.c.b16 %v2543, %v2539
    %v2676 = vpack.c.b16 %v2548, %v2544
    %v2677 = vpack.c.b16 %v2549, %v2545
    %v2678 = vpack.c.b16 %v2550, %v2546
    %v2679 = vpack.c.b16 %v2551, %v2547
    %2808 = vmatprep.subr.bf16.mxu0 %v2553
    %2809 = vmatpush1.bf16.msra.mxu0 %v2552
    %2810 = vmatprep.subr.bf16.mxu0 %v2557
    %2811 = vmatpush1.bf16.msra.mxu0 %v2556
    %2812 = vmatprep.subr.bf16.mxu0 %v2561
    %2813 = vmatpush1.bf16.msra.mxu0 %v2560
    %2814 = vmatprep.subr.bf16.mxu0 %v2565
    %2815 = vmatpush1.bf16.msra.mxu0 %v2564
    %2816 = vmatprep.subr.bf16.mxu0 %v2569
    %2817 = vmatpush1.bf16.msra.mxu0 %v2568
    %2818 = vmatprep.subr.bf16.mxu0 %v2573
    %2819 = vmatpush1.bf16.msra.mxu0 %v2572
    %2820 = vmatprep.subr.bf16.mxu0 %v2577
    %2821 = vmatpush1.bf16.msra.mxu0 %v2576
    %2822 = vmatprep.subr.bf16.mxu0 %v2581
    %2823 = vmatpush1.bf16.msra.mxu0 %v2580
    %2824 = vmatprep.subr.bf16.mxu0 %v2585
    %2825 = vmatpush1.bf16.msra.mxu0 %v2584
    %2826 = vmatprep.subr.bf16.mxu0 %v2589
    %2827 = vmatpush1.bf16.msra.mxu0 %v2588
    %2828 = vmatprep.subr.bf16.mxu0 %v2593
    %2829 = vmatpush1.bf16.msra.mxu0 %v2592
    %2830 = vmatprep.subr.bf16.mxu0 %v2597
    %2831 = vmatpush1.bf16.msra.mxu0 %v2596
    %2832 = vmatprep.subr.bf16.mxu0 %v2601
    %2833 = vmatpush1.bf16.msra.mxu0 %v2600
    %2834 = vmatprep.subr.bf16.mxu0 %v2605
    %2835 = vmatpush1.bf16.msra.mxu0 %v2604
    %2836 = vmatprep.subr.bf16.mxu0 %v2609
    %2837 = vmatpush1.bf16.msra.mxu0 %v2608
    %2838 = vmatprep.subr.bf16.mxu0 %v2613
    %2839 = vmatpush1.bf16.msra.mxu0 %v2612
    %2840 = vmatprep.mubr.bf16.mxu0 %v2015
    %2841 = vmatmul.mubr.bf16.gmra.mrb[0].mxu0 %v2014
    %v2842 = vpop.f32.mrb[0].mxu0
    %v2843 = vadd.f32 %v2151, %v2842
    %v2844 = vpop.f32.mrb[0].mxu0
    %v2845 = vadd.f32 %v2155, %v2844
    %v2846 = vpop.f32.mrb[0].mxu0
    %v2847 = vpop.f32.mrb[0].mxu0
    %2848 = vdwg.mxu0
    %2849 = vmatprep.subr.bf16.mxu0 %v2617
    %2850 = vmatpush1.bf16.msra.mxu0 %v2616
    %2851 = vmatprep.subr.bf16.mxu0 %v2621
    %2852 = vmatpush1.bf16.msra.mxu0 %v2620
    %2853 = vmatprep.subr.bf16.mxu0 %v2625
    %2854 = vmatpush1.bf16.msra.mxu0 %v2624
    %2855 = vmatprep.subr.bf16.mxu0 %v2629
    %2856 = vmatpush1.bf16.msra.mxu0 %v2628
    %2857 = vmatprep.subr.bf16.mxu0 %v2633
    %2858 = vmatpush1.bf16.msra.mxu0 %v2632
    %2859 = vmatprep.subr.bf16.mxu0 %v2637
    %2860 = vmatpush1.bf16.msra.mxu0 %v2636
    %2861 = vmatprep.subr.bf16.mxu0 %v2641
    %2862 = vmatpush1.bf16.msra.mxu0 %v2640
    %2863 = vmatprep.subr.bf16.mxu0 %v2645
    %2864 = vmatpush1.bf16.msra.mxu0 %v2644
    %2865 = vmatprep.subr.bf16.mxu0 %v2649
    %2866 = vmatpush1.bf16.msra.mxu0 %v2648
    %2867 = vmatprep.subr.bf16.mxu0 %v2653
    %2868 = vmatpush1.bf16.msra.mxu0 %v2652
    %2869 = vmatprep.subr.bf16.mxu0 %v2657
    %2870 = vmatpush1.bf16.msra.mxu0 %v2656
    %2871 = vmatprep.subr.bf16.mxu0 %v2661
    %2872 = vmatpush1.bf16.msra.mxu0 %v2660
    %2873 = vmatprep.subr.bf16.mxu0 %v2665
    %2874 = vmatpush1.bf16.msra.mxu0 %v2664
    %2875 = vmatprep.subr.bf16.mxu0 %v2669
    %2876 = vmatpush1.bf16.msra.mxu0 %v2668
    %2877 = vmatprep.subr.bf16.mxu0 %v2673
    %2878 = vmatpush1.bf16.msra.mxu0 %v2672
    %2879 = vmatprep.subr.bf16.mxu0 %v2677
    %2880 = vmatpush1.bf16.msra.mxu0 %v2676
    %2881 = vmatprep.mubr.bf16.mxu0 %v2017
    %2882 = vmatmul.mubr.bf16.gmra.mrb[0].mxu0 %v2016
    %v2883 = vpop.f32.mrb[0].mxu0
    %v2884 = vadd.f32 %v2843, %v2883
    %v2885 = vpop.f32.mrb[0].mxu0
    %v2886 = vadd.f32 %v2845, %v2885
    %v2887 = vpop.f32.mrb[0].mxu0
    %v2888 = vpop.f32.mrb[0].mxu0
    %2889 = vdwg.mxu0
    %2890 = vmatprep.subr.bf16.mxu0 %v2555
    %2891 = vmatpush1.bf16.msra.mxu0 %v2554
    %2892 = vmatprep.subr.bf16.mxu0 %v2559
    %2893 = vmatpush1.bf16.msra.mxu0 %v2558
    %2894 = vmatprep.subr.bf16.mxu0 %v2563
    %2895 = vmatpush1.bf16.msra.mxu0 %v2562
    %2896 = vmatprep.subr.bf16.mxu0 %v2567
    %2897 = vmatpush1.bf16.msra.mxu0 %v2566
    %2898 = vmatprep.subr.bf16.mxu0 %v2571
    %2899 = vmatpush1.bf16.msra.mxu0 %v2570
    %2900 = vmatprep.subr.bf16.mxu0 %v2575
    %2901 = vmatpush1.bf16.msra.mxu0 %v2574
    %2902 = vmatprep.subr.bf16.mxu0 %v2579
    %2903 = vmatpush1.bf16.msra.mxu0 %v2578
    %2904 = vmatprep.subr.bf16.mxu0 %v2583
    %2905 = vmatpush1.bf16.msra.mxu0 %v2582
    %2906 = vmatprep.subr.bf16.mxu0 %v2587
    %2907 = vmatpush1.bf16.msra.mxu0 %v2586
    %2908 = vmatprep.subr.bf16.mxu0 %v2591
    %2909 = vmatpush1.bf16.msra.mxu0 %v2590
    %2910 = vmatprep.subr.bf16.mxu0 %v2595
    %2911 = vmatpush1.bf16.msra.mxu0 %v2594
    %2912 = vmatprep.subr.bf16.mxu0 %v2599
    %2913 = vmatpush1.bf16.msra.mxu0 %v2598
    %2914 = vmatprep.subr.bf16.mxu0 %v2603
    %2915 = vmatpush1.bf16.msra.mxu0 %v2602
    %2916 = vmatprep.subr.bf16.mxu0 %v2607
    %2917 = vmatpush1.bf16.msra.mxu0 %v2606
    %2918 = vmatprep.subr.bf16.mxu0 %v2611
    %2919 = vmatpush1.bf16.msra.mxu0 %v2610
    %2920 = vmatprep.subr.bf16.mxu0 %v2615
    %2921 = vmatpush1.bf16.msra.mxu0 %v2614
    %2922 = vmatprep.mubr.bf16.mxu0 %v2015
    %2923 = vmatmul.mubr.bf16.gmra.mrb[0].mxu0 %v2014
    %v2924 = vpop.f32.mrb[0].mxu0
    %v2925 = vadd.f32 %v2159, %v2924
    %v2926 = vpop.f32.mrb[0].mxu0
    %v2927 = vadd.f32 %v2163, %v2926
    %v2928 = vpop.f32.mrb[0].mxu0
    %v2929 = vpop.f32.mrb[0].mxu0
    %2930 = vdwg.mxu0
    %2931 = vmatprep.subr.bf16.mxu0 %v2619
    %2932 = vmatpush1.bf16.msra.mxu0 %v2618
    %2933 = vmatprep.subr.bf16.mxu0 %v2623
    %2934 = vmatpush1.bf16.msra.mxu0 %v2622
    %2935 = vmatprep.subr.bf16.mxu0 %v2627
    %2936 = vmatpush1.bf16.msra.mxu0 %v2626
    %2937 = vmatprep.subr.bf16.mxu0 %v2631
    %2938 = vmatpush1.bf16.msra.mxu0 %v2630
    %2939 = vmatprep.subr.bf16.mxu0 %v2635
    %2940 = vmatpush1.bf16.msra.mxu0 %v2634
    %2941 = vmatprep.subr.bf16.mxu0 %v2639
    %2942 = vmatpush1.bf16.msra.mxu0 %v2638
    %2943 = vmatprep.subr.bf16.mxu0 %v2643
    %2944 = vmatpush1.bf16.msra.mxu0 %v2642
    %2945 = vmatprep.subr.bf16.mxu0 %v2647
    %2946 = vmatpush1.bf16.msra.mxu0 %v2646
    %2947 = vmatprep.subr.bf16.mxu0 %v2651
    %2948 = vmatpush1.bf16.msra.mxu0 %v2650
    %2949 = vmatprep.subr.bf16.mxu0 %v2655
    %2950 = vmatpush1.bf16.msra.mxu0 %v2654
    %2951 = vmatprep.subr.bf16.mxu0 %v2659
    %2952 = vmatpush1.bf16.msra.mxu0 %v2658
    %2953 = vmatprep.subr.bf16.mxu0 %v2663
    %2954 = vmatpush1.bf16.msra.mxu0 %v2662
    %2955 = vmatprep.subr.bf16.mxu0 %v2667
    %2956 = vmatpush1.bf16.msra.mxu0 %v2666
    %2957 = vmatprep.subr.bf16.mxu0 %v2671
    %2958 = vmatpush1.bf16.msra.mxu0 %v2670
    %2959 = vmatprep.subr.bf16.mxu0 %v2675
    %2960 = vmatpush1.bf16.msra.mxu0 %v2674
    %2961 = vmatprep.subr.bf16.mxu0 %v2679
    %2962 = vmatpush1.bf16.msra.mxu0 %v2678
    %2963 = vmatprep.mubr.bf16.mxu0 %v2017
    %2964 = vmatmul.mubr.bf16.gmra.mrb[0].mxu0 %v2016
    %v2965 = vpop.f32.mrb[0].mxu0
    %v2966 = vadd.f32 %v2925, %v2965
    %v2967 = vpop.f32.mrb[0].mxu0
    %v2968 = vadd.f32 %v2927, %v2967
    %v2969 = vpop.f32.mrb[0].mxu0
    %v2970 = vpop.f32.mrb[0].mxu0
    %2971 = vdwg.mxu0
    %v2972 = vtanh.pop %v2884
    %v2973 = vtanh.pop %v2886
    %v2974 = vtanh.pop %v2966
    %v2975 = vtanh.pop %v2968
    %v2976 = vpack.c.bf16 %v2972, %v2972
    %v2977 = vpack.c.bf16 %v2973, %v2973
    %v2978 = vpack.c.bf16 %v2974, %v2974
    %v2979 = vpack.c.bf16 %v2975, %v2975
    %v2980 = vld [vmem:[#allocation8] sm:$0xff]
    %v2981 = vld [vmem:[#allocation8 + $0x8] sm:$0xff]
    %v2982 = vld [vmem:[#allocation8 + $0x10] sm:$0xff]
    %v2983 = vld [vmem:[#allocation8 + $0x18] sm:$0xff]
    %v2984 = vld [vmem:[#allocation8 + $0x20] sm:$0xff]
    %v2985 = vld [vmem:[#allocation8 + $0x28] sm:$0xff]
    %v2986 = vld [vmem:[#allocation8 + $0x30] sm:$0xff]
    %v2987 = vld [vmem:[#allocation8 + $0x38] sm:$0xff]
    %v2988 = vld [vmem:[#allocation8 + $0x40] sm:$0xff]
    %v2989 = vld [vmem:[#allocation8 + $0x48] sm:$0xff]
    %v2990 = vld [vmem:[#allocation8 + $0x50] sm:$0xff]
    %v2991 = vld [vmem:[#allocation8 + $0x58] sm:$0xff]
    %v2992 = vld [vmem:[#allocation8 + $0x60] sm:$0xff]
    %v2993 = vld [vmem:[#allocation8 + $0x68] sm:$0xff]
    %v2994 = vld [vmem:[#allocation8 + $0x70] sm:$0xff]
    %v2995 = vld [vmem:[#allocation8 + $0x78] sm:$0xff]
    %v2996 = vld [vmem:[#allocation8 + $0x80] sm:$0xff]
    %v2997 = vld [vmem:[#allocation8 + $0x88] sm:$0xff]
    %v2998 = vld [vmem:[#allocation8 + $0x90] sm:$0xff]
    %v2999 = vld [vmem:[#allocation8 + $0x98] sm:$0xff]
    %v3000 = vld [vmem:[#allocation8 + $0xa0] sm:$0xff]
    %v3001 = vld [vmem:[#allocation8 + $0xa8] sm:$0xff]
    %v3002 = vld [vmem:[#allocation8 + $0xb0] sm:$0xff]
    %v3003 = vld [vmem:[#allocation8 + $0xb8] sm:$0xff]
    %v3004 = vld [vmem:[#allocation8 + $0xc0] sm:$0xff]
    %v3005 = vld [vmem:[#allocation8 + $0xc8] sm:$0xff]
    %v3006 = vld [vmem:[#allocation8 + $0xd0] sm:$0xff]
    %v3007 = vld [vmem:[#allocation8 + $0xd8] sm:$0xff]
    %v3008 = vld [vmem:[#allocation8 + $0xe0] sm:$0xff]
    %v3009 = vld [vmem:[#allocation8 + $0xe8] sm:$0xff]
    %v3010 = vld [vmem:[#allocation8 + $0xf0] sm:$0xff]
    %v3011 = vld [vmem:[#allocation8 + $0xf8] sm:$0xff]
    %v3012 = vld [vmem:[#allocation8 + $0x100] sm:$0xff]
    %v3013 = vld [vmem:[#allocation8 + $0x108] sm:$0xff]
    %v3014 = vld [vmem:[#allocation8 + $0x110] sm:$0xff]
    %v3015 = vld [vmem:[#allocation8 + $0x118] sm:$0xff]
    %v3016 = vld [vmem:[#allocation8 + $0x120] sm:$0xff]
    %v3017 = vld [vmem:[#allocation8 + $0x128] sm:$0xff]
    %v3018 = vld [vmem:[#allocation8 + $0x130] sm:$0xff]
    %v3019 = vld [vmem:[#allocation8 + $0x138] sm:$0xff]
    %v3020 = vld [vmem:[#allocation8 + $0x140] sm:$0xff]
    %v3021 = vld [vmem:[#allocation8 + $0x148] sm:$0xff]
    %v3022 = vld [vmem:[#allocation8 + $0x150] sm:$0xff]
    %v3023 = vld [vmem:[#allocation8 + $0x158] sm:$0xff]
    %v3024 = vld [vmem:[#allocation8 + $0x160] sm:$0xff]
    %v3025 = vld [vmem:[#allocation8 + $0x168] sm:$0xff]
    %v3026 = vld [vmem:[#allocation8 + $0x170] sm:$0xff]
    %v3027 = vld [vmem:[#allocation8 + $0x178] sm:$0xff]
    %v3028 = vld [vmem:[#allocation8 + $0x180] sm:$0xff]
    %v3029 = vld [vmem:[#allocation8 + $0x188] sm:$0xff]
    %v3030 = vld [vmem:[#allocation8 + $0x190] sm:$0xff]
    %v3031 = vld [vmem:[#allocation8 + $0x198] sm:$0xff]
    %v3032 = vld [vmem:[#allocation8 + $0x1a0] sm:$0xff]
    %v3033 = vld [vmem:[#allocation8 + $0x1a8] sm:$0xff]
    %v3034 = vld [vmem:[#allocation8 + $0x1b0] sm:$0xff]
    %v3035 = vld [vmem:[#allocation8 + $0x1b8] sm:$0xff]
    %v3036 = vld [vmem:[#allocation8 + $0x1c0] sm:$0xff]
    %v3037 = vld [vmem:[#allocation8 + $0x1c8] sm:$0xff]
    %v3038 = vld [vmem:[#allocation8 + $0x1d0] sm:$0xff]
    %v3039 = vld [vmem:[#allocation8 + $0x1d8] sm:$0xff]
    %v3040 = vld [vmem:[#allocation8 + $0x1e0] sm:$0xff]
    %v3041 = vld [vmem:[#allocation8 + $0x1e8] sm:$0xff]
    %v3042 = vld [vmem:[#allocation8 + $0x1f0] sm:$0xff]
    %v3043 = vld [vmem:[#allocation8 + $0x1f8] sm:$0xff]
    %v3044 = vld [vmem:[%s6 + $0x8] sm:$0x3]
    %v3046 = vlaneseq
    %v3047 = vshrl.u32 %v3046, 7
    %v3048 = vsub.s32 0, %v3047
    %v3049 = vrot.slane %v3044, %v3048
    %v3050 = vlaneseq
    %v3051 = vshrl.u32 %v3050, 7
    %v3052 = vsub.s32 1, %v3051
    %v3053 = vrot.slane %v3044, %v3052
    %v3120 = vunpack.c.l.b16 %v2980
    %v3121 = vunpack.c.h.b16 %v2980
    %v3122 = vunpack.c.l.b16 %v2981
    %v3123 = vunpack.c.h.b16 %v2981
    %v3124 = vunpack.c.l.b16 %v2982
    %v3125 = vunpack.c.h.b16 %v2982
    %v3126 = vunpack.c.l.b16 %v2983
    %v3127 = vunpack.c.h.b16 %v2983
    %v3128 = vunpack.c.l.b16 %v2984
    %v3129 = vunpack.c.h.b16 %v2984
    %v3130 = vunpack.c.l.b16 %v2985
    %v3131 = vunpack.c.h.b16 %v2985
    %v3132 = vunpack.c.l.b16 %v2986
    %v3133 = vunpack.c.h.b16 %v2986
    %v3134 = vunpack.c.l.b16 %v2987
    %v3135 = vunpack.c.h.b16 %v2987
    %v3136 = vunpack.c.l.b16 %v2988
    %v3137 = vunpack.c.h.b16 %v2988
    %v3138 = vunpack.c.l.b16 %v2989
    %v3139 = vunpack.c.h.b16 %v2989
    %v3140 = vunpack.c.l.b16 %v2990
    %v3141 = vunpack.c.h.b16 %v2990
    %v3142 = vunpack.c.l.b16 %v2991
    %v3143 = vunpack.c.h.b16 %v2991
    %v3144 = vunpack.c.l.b16 %v2992
    %v3145 = vunpack.c.h.b16 %v2992
    %v3146 = vunpack.c.l.b16 %v2993
    %v3147 = vunpack.c.h.b16 %v2993
    %v3148 = vunpack.c.l.b16 %v2994
    %v3149 = vunpack.c.h.b16 %v2994
    %v3150 = vunpack.c.l.b16 %v2995
    %v3151 = vunpack.c.h.b16 %v2995
    %v3152 = vunpack.c.l.b16 %v2996
    %v3153 = vunpack.c.h.b16 %v2996
    %v3154 = vunpack.c.l.b16 %v2997
    %v3155 = vunpack.c.h.b16 %v2997
    %v3156 = vunpack.c.l.b16 %v2998
    %v3157 = vunpack.c.h.b16 %v2998
    %v3158 = vunpack.c.l.b16 %v2999
    %v3159 = vunpack.c.h.b16 %v2999
    %v3160 = vunpack.c.l.b16 %v3000
    %v3161 = vunpack.c.h.b16 %v3000
    %v3162 = vunpack.c.l.b16 %v3001
    %v3163 = vunpack.c.h.b16 %v3001
    %v3164 = vunpack.c.l.b16 %v3002
    %v3165 = vunpack.c.h.b16 %v3002
    %v3166 = vunpack.c.l.b16 %v3003
    %v3167 = vunpack.c.h.b16 %v3003
    %v3168 = vunpack.c.l.b16 %v3004
    %v3169 = vunpack.c.h.b16 %v3004
    %v3170 = vunpack.c.l.b16 %v3005
    %v3171 = vunpack.c.h.b16 %v3005
    %v3172 = vunpack.c.l.b16 %v3006
    %v3173 = vunpack.c.h.b16 %v3006
    %v3174 = vunpack.c.l.b16 %v3007
    %v3175 = vunpack.c.h.b16 %v3007
    %v3176 = vunpack.c.l.b16 %v3008
    %v3177 = vunpack.c.h.b16 %v3008
    %v3178 = vunpack.c.l.b16 %v3009
    %v3179 = vunpack.c.h.b16 %v3009
    %v3180 = vunpack.c.l.b16 %v3010
    %v3181 = vunpack.c.h.b16 %v3010
    %v3182 = vunpack.c.l.b16 %v3011
    %v3183 = vunpack.c.h.b16 %v3011
    %v3184 = vunpack.c.l.b16 %v3012
    %v3185 = vunpack.c.h.b16 %v3012
    %v3186 = vunpack.c.l.b16 %v3013
    %v3187 = vunpack.c.h.b16 %v3013
    %v3188 = vunpack.c.l.b16 %v3014
    %v3189 = vunpack.c.h.b16 %v3014
    %v3190 = vunpack.c.l.b16 %v3015
    %v3191 = vunpack.c.h.b16 %v3015
    %v3192 = vunpack.c.l.b16 %v3016
    %v3193 = vunpack.c.h.b16 %v3016
    %v3194 = vunpack.c.l.b16 %v3017
    %v3195 = vunpack.c.h.b16 %v3017
    %v3196 = vunpack.c.l.b16 %v3018
    %v3197 = vunpack.c.h.b16 %v3018
    %v3198 = vunpack.c.l.b16 %v3019
    %v3199 = vunpack.c.h.b16 %v3019
    %v3200 = vunpack.c.l.b16 %v3020
    %v3201 = vunpack.c.h.b16 %v3020
    %v3202 = vunpack.c.l.b16 %v3021
    %v3203 = vunpack.c.h.b16 %v3021
    %v3204 = vunpack.c.l.b16 %v3022
    %v3205 = vunpack.c.h.b16 %v3022
    %v3206 = vunpack.c.l.b16 %v3023
    %v3207 = vunpack.c.h.b16 %v3023
    %v3208 = vunpack.c.l.b16 %v3024
    %v3209 = vunpack.c.h.b16 %v3024
    %v3210 = vunpack.c.l.b16 %v3025
    %v3211 = vunpack.c.h.b16 %v3025
    %v3212 = vunpack.c.l.b16 %v3026
    %v3213 = vunpack.c.h.b16 %v3026
    %v3214 = vunpack.c.l.b16 %v3027
    %v3215 = vunpack.c.h.b16 %v3027
    %v3216 = vunpack.c.l.b16 %v3028
    %v3217 = vunpack.c.h.b16 %v3028
    %v3218 = vunpack.c.l.b16 %v3029
    %v3219 = vunpack.c.h.b16 %v3029
    %v3220 = vunpack.c.l.b16 %v3030
    %v3221 = vunpack.c.h.b16 %v3030
    %v3222 = vunpack.c.l.b16 %v3031
    %v3223 = vunpack.c.h.b16 %v3031
    %v3224 = vunpack.c.l.b16 %v3032
    %v3225 = vunpack.c.h.b16 %v3032
    %v3226 = vunpack.c.l.b16 %v3033
    %v3227 = vunpack.c.h.b16 %v3033
    %v3228 = vunpack.c.l.b16 %v3034
    %v3229 = vunpack.c.h.b16 %v3034
    %v3230 = vunpack.c.l.b16 %v3035
    %v3231 = vunpack.c.h.b16 %v3035
    %v3232 = vunpack.c.l.b16 %v3036
    %v3233 = vunpack.c.h.b16 %v3036
    %v3234 = vunpack.c.l.b16 %v3037
    %v3235 = vunpack.c.h.b16 %v3037
    %v3236 = vunpack.c.l.b16 %v3038
    %v3237 = vunpack.c.h.b16 %v3038
    %v3238 = vunpack.c.l.b16 %v3039
    %v3239 = vunpack.c.h.b16 %v3039
    %v3240 = vunpack.c.l.b16 %v3040
    %v3241 = vunpack.c.h.b16 %v3040
    %v3242 = vunpack.c.l.b16 %v3041
    %v3243 = vunpack.c.h.b16 %v3041
    %v3244 = vunpack.c.l.b16 %v3042
    %v3245 = vunpack.c.h.b16 %v3042
    %v3246 = vunpack.c.l.b16 %v3043
    %v3247 = vunpack.c.h.b16 %v3043
    %v3248 = vpack.c.b16 %v3122, %v3120
    %v3249 = vpack.c.b16 %v3123, %v3121
    %v3250 = vpack.c.b16 %v3126, %v3124
    %v3251 = vpack.c.b16 %v3127, %v3125
    %v3252 = vpack.c.b16 %v3130, %v3128
    %v3253 = vpack.c.b16 %v3131, %v3129
    %v3254 = vpack.c.b16 %v3134, %v3132
    %v3255 = vpack.c.b16 %v3135, %v3133
    %v3256 = vpack.c.b16 %v3138, %v3136
    %v3257 = vpack.c.b16 %v3139, %v3137
    %v3258 = vpack.c.b16 %v3142, %v3140
    %v3259 = vpack.c.b16 %v3143, %v3141
    %v3260 = vpack.c.b16 %v3146, %v3144
    %v3261 = vpack.c.b16 %v3147, %v3145
    %v3262 = vpack.c.b16 %v3150, %v3148
    %v3263 = vpack.c.b16 %v3151, %v3149
    %v3264 = vpack.c.b16 %v3154, %v3152
    %v3265 = vpack.c.b16 %v3155, %v3153
    %v3266 = vpack.c.b16 %v3158, %v3156
    %v3267 = vpack.c.b16 %v3159, %v3157
    %v3268 = vpack.c.b16 %v3162, %v3160
    %v3269 = vpack.c.b16 %v3163, %v3161
    %v3270 = vpack.c.b16 %v3166, %v3164
    %v3271 = vpack.c.b16 %v3167, %v3165
    %v3272 = vpack.c.b16 %v3170, %v3168
    %v3273 = vpack.c.b16 %v3171, %v3169
    %v3274 = vpack.c.b16 %v3174, %v3172
    %v3275 = vpack.c.b16 %v3175, %v3173
    %v3276 = vpack.c.b16 %v3178, %v3176
    %v3277 = vpack.c.b16 %v3179, %v3177
    %v3278 = vpack.c.b16 %v3182, %v3180
    %v3279 = vpack.c.b16 %v3183, %v3181
    %v3280 = vpack.c.b16 %v3186, %v3184
    %v3281 = vpack.c.b16 %v3187, %v3185
    %v3282 = vpack.c.b16 %v3190, %v3188
    %v3283 = vpack.c.b16 %v3191, %v3189
    %v3284 = vpack.c.b16 %v3194, %v3192
    %v3285 = vpack.c.b16 %v3195, %v3193
    %v3286 = vpack.c.b16 %v3198, %v3196
    %v3287 = vpack.c.b16 %v3199, %v3197
    %v3288 = vpack.c.b16 %v3202, %v3200
    %v3289 = vpack.c.b16 %v3203, %v3201
    %v3290 = vpack.c.b16 %v3206, %v3204
    %v3291 = vpack.c.b16 %v3207, %v3205
    %v3292 = vpack.c.b16 %v3210, %v3208
    %v3293 = vpack.c.b16 %v3211, %v3209
    %v3294 = vpack.c.b16 %v3214, %v3212
    %v3295 = vpack.c.b16 %v3215, %v3213
    %v3296 = vpack.c.b16 %v3218, %v3216
    %v3297 = vpack.c.b16 %v3219, %v3217
    %v3298 = vpack.c.b16 %v3222, %v3220
    %v3299 = vpack.c.b16 %v3223, %v3221
    %v3300 = vpack.c.b16 %v3226, %v3224
    %v3301 = vpack.c.b16 %v3227, %v3225
    %v3302 = vpack.c.b16 %v3230, %v3228
    %v3303 = vpack.c.b16 %v3231, %v3229
    %v3304 = vpack.c.b16 %v3234, %v3232
    %v3305 = vpack.c.b16 %v3235, %v3233
    %v3306 = vpack.c.b16 %v3238, %v3236
    %v3307 = vpack.c.b16 %v3239, %v3237
    %v3308 = vpack.c.b16 %v3242, %v3240
    %v3309 = vpack.c.b16 %v3243, %v3241
    %v3310 = vpack.c.b16 %v3246, %v3244
    %v3311 = vpack.c.b16 %v3247, %v3245
    %3376 = vmatprep.subr.bf16.mxu0 %v3249
    %3377 = vmatpush1.bf16.msra.mxu0 %v3248
    %3378 = vmatprep.subr.bf16.mxu0 %v3251
    %3379 = vmatpush1.bf16.msra.mxu0 %v3250
    %3380 = vmatprep.subr.bf16.mxu0 %v3253
    %3381 = vmatpush1.bf16.msra.mxu0 %v3252
    %3382 = vmatprep.subr.bf16.mxu0 %v3255
    %3383 = vmatpush1.bf16.msra.mxu0 %v3254
    %3384 = vmatprep.subr.bf16.mxu0 %v3257
    %3385 = vmatpush1.bf16.msra.mxu0 %v3256
    %3386 = vmatprep.subr.bf16.mxu0 %v3259
    %3387 = vmatpush1.bf16.msra.mxu0 %v3258
    %3388 = vmatprep.subr.bf16.mxu0 %v3261
    %3389 = vmatpush1.bf16.msra.mxu0 %v3260
    %3390 = vmatprep.subr.bf16.mxu0 %v3263
    %3391 = vmatpush1.bf16.msra.mxu0 %v3262
    %3392 = vmatprep.subr.bf16.mxu0 %v3265
    %3393 = vmatpush1.bf16.msra.mxu0 %v3264
    %3394 = vmatprep.subr.bf16.mxu0 %v3267
    %3395 = vmatpush1.bf16.msra.mxu0 %v3266
    %3396 = vmatprep.subr.bf16.mxu0 %v3269
    %3397 = vmatpush1.bf16.msra.mxu0 %v3268
    %3398 = vmatprep.subr.bf16.mxu0 %v3271
    %3399 = vmatpush1.bf16.msra.mxu0 %v3270
    %3400 = vmatprep.subr.bf16.mxu0 %v3273
    %3401 = vmatpush1.bf16.msra.mxu0 %v3272
    %3402 = vmatprep.subr.bf16.mxu0 %v3275
    %3403 = vmatpush1.bf16.msra.mxu0 %v3274
    %3404 = vmatprep.subr.bf16.mxu0 %v3277
    %3405 = vmatpush1.bf16.msra.mxu0 %v3276
    %3406 = vmatprep.subr.bf16.mxu0 %v3279
    %3407 = vmatpush1.bf16.msra.mxu0 %v3278
    %3408 = vmatprep.mubr.bf16.mxu0 %v2977
    %3409 = vmatmul.mubr.bf16.gmra.mrb[0].mxu0 %v2976
    %v3410 = vpop.f32.mrb[0].mxu0
    %v3411 = vadd.f32 %v3049, %v3410
    %v3412 = vpop.f32.mrb[0].mxu0
    %v3413 = vadd.f32 %v3053, %v3412
    %v3414 = vpop.f32.mrb[0].mxu0
    %v3415 = vpop.f32.mrb[0].mxu0
    %3416 = vdwg.mxu0
    %3417 = vmatprep.subr.bf16.mxu0 %v3281
    %3418 = vmatpush1.bf16.msra.mxu0 %v3280
    %3419 = vmatprep.subr.bf16.mxu0 %v3283
    %3420 = vmatpush1.bf16.msra.mxu0 %v3282
    %3421 = vmatprep.subr.bf16.mxu0 %v3285
    %3422 = vmatpush1.bf16.msra.mxu0 %v3284
    %3423 = vmatprep.subr.bf16.mxu0 %v3287
    %3424 = vmatpush1.bf16.msra.mxu0 %v3286
    %3425 = vmatprep.subr.bf16.mxu0 %v3289
    %3426 = vmatpush1.bf16.msra.mxu0 %v3288
    %3427 = vmatprep.subr.bf16.mxu0 %v3291
    %3428 = vmatpush1.bf16.msra.mxu0 %v3290
    %3429 = vmatprep.subr.bf16.mxu0 %v3293
    %3430 = vmatpush1.bf16.msra.mxu0 %v3292
    %3431 = vmatprep.subr.bf16.mxu0 %v3295
    %3432 = vmatpush1.bf16.msra.mxu0 %v3294
    %3433 = vmatprep.subr.bf16.mxu0 %v3297
    %3434 = vmatpush1.bf16.msra.mxu0 %v3296
    %3435 = vmatprep.subr.bf16.mxu0 %v3299
    %3436 = vmatpush1.bf16.msra.mxu0 %v3298
    %3437 = vmatprep.subr.bf16.mxu0 %v3301
    %3438 = vmatpush1.bf16.msra.mxu0 %v3300
    %3439 = vmatprep.subr.bf16.mxu0 %v3303
    %3440 = vmatpush1.bf16.msra.mxu0 %v3302
    %3441 = vmatprep.subr.bf16.mxu0 %v3305
    %3442 = vmatpush1.bf16.msra.mxu0 %v3304
    %3443 = vmatprep.subr.bf16.mxu0 %v3307
    %3444 = vmatpush1.bf16.msra.mxu0 %v3306
    %3445 = vmatprep.subr.bf16.mxu0 %v3309
    %3446 = vmatpush1.bf16.msra.mxu0 %v3308
    %3447 = vmatprep.subr.bf16.mxu0 %v3311
    %3448 = vmatpush1.bf16.msra.mxu0 %v3310
    %3449 = vmatprep.mubr.bf16.mxu0 %v2979
    %3450 = vmatmul.mubr.bf16.gmra.mrb[0].mxu0 %v2978
    %v3451 = vpop.f32.mrb[0].mxu0
    %v3452 = vadd.f32 %v3411, %v3451
    %v3453 = vpop.f32.mrb[0].mxu0
    %v3454 = vadd.f32 %v3413, %v3453
    %v3455 = vpop.f32.mrb[0].mxu0
    %v3456 = vpop.f32.mrb[0].mxu0
    %3457 = vdwg.mxu0
    %v3458 = vmax.f32 %v3452, 0.0
    %v3459 = vmax.f32 %v3454, 0.0
    %v3460 = vpack.c.bf16 %v3458, %v3458
    %v3461 = vpack.c.bf16 %v3459, %v3459
    %v3462 = vld [vmem:[#allocation10] sm:$0xf]
    %v3463 = vld [vmem:[#allocation10 + $0x4] sm:$0xf]
    %v3464 = vld [vmem:[#allocation10 + $0x8] sm:$0xf]
    %v3465 = vld [vmem:[#allocation10 + $0xc] sm:$0xf]
    %v3466 = vld [vmem:[#allocation10 + $0x10] sm:$0xf]
    %v3467 = vld [vmem:[#allocation10 + $0x14] sm:$0xf]
    %v3468 = vld [vmem:[#allocation10 + $0x18] sm:$0xf]
    %v3469 = vld [vmem:[#allocation10 + $0x1c] sm:$0xf]
    %v3470 = vld [vmem:[#allocation10 + $0x20] sm:$0xf]
    %v3471 = vld [vmem:[#allocation10 + $0x24] sm:$0xf]
    %v3472 = vld [vmem:[#allocation10 + $0x28] sm:$0xf]
    %v3473 = vld [vmem:[#allocation10 + $0x2c] sm:$0xf]
    %v3474 = vld [vmem:[#allocation10 + $0x30] sm:$0xf]
    %v3475 = vld [vmem:[#allocation10 + $0x34] sm:$0xf]
    %v3476 = vld [vmem:[#allocation10 + $0x38] sm:$0xf]
    %v3477 = vld [vmem:[#allocation10 + $0x3c] sm:$0xf]
    %v3478 = vld [vmem:[#allocation10 + $0x40] sm:$0xf]
    %v3479 = vld [vmem:[#allocation10 + $0x44] sm:$0xf]
    %v3480 = vld [vmem:[#allocation10 + $0x48] sm:$0xf]
    %v3481 = vld [vmem:[#allocation10 + $0x4c] sm:$0xf]
    %v3482 = vld [vmem:[#allocation10 + $0x50] sm:$0xf]
    %v3483 = vld [vmem:[#allocation10 + $0x54] sm:$0xf]
    %v3484 = vld [vmem:[#allocation10 + $0x58] sm:$0xf]
    %v3485 = vld [vmem:[#allocation10 + $0x5c] sm:$0xf]
    %v3486 = vld [vmem:[#allocation10 + $0x60] sm:$0xf]
    %v3487 = vld [vmem:[#allocation10 + $0x64] sm:$0xf]
    %v3488 = vld [vmem:[#allocation10 + $0x68] sm:$0xf]
    %v3489 = vld [vmem:[#allocation10 + $0x6c] sm:$0xf]
    %v3490 = vld [vmem:[#allocation10 + $0x70] sm:$0xf]
    %v3491 = vld [vmem:[#allocation10 + $0x74] sm:$0xf]
    %v3492 = vld [vmem:[#allocation10 + $0x78] sm:$0xf]
    %v3493 = vld [vmem:[#allocation10 + $0x7c] sm:$0xf]
    %v3494 = vld [vmem:[%s6 + $0xa] sm:$0x1]
    %v3496 = vlaneseq
    %v3497 = vshrl.u32 %v3496, 7
    %v3498 = vsub.s32 0, %v3497
    %v3499 = vrot.slane %v3494, %v3498
    %v3533 = vunpack.c.l.b16 %v3462
    %v3534 = vunpack.c.l.b16 %v3463
    %v3535 = vunpack.c.l.b16 %v3464
    %v3536 = vunpack.c.l.b16 %v3465
    %v3537 = vunpack.c.l.b16 %v3466
    %v3538 = vunpack.c.l.b16 %v3467
    %v3539 = vunpack.c.l.b16 %v3468
    %v3540 = vunpack.c.l.b16 %v3469
    %v3541 = vunpack.c.l.b16 %v3470
    %v3542 = vunpack.c.l.b16 %v3471
    %v3543 = vunpack.c.l.b16 %v3472
    %v3544 = vunpack.c.l.b16 %v3473
    %v3545 = vunpack.c.l.b16 %v3474
    %v3546 = vunpack.c.l.b16 %v3475
    %v3547 = vunpack.c.l.b16 %v3476
    %v3548 = vunpack.c.l.b16 %v3477
    %v3549 = vunpack.c.l.b16 %v3478
    %v3550 = vunpack.c.l.b16 %v3479
    %v3551 = vunpack.c.l.b16 %v3480
    %v3552 = vunpack.c.l.b16 %v3481
    %v3553 = vunpack.c.l.b16 %v3482
    %v3554 = vunpack.c.l.b16 %v3483
    %v3555 = vunpack.c.l.b16 %v3484
    %v3556 = vunpack.c.l.b16 %v3485
    %v3557 = vunpack.c.l.b16 %v3486
    %v3558 = vunpack.c.l.b16 %v3487
    %v3559 = vunpack.c.l.b16 %v3488
    %v3560 = vunpack.c.l.b16 %v3489
    %v3561 = vunpack.c.l.b16 %v3490
    %v3562 = vunpack.c.l.b16 %v3491
    %v3563 = vunpack.c.l.b16 %v3492
    %v3564 = vunpack.c.l.b16 %v3493
    %v3565 = vpack.c.b16 %v3534, %v3533
    %v3566 = vpack.c.b16 %v3536, %v3535
    %v3567 = vpack.c.b16 %v3538, %v3537
    %v3568 = vpack.c.b16 %v3540, %v3539
    %v3569 = vpack.c.b16 %v3542, %v3541
    %v3570 = vpack.c.b16 %v3544, %v3543
    %v3571 = vpack.c.b16 %v3546, %v3545
    %v3572 = vpack.c.b16 %v3548, %v3547
    %v3573 = vpack.c.b16 %v3550, %v3549
    %v3574 = vpack.c.b16 %v3552, %v3551
    %v3575 = vpack.c.b16 %v3554, %v3553
    %v3576 = vpack.c.b16 %v3556, %v3555
    %v3577 = vpack.c.b16 %v3558, %v3557
    %v3578 = vpack.c.b16 %v3560, %v3559
    %v3579 = vpack.c.b16 %v3562, %v3561
    %v3580 = vpack.c.b16 %v3564, %v3563
    %3597 = vmatprep.subr.bf16.mxu0 0
    %3598 = vmatpush1.bf16.msra.mxu0 %v3565
    %3599 = vmatprep.subr.bf16.mxu0 0
    %3600 = vmatpush1.bf16.msra.mxu0 %v3566
    %3601 = vmatprep.subr.bf16.mxu0 0
    %3602 = vmatpush1.bf16.msra.mxu0 %v3567
    %3603 = vmatprep.subr.bf16.mxu0 0
    %3604 = vmatpush1.bf16.msra.mxu0 %v3568
    %3605 = vmatprep.subr.bf16.mxu0 0
    %3606 = vmatpush1.bf16.msra.mxu0 %v3569
    %3607 = vmatprep.subr.bf16.mxu0 0
    %3608 = vmatpush1.bf16.msra.mxu0 %v3570
    %3609 = vmatprep.subr.bf16.mxu0 0
    %3610 = vmatpush1.bf16.msra.mxu0 %v3571
    %3611 = vmatprep.subr.bf16.mxu0 0
    %3612 = vmatpush1.bf16.msra.mxu0 %v3572
    %3613 = vmatprep.subr.bf16.mxu0 0
    %3614 = vmatpush1.bf16.msra.mxu0 %v3573
    %3615 = vmatprep.subr.bf16.mxu0 0
    %3616 = vmatpush1.bf16.msra.mxu0 %v3574
    %3617 = vmatprep.subr.bf16.mxu0 0
    %3618 = vmatpush1.bf16.msra.mxu0 %v3575
    %3619 = vmatprep.subr.bf16.mxu0 0
    %3620 = vmatpush1.bf16.msra.mxu0 %v3576
    %3621 = vmatprep.subr.bf16.mxu0 0
    %3622 = vmatpush1.bf16.msra.mxu0 %v3577
    %3623 = vmatprep.subr.bf16.mxu0 0
    %3624 = vmatpush1.bf16.msra.mxu0 %v3578
    %3625 = vmatprep.subr.bf16.mxu0 0
    %3626 = vmatpush1.bf16.msra.mxu0 %v3579
    %3627 = vmatprep.subr.bf16.mxu0 0
    %3628 = vmatpush1.bf16.msra.mxu0 %v3580
    %3629 = vmatprep.mubr.bf16.mxu0 %v3461
    %3630 = vmatmul.mubr.bf16.gmra.mrb[0].mxu0 %v3460
    %v3631 = vpop.f32.mrb[0].mxu0
    %v3632 = vadd.f32 %v3499, %v3631
    %v3633 = vpop.f32.mrb[0].mxu0
    %v3634 = vpop.f32.mrb[0].mxu0
    %v3635 = vpop.f32.mrb[0].mxu0
    %3636 = vdwg.mxu0
    %v3637 = vmax.f32 %v3632, 0.0
    %v3638 = vpack.c.bf16 %v3637, %v3637
    %v3639 = vld [vmem:[#allocation11] sm:$0xf]
    %v3640 = vld [vmem:[#allocation11 + $0x4] sm:$0xf]
    %v3641 = vld [vmem:[#allocation11 + $0x8] sm:$0xf]
    %v3642 = vld [vmem:[#allocation11 + $0xc] sm:$0xf]
    %v3643 = vld [vmem:[#allocation11 + $0x10] sm:$0xf]
    %v3644 = vld [vmem:[#allocation11 + $0x14] sm:$0xf]
    %v3645 = vld [vmem:[#allocation11 + $0x18] sm:$0xf]
    %v3646 = vld [vmem:[#allocation11 + $0x1c] sm:$0xf]
    %v3647 = vld [vmem:[#allocation11 + $0x20] sm:$0xf]
    %v3648 = vld [vmem:[#allocation11 + $0x24] sm:$0xf]
    %v3649 = vld [vmem:[#allocation11 + $0x28] sm:$0xf]
    %v3650 = vld [vmem:[#allocation11 + $0x2c] sm:$0xf]
    %v3651 = vld [vmem:[#allocation11 + $0x30] sm:$0xf]
    %v3652 = vld [vmem:[#allocation11 + $0x34] sm:$0xf]
    %v3653 = vld [vmem:[#allocation11 + $0x38] sm:$0xf]
    %v3654 = vld [vmem:[#allocation11 + $0x3c] sm:$0xf]
    %v3655 = vld [vmem:[%s6 + $0xb] sm:$0x1]
    %v3657 = vlaneseq
    %v3658 = vshrl.u32 %v3657, 7
    %v3659 = vsub.s32 0, %v3658
    %v3660 = vrot.slane %v3655, %v3659
    %v3678 = vunpack.c.l.b16 %v3639
    %v3679 = vunpack.c.l.b16 %v3640
    %v3680 = vunpack.c.l.b16 %v3641
    %v3681 = vunpack.c.l.b16 %v3642
    %v3682 = vunpack.c.l.b16 %v3643
    %v3683 = vunpack.c.l.b16 %v3644
    %v3684 = vunpack.c.l.b16 %v3645
    %v3685 = vunpack.c.l.b16 %v3646
    %v3686 = vunpack.c.l.b16 %v3647
    %v3687 = vunpack.c.l.b16 %v3648
    %v3688 = vunpack.c.l.b16 %v3649
    %v3689 = vunpack.c.l.b16 %v3650
    %v3690 = vunpack.c.l.b16 %v3651
    %v3691 = vunpack.c.l.b16 %v3652
    %v3692 = vunpack.c.l.b16 %v3653
    %v3693 = vunpack.c.l.b16 %v3654
    %v3694 = vpack.c.b16 %v3679, %v3678
    %v3695 = vpack.c.b16 %v3681, %v3680
    %v3696 = vpack.c.b16 %v3683, %v3682
    %v3697 = vpack.c.b16 %v3685, %v3684
    %v3698 = vpack.c.b16 %v3687, %v3686
    %v3699 = vpack.c.b16 %v3689, %v3688
    %v3700 = vpack.c.b16 %v3691, %v3690
    %v3701 = vpack.c.b16 %v3693, %v3692
    %3710 = vmatprep.subr.bf16.mxu0 0
    %3711 = vmatpush1.bf16.msra.mxu0 %v3694
    %3712 = vmatprep.subr.bf16.mxu0 0
    %3713 = vmatpush1.bf16.msra.mxu0 %v3695
    %3714 = vmatprep.subr.bf16.mxu0 0
    %3715 = vmatpush1.bf16.msra.mxu0 %v3696
    %3716 = vmatprep.subr.bf16.mxu0 0
    %3717 = vmatpush1.bf16.msra.mxu0 %v3697
    %3718 = vmatprep.subr.bf16.mxu0 0
    %3719 = vmatpush1.bf16.msra.mxu0 %v3698
    %3720 = vmatprep.subr.bf16.mxu0 0
    %3721 = vmatpush1.bf16.msra.mxu0 %v3699
    %3722 = vmatprep.subr.bf16.mxu0 0
    %3723 = vmatpush1.bf16.msra.mxu0 %v3700
    %3724 = vmatprep.subr.bf16.mxu0 0
    %3725 = vmatpush1.bf16.msra.mxu0 %v3701
    %3726 = vmatprep.subr.bf16.mxu0 0
    %3727 = vmatpush1.bf16.msra.mxu0 0
    %3728 = vmatprep.subr.bf16.mxu0 0
    %3729 = vmatpush1.bf16.msra.mxu0 0
    %3730 = vmatprep.subr.bf16.mxu0 0
    %3731 = vmatpush1.bf16.msra.mxu0 0
    %3732 = vmatprep.subr.bf16.mxu0 0
    %3733 = vmatpush1.bf16.msra.mxu0 0
    %3734 = vmatprep.subr.bf16.mxu0 0
    %3735 = vmatpush1.bf16.msra.mxu0 0
    %3736 = vmatprep.subr.bf16.mxu0 0
    %3737 = vmatpush1.bf16.msra.mxu0 0
    %3738 = vmatprep.subr.bf16.mxu0 0
    %3739 = vmatpush1.bf16.msra.mxu0 0
    %3740 = vmatprep.subr.bf16.mxu0 0
    %3741 = vmatpush1.bf16.msra.mxu0 0
    %3742 = vmatprep.mubr.bf16.mxu0 0
    %3743 = vmatmul.mubr.bf16.gmra.mrb[0].mxu0 %v3638
    %v3744 = vpop.f32.mrb[0].mxu0
    %v3745 = vadd.f32 %v3660, %v3744
    %v3746 = vpop.f32.mrb[0].mxu0
    %v3747 = vpop.f32.mrb[0].mxu0
    %v3748 = vpop.f32.mrb[0].mxu0
    %3749 = vdwg.mxu0
    %3750 = vst [vmem:[#allocation13] sm:$0xff] %v3745
    // Predicated region
    $region54: #{tpu_custom_call.1} parent=1 // pred_check
      _
    $region55: #{tpu_custom_call.1} parent=1 // pred_check_branch
      %3752 = sbr.rel (0) target = $region57
    $region56: #{tpu_custom_call.1} parent=1 // pred_region
      %s3754 = ssub.s32 128, 128
      %3755 = vsyncadd [#allocation4], %s3754
      %s3757 = sshll.u32 [#allocation13], 4
      %s3758 = int_to_ptr.vmem [resolvable:$true] %s3757
      %3760 = dma.vmem_to_hbm [thread:$0]  %s3758, 128, %s7, [#allocation4]
    $region57: #{tpu_custom_call.1} parent=1 // pred_fallthru
      _
    // Predicated region
    $region58: #{tpu_custom_call.1} parent=1 // pred_check
      _
    $region59: #{tpu_custom_call.1} parent=1 // pred_check_branch
      %3762 = sbr.rel (0) target = $region61
    $region60: #{tpu_custom_call.1} parent=1 // pred_region
      %3763 = dma.done [#allocation4], 128
    $region61: #{tpu_custom_call.1} parent=1 // pred_fallthru
      _
    %3764 = vsyncpa [#allocation3], 1
    %3765 = vsyncpa [#allocation6], 1
    %3766 = vsyncpa [#allocation9], 1
    %3767 = vsyncpa [#allocation12], 1
    %3768 = vsyncpa [#allocation4], 1

</llo_original>
